<compile_context>
chip_gen: v7x
topology: tpu7x:2x2x1
jax: 0.10.0
libtpu: 0.0.40
codegen_flags: <defaults>
</compile_context>

<pallas_src>
import functools

import jax
import jax.numpy as jnp
from jax import lax
from jax.experimental import pallas as pl
from jax.experimental.pallas import tpu as pltpu


# ----------------------------- hardware introspection -----------------------------
def _vmem_capacity_bytes():
    """Physical VMEM per TensorCore; conservative 64 MiB if the query fails."""
    try:
        cap = getattr(pltpu.get_tpu_info(), "vmem_capacity_bytes", None)
        if cap:
            return int(cap)
    except Exception:  # non-TPU backend / old jax: stay conservative
        pass
    return 64 * 2**20


def _num_tensorcores():
    """TensorCores per chip (2 on v7x); only used for small-batch dispatch."""
    try:
        info = pltpu.get_tpu_info()
        for name in ("num_cores", "tensorcores_per_chip", "cores_per_chip",
                     "num_tensorcores"):
            v = getattr(info, name, None)
            if v:
                return int(v)
    except Exception:
        pass
    # 64 MiB-VMEM parts (v7x) have 2 TensorCores per chip.
    return 2 if _vmem_capacity_bytes() <= 64 * 2**20 else 1


def _mosaic_params(n_parallel_axes, est_bytes):
    cap = _vmem_capacity_bytes()
    limit = int(min(0.75 * cap, max(est_bytes + (8 << 20), 32 << 20)))
    return pltpu.CompilerParams(
        dimension_semantics=("parallel",) * n_parallel_axes,
        vmem_limit_bytes=limit)


# --------------------------------- kernel helpers ----------------------------------
_ONEHOT_DTYPE = jnp.bfloat16   # 0/1 entries are exact in bf16; halves VMEM/HBM cost


def _hswish(v):
    # h_swish(x) = x * relu6(x + 3) / 6
    return v * jnp.clip(v + 3.0, 0.0, 6.0) * (1.0 / 6.0)


def _sigmoid(v):
    return 1.0 / (1.0 + jnp.exp(-v))


def _map_mm_dtype(x_dtype):
    # bf16 inputs take the native bf16 MXU path; f32 inputs keep exact f32 maps.
    return jnp.bfloat16 if x_dtype == jnp.bfloat16 else jnp.float32


def _foreach_chunk(n_chunks, chunk_l, body):
    """Run body(start_lane) for every lane chunk (unrolled when short)."""
    if n_chunks <= 8:
        for i in range(n_chunks):
            body(i * chunk_l)
    else:
        def _step(i, carry):
            body(pl.multiple_of(i * chunk_l, chunk_l))
            return carry
        lax.fori_loop(0, n_chunks, _step, 0)


def _accumulate_pools(x_ref, pe_ref, acc_ref, *, chunk_l, n_chunks):
    """acc <- sum-pool over W and H via one-hot MXU matmul, chunked over lanes."""
    acc_ref[...] = jnp.zeros_like(acc_ref)

    def step(start):
        xc = x_ref[:, pl.ds(start, chunk_l)]            # (C, Lc) native dtype
        pec = pe_ref[pl.ds(start, chunk_l), :]          # (Lc, H+W) bf16 one-hot
        acc_ref[...] += jnp.dot(xc, pec, preferred_element_type=jnp.float32)

    _foreach_chunk(n_chunks, chunk_l, step)


def _attention_maps(pools, w1, b1, wh, bh, ww, bw, h):
    """conv1(+folded BN) + h_swish, then the two 1x1 convs + sigmoid (all f32)."""
    y = jnp.dot(w1, pools, preferred_element_type=jnp.float32) + b1     # (mip, H+W)
    y = _hswish(y)
    a_h = _sigmoid(jnp.dot(wh, y[:, :h], preferred_element_type=jnp.float32) + bh)
    a_w = _sigmoid(jnp.dot(ww, y[:, h:], preferred_element_type=jnp.float32) + bw)
    return a_h, a_w                                     # (C, H) f32, (C, W) f32


# ------------------------------- fused single-pass kernel --------------------------
def _coordatt_fused_kernel(x_ref, pe_ref, ps_ref, eh_ref, ew_ref,
                           w1_ref, b1_ref, wh_ref, bhb_ref, ww_ref, bwb_ref,
                           o_ref, pools_acc, *, h, chunk_l, n_chunks):
    # 1) pooled sums over W and H (chunked one-hot matmul), then means
    _accumulate_pools(x_ref, pe_ref, pools_acc, chunk_l=chunk_l, n_chunks=n_chunks)
    pools = pools_acc[...] * ps_ref[...]                 # (C, H+W) f32 means
    # 2) tiny conv stack -> attention maps
    a_h, a_w = _attention_maps(pools, w1_ref[...], b1_ref[...],
                               wh_ref[...], bhb_ref[...],
                               ww_ref[...], bwb_ref[...], h)
    mm_dtype = _map_mm_dtype(x_ref.dtype)
    a_h = a_h.astype(mm_dtype)
    a_w = a_w.astype(mm_dtype)

    # 3) broadcast maps to the flat (C, H*W) layout with one-hot expansion
    #    matmuls and apply, chunked over lanes (no full (C, L) temporaries):
    #      ah[c, h*W + w] = a_h[c, h]      aw[c, h*W + w] = a_w[c, w]
    def apply_chunk(start):
        sl = pl.ds(start, chunk_l)
        xc = x_ref[:, sl].astype(jnp.float32)
        ahc = jnp.dot(a_h, eh_ref[:, sl], preferred_element_type=jnp.float32)
        awc = jnp.dot(a_w, ew_ref[:, sl], preferred_element_type=jnp.float32)
        o_ref[:, sl] = (xc * ahc * awc).astype(o_ref.dtype)

    _foreach_chunk(n_chunks, chunk_l, apply_chunk)


# --------------------------------- two-pass kernels --------------------------------
def _coordatt_maps_kernel(x_ref, pe_ref, ps_ref, w1_ref, b1_ref,
                          wh_ref, bhb_ref, ww_ref, bwb_ref,
                          maps_ref, pools_acc, *, h, chunk_l, n_chunks):
    _accumulate_pools(x_ref, pe_ref, pools_acc, chunk_l=chunk_l, n_chunks=n_chunks)
    pools = pools_acc[...] * ps_ref[...]
    a_h, a_w = _attention_maps(pools, w1_ref[...], b1_ref[...],
                               wh_ref[...], bhb_ref[...],
                               ww_ref[...], bwb_ref[...], h)
    # single lane-dense concatenated (C, H+W) f32 output
    maps_ref[:, :h] = a_h
    maps_ref[:, h:] = a_w


def _coordatt_apply_kernel(x_ref, maps_ref, eh_ref, ew_ref, o_ref, *, h):
    maps = maps_ref[...]                                 # (C, H+W) f32
    mm_dtype = _map_mm_dtype(x_ref.dtype)
    a_h = maps[:, :h].astype(mm_dtype)
    a_w = maps[:, h:].astype(mm_dtype)
    ahc = jnp.dot(a_h, eh_ref[...], preferred_element_type=jnp.float32)
    awc = jnp.dot(a_w, ew_ref[...], preferred_element_type=jnp.float32)
    o_ref[...] = (x_ref[...].astype(jnp.float32) * ahc * awc).astype(o_ref.dtype)


# ------------------------------------ wrapper ---------------------------------------
def _expansion_matrices(h, w):
    """One-hot matrices for pooling / broadcast in the flattened H*W layout."""
    l = h * w
    rows = jnp.arange(l)
    e_h = (rows[:, None] // w == jnp.arange(h)[None, :]).astype(_ONEHOT_DTYPE)  # (L,H)
    e_w = (rows[:, None] % w == jnp.arange(w)[None, :]).astype(_ONEHOT_DTYPE)   # (L,W)
    pool_e = jnp.concatenate([e_h, e_w], axis=1)                                # (L,H+W)
    # 1/W on the H columns, 1/H on the W columns: turns pooled sums into means.
    pool_scale = jnp.concatenate([jnp.full((h,), 1.0 / w, jnp.float32),
                                  jnp.full((w,), 1.0 / h, jnp.float32)])[None, :]
    return pool_e, pool_scale, e_h.T, e_w.T     # (L,H+W), (1,H+W), (H,L), (W,L)


def _const_spec(shape, single_buffer):
    """BlockSpec for a grid-invariant input; single-buffered when supported."""
    index_map = lambda *_: (0,) * len(shape)
    if single_buffer:
        return pl.BlockSpec(shape, index_map, pipeline_mode=pl.Buffered(1))
    return pl.BlockSpec(shape, index_map)


def _pick_chunk_l(l, c, temp_budget_bytes=4 << 20):
    """Largest 128-multiple divisor of L (<= 2048 lanes) whose f32 chunk
    temporaries (~4 * C * Lc * 4B) fit the budget; else a single chunk."""
    if l <= 128:
        return l, 1
    divisors = [k for k in range(128, l + 1, 128) if l % k == 0]
    if not divisors:
        return l, 1
    fitting = [k for k in divisors if k <= 2048 and 16 * c * k <= temp_budget_bytes]
    chunk = max(fitting) if fitting else min(divisors)
    return chunk, l // chunk


def coord_att(x, w1, b1, bn_scale, bn_shift, wh, bh, ww, bw, *,
              force_two_pass=False, block_l=None,
              fused_vmem_budget_bytes=None, single_buffer_consts=True):
    """CoordAtt forward.  x: (N, C, H, W) NCHW -> (N, C, H, W)."""
    N, C, H, W = x.shape
    mip = w1.shape[0]
    oup = wh.shape[0]
    assert oup == C, "identity multiply requires oup == inp channels"
    L = H * W
    eb = x.dtype.itemsize
    cap = _vmem_capacity_bytes()
    vmem_ceiling = int(0.75 * cap)

    # Fold inference-mode BN into conv1: (w1@p + b1)*s + t == (s*w1)@p + (s*b1 + t)
    # TODO(synk): training-mode BatchNorm (batch statistics / running-stat updates)
    # is not implemented; this matches the PyTorch module in eval().
    w1f = (w1 * bn_scale).astype(jnp.float32)
    b1f = (b1 * bn_scale + bn_shift).astype(jnp.float32)
    whf = wh.astype(jnp.float32)
    bhf = bh.astype(jnp.float32)
    wwf = ww.astype(jnp.float32)
    bwf = bw.astype(jnp.float32)
    weight_args = (w1f, b1f, whf, bhf, wwf, bwf)

    x_flat = x.reshape(N, C, L)            # free reshape; lane dim becomes H*W
    pool_e, pool_scale, eh_exp, ew_exp = _expansion_matrices(H, W)

    chunk_l, n_chunks = _pick_chunk_l(L, C)
    onehot_eb = jnp.dtype(_ONEHOT_DTYPE).itemsize
    const_bytes = 2 * L * (H + W) * onehot_eb + (H + W) * 4   # pool_e + eh + ew + scale
    fused_bytes = (4 * C * L * eb                 # x + out blocks, double-buffered
                   + const_bytes                  # one-hot matrices (single copy)
                   + 16 * C * chunk_l             # f32 chunk temporaries
                   + 4 * C * (H + W)              # pools scratch
                   + (2 << 20))                   # weights / maps / Mosaic headroom

    if fused_vmem_budget_bytes is None:
        # ~40 MiB on 128 MiB parts (v5e/v6e), ~22 MiB on 64 MiB parts (v7x).
        fused_vmem_budget_bytes = min(40 << 20, int(0.45 * vmem_ceiling))

    attempts = (True, False) if single_buffer_consts else (False,)

    # v7x (2 TCs): at batch==1 prefer the two-pass path so both cores get work.
    prefer_two_pass_small_batch = (N == 1 and _num_tensorcores() >= 2 and L >= 256)
    use_fused = (not force_two_pass and not prefer_two_pass_small_batch
                 and fused_bytes <= fused_vmem_budget_bytes)

    # ----------------------------- fused single-pass path ------------------------------
    if use_fused:
        def run_fused(single_buffer):
            const = lambda shape: _const_spec(shape, single_buffer)
            call = pl.pallas_call(
                functools.partial(_coordatt_fused_kernel, h=H,
                                  chunk_l=chunk_l, n_chunks=n_chunks),
                out_shape=jax.ShapeDtypeStruct((N, C, L), x.dtype),
                grid_spec=pltpu.PrefetchScalarGridSpec(
                    num_scalar_prefetch=0,
                    grid=(N,),
                    in_specs=[
                        pl.BlockSpec((None, C, L), lambda n: (n, 0, 0)),  # x (flat)
                        const((L, H + W)),      # one-hot pooling matrix (bf16)
                        const((1, H + W)),      # mean scale (f32)
                        const((H, L)),          # a_h expansion one-hots (bf16)
                        const((W, L)),          # a_w expansion one-hots (bf16)
                        pl.BlockSpec((mip, C), lambda n: (0, 0)),   # conv1 w (BN folded)
                        pl.BlockSpec((mip, 1), lambda n: (0, 0)),   # conv1 b (BN folded)
                        pl.BlockSpec((C, mip), lambda n: (0, 0)),   # conv_h w
                        pl.BlockSpec((C, 1), lambda n: (0, 0)),     # conv_h b
                        pl.BlockSpec((C, mip), lambda n: (0, 0)),   # conv_w w
                        pl.BlockSpec((C, 1), lambda n: (0, 0)),     # conv_w b
                    ],
                    out_specs=pl.BlockSpec((None, C, L), lambda n: (n, 0, 0)),
                    scratch_shapes=[pltpu.VMEM((C, H + W), jnp.float32)],
                ),
                compiler_params=_mosaic_params(1, fused_bytes),
            )
            return call(x_flat, pool_e, pool_scale, eh_exp, ew_exp, *weight_args)

        for sb in attempts:
            try:
                out = run_fused(sb)
                return out.reshape(N, C, H, W)
            except Exception:
                # Buffered(1) unsupported or VMEM misestimate: retry with default
                # buffering, then fall back to the bounded two-pass path below.
                continue

    # ---------------- two-pass fallback: bounded VMEM, extra parallel axis --------------
    # Pass 1: pooling + attention maps per image, one lane-dense (C, H+W) f32 output.
    # TODO(synk): pass 1 still stages a full (C, H*W) image block in VMEM; an L-tiled
    # accumulating variant would be needed for extremely large C*H*W images.
    maps_bytes = 2 * C * L * eb + const_bytes + 4 * C * (H + W) + (1 << 20)

    def run_maps(single_buffer):
        const = lambda shape: _const_spec(shape, single_buffer)
        call = pl.pallas_call(
            functools.partial(_coordatt_maps_kernel, h=H,
                              chunk_l=chunk_l, n_chunks=n_chunks),
            out_shape=jax.ShapeDtypeStruct((N, C, H + W), jnp.float32),
            grid_spec=pltpu.PrefetchScalarGridSpec(
                num_scalar_prefetch=0,
                grid=(N,),
                in_specs=[
                    pl.BlockSpec((None, C, L), lambda n: (n, 0, 0)),
                    const((L, H + W)),
                    const((1, H + W)),
                    pl.BlockSpec((mip, C), lambda n: (0, 0)),
                    pl.BlockSpec((mip, 1), lambda n: (0, 0)),
                    pl.BlockSpec((C, mip), lambda n: (0, 0)),
                    pl.BlockSpec((C, 1), lambda n: (0, 0)),
                    pl.BlockSpec((C, mip), lambda n: (0, 0)),
                    pl.BlockSpec((C, 1), lambda n: (0, 0)),
                ],
                out_specs=pl.BlockSpec((None, C, H + W), lambda n: (n, 0, 0)),
                scratch_shapes=[pltpu.VMEM((C, H + W), jnp.float32)],
            ),
            compiler_params=_mosaic_params(1, maps_bytes),
        )
        return call(x_flat, pool_e, pool_scale, *weight_args)

    maps = None
    for sb in attempts[:-1]:
        try:
            maps = run_maps(sb)
            break
        except Exception:
            maps = None
    if maps is None:
        maps = run_maps(attempts[-1])

    # Pass 2: elementwise apply, tiled over H*W; the grid is fully parallel.
    if block_l is None:
        # Generation-aware lane-tile cap: 4 MiB on 64 MiB parts (v7x), 12 MiB otherwise.
        tile_cap = (4 << 20) if cap <= 64 * 2**20 else (12 << 20)
        cands = [c for c in range(128, L + 1, 128)
                 if L % c == 0 and C * c * eb <= tile_cap]
        block_l = max(cands) if cands else L
    assert L % block_l == 0, "block_l must divide H*W"
    assert block_l == L or block_l % 128 == 0, "block_l must be a 128-multiple (or H*W)"

    apply_bytes = (4 * C * block_l * eb                  # x + out, double-buffered
                   + 4 * (H + W) * block_l * onehot_eb   # expansion slices, double-buffered
                   + 2 * C * (H + W) * 4                 # maps block
                   + (1 << 20))

    out = pl.pallas_call(
        functools.partial(_coordatt_apply_kernel, h=H),
        out_shape=jax.ShapeDtypeStruct((N, C, L), x.dtype),
        grid_spec=pltpu.PrefetchScalarGridSpec(
            num_scalar_prefetch=0,
            grid=(N, L // block_l),
            in_specs=[
                pl.BlockSpec((None, C, block_l), lambda n, l: (n, 0, l)),
                pl.BlockSpec((None, C, H + W), lambda n, l: (n, 0, 0)),
                pl.BlockSpec((H, block_l), lambda n, l: (0, l)),
                pl.BlockSpec((W, block_l), lambda n, l: (0, l)),
            ],
            out_specs=pl.BlockSpec((None, C, block_l), lambda n, l: (n, 0, l)),
        ),
        compiler_params=_mosaic_params(2, apply_bytes),
    )(x_flat, maps, eh_exp, ew_exp)
    return out.reshape(N, C, H, W)


def coord_att_reference(x, w1, b1, bn_scale, bn_shift, wh, bh, ww, bw):
    """Pure-JAX reference mirroring the PyTorch forward (inference-mode BN)."""
    H = x.shape[2]
    x_h = jnp.mean(x, axis=3)                                   # (N,C,H)
    x_w = jnp.mean(x, axis=2)                                   # (N,C,W)
    y = jnp.concatenate([x_h, x_w], axis=2)                     # (N,C,H+W)
    y = jnp.einsum('mc,ncl->nml', w1, y) + b1[None]             # (N,mip,H+W)
    y = y * bn_scale[None] + bn_shift[None]
    y = y * jnp.clip(y + 3.0, 0.0, 6.0) / 6.0
    yh, yw = y[:, :, :H], y[:, :, H:]
    a_h = jax.nn.sigmoid(jnp.einsum('om,nml->nol', wh, yh) + bh[None])  # (N,oup,H)
    a_w = jax.nn.sigmoid(jnp.einsum('om,nml->nol', ww, yw) + bw[None])  # (N,oup,W)
    return x * a_h[:, :, :, None] * a_w[:, :, None, :]


if __name__ == "__main__":
    key = jax.random.PRNGKey(0)
    N, C, H, W = 2, 4, 16, 16
    reduction = 32
    mip = max(8, C // reduction)   # = 8
    oup = C                        # identity multiply requires oup == inp

    ks = jax.random.split(key, 12)
    x = jax.random.normal(ks[0], (N, C, H, W), dtype=jnp.float32)

    # Deterministic "synthetic checkpoint" parameters.
    w1 = jax.random.normal(ks[1], (mip, C), dtype=jnp.float32) * 0.3
    b1 = jax.random.normal(ks[2], (mip, 1), dtype=jnp.float32) * 0.1
    # BatchNorm2d (eval): fold gamma/beta/running stats into scale & shift.
    gamma = 1.0 + 0.1 * jax.random.normal(ks[3], (mip, 1), dtype=jnp.float32)
    beta = 0.1 * jax.random.normal(ks[4], (mip, 1), dtype=jnp.float32)
    run_mean = 0.1 * jax.random.normal(ks[5], (mip, 1), dtype=jnp.float32)
    run_var = 1.0 + 0.1 * jax.random.uniform(ks[6], (mip, 1), dtype=jnp.float32)
    eps = 1e-5
    bn_scale = gamma / jnp.sqrt(run_var + eps)
    bn_shift = beta - run_mean * bn_scale

    wh = jax.random.normal(ks[7], (oup, mip), dtype=jnp.float32) * 0.3
    bh = jax.random.normal(ks[8], (oup, 1), dtype=jnp.float32) * 0.1
    ww = jax.random.normal(ks[9], (oup, mip), dtype=jnp.float32) * 0.3
    bw = jax.random.normal(ks[10], (oup, 1), dtype=jnp.float32) * 0.1

    ref = coord_att_reference(x, w1, b1, bn_scale, bn_shift, wh, bh, ww, bw)

    # Default dispatch (fused single-pass path at this size).
    out = coord_att(x, w1, b1, bn_scale, bn_shift, wh, bh, ww, bw)
    out = jax.block_until_ready(out)
    assert out.shape == (N, C, H, W)
    assert jnp.allclose(out, ref, atol=2e-5, rtol=2e-5), "default path mismatch vs reference"

    # Two-pass VMEM-bounded path (forced, with a real H*W tiling) — exercised so
    # the large-activation fallback is validated too.
    out2 = coord_att(x, w1, b1, bn_scale, bn_shift, wh, bh, ww, bw,
                     force_two_pass=True, block_l=128)
    out2 = jax.block_until_ready(out2)
    assert jnp.allclose(out2, ref, atol=2e-5, rtol=2e-5), "two-pass mismatch vs reference"

    print("KERNEL_OK")
</pallas_src>

<mosaic_0001>
module attributes {stable_mosaic.version = 11 : i64} {
  func.func @_coordatt_fused_kernel(%arg0: i32, %arg1: memref<1x4x256xf32, #tpu.memory_space<vmem>>, %arg2: memref<256x32xbf16, #tpu.memory_space<vmem>>, %arg3: memref<1x32xf32, #tpu.memory_space<vmem>>, %arg4: memref<16x256xbf16, #tpu.memory_space<vmem>>, %arg5: memref<16x256xbf16, #tpu.memory_space<vmem>>, %arg6: memref<8x4xf32, #tpu.memory_space<vmem>>, %arg7: memref<8x1xf32, #tpu.memory_space<vmem>>, %arg8: memref<4x8xf32, #tpu.memory_space<vmem>>, %arg9: memref<4x1xf32, #tpu.memory_space<vmem>>, %arg10: memref<4x8xf32, #tpu.memory_space<vmem>>, %arg11: memref<4x1xf32, #tpu.memory_space<vmem>>, %arg12: memref<1x4x256xf32, #tpu.memory_space<vmem>>, %arg13: memref<4x32xf32, #tpu.memory_space<vmem>>) attributes {dimension_semantics = [#tpu.dimension_semantics<parallel>], iteration_bounds = array<i64: 2>, scalar_prefetch = 0 : i64, scratch_operands = 1 : i64, tpu.core_type = #tpu.core_type<tc>, window_params = [{transform_indices = @transform_0, window_bounds = array<i64: 1, 4, 256>}, {pipeline_mode = #tpu.pipeline_mode<synchronous>, transform_indices = @transform_1, window_bounds = array<i64: 256, 32>}, {pipeline_mode = #tpu.pipeline_mode<synchronous>, transform_indices = @transform_2, window_bounds = array<i64: 1, 32>}, {pipeline_mode = #tpu.pipeline_mode<synchronous>, transform_indices = @transform_3, window_bounds = array<i64: 16, 256>}, {pipeline_mode = #tpu.pipeline_mode<synchronous>, transform_indices = @transform_4, window_bounds = array<i64: 16, 256>}, {pipeline_mode = #tpu.pipeline_mode<synchronous>, transform_indices = @transform_5, window_bounds = array<i64: 8, 4>}, {pipeline_mode = #tpu.pipeline_mode<synchronous>, transform_indices = @transform_6, window_bounds = array<i64: 8, 1>}, {pipeline_mode = #tpu.pipeline_mode<synchronous>, transform_indices = @transform_7, window_bounds = array<i64: 4, 8>}, {pipeline_mode = #tpu.pipeline_mode<synchronous>, transform_indices = @transform_8, window_bounds = array<i64: 4, 1>}, {pipeline_mode = #tpu.pipeline_mode<synchronous>, transform_indices = @transform_9, window_bounds = array<i64: 4, 8>}, {pipeline_mode = #tpu.pipeline_mode<synchronous>, transform_indices = @transform_10, window_bounds = array<i64: 4, 1>}, {transform_indices = @transform_11, window_bounds = array<i64: 1, 4, 256>}]} {
    %cst = arith.constant 0.000000e+00 : f32
    %0 = vector.broadcast %cst : f32 to vector<4x32xf32>
    %c0 = arith.constant 0 : index
    %c0_0 = arith.constant 0 : index
    %1 = vector.load %arg13[%c0, %c0_0] : memref<4x32xf32, #tpu.memory_space<vmem>>, vector<4x32xf32>
    tpu.vector_store %arg13[%c0, %c0_0], %0 {strides = array<i32>} : memref<4x32xf32, #tpu.memory_space<vmem>>, vector<4x32xf32>,
    %c0_1 = arith.constant 0 : index
    %c0_2 = arith.constant 0 : index
    %c0_3 = arith.constant 0 : index
    %2 = vector.load %arg1[%c0_1, %c0_2, %c0_3] : memref<1x4x256xf32, #tpu.memory_space<vmem>>, vector<1x4x256xf32>
    %3 = vector.shape_cast %2 : vector<1x4x256xf32> to vector<4x256xf32>
    %c0_4 = arith.constant 0 : index
    %c0_5 = arith.constant 0 : index
    %4 = vector.load %arg2[%c0_4, %c0_5] : memref<256x32xbf16, #tpu.memory_space<vmem>>, vector<256x32xbf16>
    %c0_6 = arith.constant 0 : index
    %c0_7 = arith.constant 0 : index
    %5 = vector.load %arg13[%c0_6, %c0_7] : memref<4x32xf32, #tpu.memory_space<vmem>>, vector<4x32xf32>
    %cst_8 = arith.constant dense<0.000000e+00> : vector<4x32xf32>
    %6 = tpu.matmul %3, %4, %cst_8 {dimension_numbers = #tpu.dot_dimension_numbers<[1], [0], [0], [1], [0, 0, 1, 1], [], []>} : vector<4x256xf32>, vector<256x32xbf16>, vector<4x32xf32> -> vector<4x32xf32>
    %7 = arith.addf %5, %6 : vector<4x32xf32>
    %c0_9 = arith.constant 0 : index
    %c0_10 = arith.constant 0 : index
    %8 = vector.load %arg13[%c0_9, %c0_10] : memref<4x32xf32, #tpu.memory_space<vmem>>, vector<4x32xf32>
    tpu.vector_store %arg13[%c0_9, %c0_10], %7 {strides = array<i32>} : memref<4x32xf32, #tpu.memory_space<vmem>>, vector<4x32xf32>,
    %c0_11 = arith.constant 0 : index
    %c0_12 = arith.constant 0 : index
    %9 = vector.load %arg13[%c0_11, %c0_12] : memref<4x32xf32, #tpu.memory_space<vmem>>, vector<4x32xf32>
    %c0_13 = arith.constant 0 : index
    %c0_14 = arith.constant 0 : index
    %10 = vector.load %arg3[%c0_13, %c0_14] : memref<1x32xf32, #tpu.memory_space<vmem>>, vector<1x32xf32>
    %11 = vector.broadcast %10 : vector<1x32xf32> to vector<4x32xf32>
    %12 = arith.mulf %9, %11 : vector<4x32xf32>
    %c0_15 = arith.constant 0 : index
    %c0_16 = arith.constant 0 : index
    %13 = vector.load %arg6[%c0_15, %c0_16] : memref<8x4xf32, #tpu.memory_space<vmem>>, vector<8x4xf32>
    %c0_17 = arith.constant 0 : index
    %c0_18 = arith.constant 0 : index
    %14 = vector.load %arg7[%c0_17, %c0_18] : memref<8x1xf32, #tpu.memory_space<vmem>>, vector<8x1xf32>
    %c0_19 = arith.constant 0 : index
    %c0_20 = arith.constant 0 : index
    %15 = vector.load %arg8[%c0_19, %c0_20] : memref<4x8xf32, #tpu.memory_space<vmem>>, vector<4x8xf32>
    %c0_21 = arith.constant 0 : index
    %c0_22 = arith.constant 0 : index
    %16 = vector.load %arg9[%c0_21, %c0_22] : memref<4x1xf32, #tpu.memory_space<vmem>>, vector<4x1xf32>
    %c0_23 = arith.constant 0 : index
    %c0_24 = arith.constant 0 : index
    %17 = vector.load %arg10[%c0_23, %c0_24] : memref<4x8xf32, #tpu.memory_space<vmem>>, vector<4x8xf32>
    %c0_25 = arith.constant 0 : index
    %c0_26 = arith.constant 0 : index
    %18 = vector.load %arg11[%c0_25, %c0_26] : memref<4x1xf32, #tpu.memory_space<vmem>>, vector<4x1xf32>
    %cst_27 = arith.constant dense<0.000000e+00> : vector<8x32xf32>
    %19 = tpu.matmul %13, %12, %cst_27 {dimension_numbers = #tpu.dot_dimension_numbers<[1], [0], [0], [1], [0, 0, 1, 1], [], []>} : vector<8x4xf32>, vector<4x32xf32>, vector<8x32xf32> -> vector<8x32xf32>
    %20 = vector.broadcast %14 : vector<8x1xf32> to vector<8x32xf32>
    %21 = arith.addf %19, %20 : vector<8x32xf32>
    %cst_28 = arith.constant 3.000000e+00 : f32
    %22 = vector.broadcast %cst_28 : f32 to vector<8x32xf32>
    %23 = arith.addf %21, %22 : vector<8x32xf32>
    %cst_29 = arith.constant 0.000000e+00 : f32
    %cst_30 = arith.constant 6.000000e+00 : f32
    %24 = vector.broadcast %cst_29 : f32 to vector<8x32xf32>
    %25 = arith.maximumf %24, %23 : vector<8x32xf32>
    %26 = vector.broadcast %cst_30 : f32 to vector<8x32xf32>
    %27 = arith.minimumf %26, %25 : vector<8x32xf32>
    %28 = arith.mulf %21, %27 : vector<8x32xf32>
    %cst_31 = arith.constant 0.166666672 : f32
    %29 = vector.broadcast %cst_31 : f32 to vector<8x32xf32>
    %30 = arith.mulf %28, %29 : vector<8x32xf32>
    %31 = vector.extract_strided_slice %30 {offsets = [0, 0], sizes = [8, 16], strides = [1, 1]} : vector<8x32xf32> to vector<8x16xf32>
    %cst_32 = arith.constant dense<0.000000e+00> : vector<4x16xf32>
    %32 = tpu.matmul %15, %31, %cst_32 {dimension_numbers = #tpu.dot_dimension_numbers<[1], [0], [0], [1], [0, 0, 1, 1], [], []>} : vector<4x8xf32>, vector<8x16xf32>, vector<4x16xf32> -> vector<4x16xf32>
    %33 = vector.broadcast %16 : vector<4x1xf32> to vector<4x16xf32>
    %34 = arith.addf %32, %33 : vector<4x16xf32>
    %cst_33 = arith.constant 0.000000e+00 : f32
    %35 = vector.broadcast %cst_33 : f32 to vector<4x16xf32>
    %36 = arith.subf %35, %34 : vector<4x16xf32>
    %37 = math.exp %36 : vector<4x16xf32>
    %cst_34 = arith.constant 1.000000e+00 : f32
    %38 = vector.broadcast %cst_34 : f32 to vector<4x16xf32>
    %39 = arith.addf %38, %37 : vector<4x16xf32>
    %cst_35 = arith.constant 1.000000e+00 : f32
    %40 = vector.broadcast %cst_35 : f32 to vector<4x16xf32>
    %41 = arith.divf %40, %39 : vector<4x16xf32>
    %42 = vector.extract_strided_slice %30 {offsets = [0, 16], sizes = [8, 16], strides = [1, 1]} : vector<8x32xf32> to vector<8x16xf32>
    %cst_36 = arith.constant dense<0.000000e+00> : vector<4x16xf32>
    %43 = tpu.matmul %17, %42, %cst_36 {dimension_numbers = #tpu.dot_dimension_numbers<[1], [0], [0], [1], [0, 0, 1, 1], [], []>} : vector<4x8xf32>, vector<8x16xf32>, vector<4x16xf32> -> vector<4x16xf32>
    %44 = vector.broadcast %18 : vector<4x1xf32> to vector<4x16xf32>
    %45 = arith.addf %43, %44 : vector<4x16xf32>
    %cst_37 = arith.constant 0.000000e+00 : f32
    %46 = vector.broadcast %cst_37 : f32 to vector<4x16xf32>
    %47 = arith.subf %46, %45 : vector<4x16xf32>
    %48 = math.exp %47 : vector<4x16xf32>
    %cst_38 = arith.constant 1.000000e+00 : f32
    %49 = vector.broadcast %cst_38 : f32 to vector<4x16xf32>
    %50 = arith.addf %49, %48 : vector<4x16xf32>
    %cst_39 = arith.constant 1.000000e+00 : f32
    %51 = vector.broadcast %cst_39 : f32 to vector<4x16xf32>
    %52 = arith.divf %51, %50 : vector<4x16xf32>
    %c0_40 = arith.constant 0 : index
    %c0_41 = arith.constant 0 : index
    %c0_42 = arith.constant 0 : index
    %53 = vector.load %arg1[%c0_40, %c0_41, %c0_42] : memref<1x4x256xf32, #tpu.memory_space<vmem>>, vector<1x4x256xf32>
    %54 = vector.shape_cast %53 : vector<1x4x256xf32> to vector<4x256xf32>
    %c0_43 = arith.constant 0 : index
    %c0_44 = arith.constant 0 : index
    %55 = vector.load %arg4[%c0_43, %c0_44] : memref<16x256xbf16, #tpu.memory_space<vmem>>, vector<16x256xbf16>
    %cst_45 = arith.constant dense<0.000000e+00> : vector<4x256xf32>
    %56 = tpu.matmul %41, %55, %cst_45 {dimension_numbers = #tpu.dot_dimension_numbers<[1], [0], [0], [1], [0, 0, 1, 1], [], []>} : vector<4x16xf32>, vector<16x256xbf16>, vector<4x256xf32> -> vector<4x256xf32>
    %c0_46 = arith.constant 0 : index
    %c0_47 = arith.constant 0 : index
    %57 = vector.load %arg5[%c0_46, %c0_47] : memref<16x256xbf16, #tpu.memory_space<vmem>>, vector<16x256xbf16>
    %cst_48 = arith.constant dense<0.000000e+00> : vector<4x256xf32>
    %58 = tpu.matmul %52, %57, %cst_48 {dimension_numbers = #tpu.dot_dimension_numbers<[1], [0], [0], [1], [0, 0, 1, 1], [], []>} : vector<4x16xf32>, vector<16x256xbf16>, vector<4x256xf32> -> vector<4x256xf32>
    %59 = arith.mulf %54, %56 : vector<4x256xf32>
    %60 = arith.mulf %59, %58 : vector<4x256xf32>
    %c0_49 = arith.constant 0 : index
    %c0_50 = arith.constant 0 : index
    %c0_51 = arith.constant 0 : index
    %61 = vector.load %arg12[%c0_49, %c0_50, %c0_51] : memref<1x4x256xf32, #tpu.memory_space<vmem>>, vector<1x4x256xf32>
    %62 = vector.shape_cast %61 : vector<1x4x256xf32> to vector<4x256xf32>
    %63 = vector.shape_cast %60 : vector<4x256xf32> to vector<1x4x256xf32>
    tpu.vector_store %arg12[%c0_49, %c0_50, %c0_51], %63 {strides = array<i32>} : memref<1x4x256xf32, #tpu.memory_space<vmem>>, vector<1x4x256xf32>,
    return
  }
  func.func @transform_0(%arg0: i32) -> (i32, i32, i32) {
    %c0_i32 = arith.constant 0 : i32
    %c0_i32_0 = arith.constant 0 : i32
    %c0_i32_1 = arith.constant 0 : i32
    return %arg0, %c0_i32, %c0_i32_0 : i32, i32, i32
  }
  func.func @transform_1(%arg0: i32) -> (i32, i32) {
    %c0_i32 = arith.constant 0 : i32
    %c0_i32_0 = arith.constant 0 : i32
    %c0_i32_1 = arith.constant 0 : i32
    return %c0_i32, %c0_i32_0 : i32, i32
  }
  func.func @transform_2(%arg0: i32) -> (i32, i32) {
    %c0_i32 = arith.constant 0 : i32
    %c0_i32_0 = arith.constant 0 : i32
    %c0_i32_1 = arith.constant 0 : i32
    return %c0_i32, %c0_i32_0 : i32, i32
  }
  func.func @transform_3(%arg0: i32) -> (i32, i32) {
    %c0_i32 = arith.constant 0 : i32
    %c0_i32_0 = arith.constant 0 : i32
    %c0_i32_1 = arith.constant 0 : i32
    return %c0_i32, %c0_i32_0 : i32, i32
  }
  func.func @transform_4(%arg0: i32) -> (i32, i32) {
    %c0_i32 = arith.constant 0 : i32
    %c0_i32_0 = arith.constant 0 : i32
    %c0_i32_1 = arith.constant 0 : i32
    return %c0_i32, %c0_i32_0 : i32, i32
  }
  func.func @transform_5(%arg0: i32) -> (i32, i32) {
    %c0_i32 = arith.constant 0 : i32
    %c0_i32_0 = arith.constant 0 : i32
    %c0_i32_1 = arith.constant 0 : i32
    return %c0_i32, %c0_i32_0 : i32, i32
  }
  func.func @transform_6(%arg0: i32) -> (i32, i32) {
    %c0_i32 = arith.constant 0 : i32
    %c0_i32_0 = arith.constant 0 : i32
    %c0_i32_1 = arith.constant 0 : i32
    return %c0_i32, %c0_i32_0 : i32, i32
  }
  func.func @transform_7(%arg0: i32) -> (i32, i32) {
    %c0_i32 = arith.constant 0 : i32
    %c0_i32_0 = arith.constant 0 : i32
    %c0_i32_1 = arith.constant 0 : i32
    return %c0_i32, %c0_i32_0 : i32, i32
  }
  func.func @transform_8(%arg0: i32) -> (i32, i32) {
    %c0_i32 = arith.constant 0 : i32
    %c0_i32_0 = arith.constant 0 : i32
    %c0_i32_1 = arith.constant 0 : i32
    return %c0_i32, %c0_i32_0 : i32, i32
  }
  func.func @transform_9(%arg0: i32) -> (i32, i32) {
    %c0_i32 = arith.constant 0 : i32
    %c0_i32_0 = arith.constant 0 : i32
    %c0_i32_1 = arith.constant 0 : i32
    return %c0_i32, %c0_i32_0 : i32, i32
  }
  func.func @transform_10(%arg0: i32) -> (i32, i32) {
    %c0_i32 = arith.constant 0 : i32
    %c0_i32_0 = arith.constant 0 : i32
    %c0_i32_1 = arith.constant 0 : i32
    return %c0_i32, %c0_i32_0 : i32, i32
  }
  func.func @transform_11(%arg0: i32) -> (i32, i32, i32) {
    %c0_i32 = arith.constant 0 : i32
    %c0_i32_0 = arith.constant 0 : i32
    %c0_i32_1 = arith.constant 0 : i32
    return %arg0, %c0_i32, %c0_i32_0 : i32, i32, i32
  }
}

module attributes {stable_mosaic.version = 11 : i64} {
  func.func @_coordatt_fused_kernel(%arg0: i32, %arg1: memref<1x4x256xf32, #tpu.memory_space<vmem>>, %arg2: memref<256x32xbf16, #tpu.memory_space<vmem>>, %arg3: memref<1x32xf32, #tpu.memory_space<vmem>>, %arg4: memref<16x256xbf16, #tpu.memory_space<vmem>>, %arg5: memref<16x256xbf16, #tpu.memory_space<vmem>>, %arg6: memref<8x4xf32, #tpu.memory_space<vmem>>, %arg7: memref<8x1xf32, #tpu.memory_space<vmem>>, %arg8: memref<4x8xf32, #tpu.memory_space<vmem>>, %arg9: memref<4x1xf32, #tpu.memory_space<vmem>>, %arg10: memref<4x8xf32, #tpu.memory_space<vmem>>, %arg11: memref<4x1xf32, #tpu.memory_space<vmem>>, %arg12: memref<1x4x256xf32, #tpu.memory_space<vmem>>, %arg13: memref<4x32xf32, #tpu.memory_space<vmem>>) attributes {dimension_semantics = [#tpu.dimension_semantics<parallel>], iteration_bounds = array<i64: 2>, scalar_prefetch = 0 : i64, scratch_operands = 1 : i64, tpu.core_type = #tpu.core_type<tc>, window_params = [{transform_indices = @transform_0, window_bounds = array<i64: 1, 4, 256>}, {pipeline_mode = #tpu.pipeline_mode<synchronous>, transform_indices = @transform_1, window_bounds = array<i64: 256, 32>}, {pipeline_mode = #tpu.pipeline_mode<synchronous>, transform_indices = @transform_2, window_bounds = array<i64: 1, 32>}, {pipeline_mode = #tpu.pipeline_mode<synchronous>, transform_indices = @transform_3, window_bounds = array<i64: 16, 256>}, {pipeline_mode = #tpu.pipeline_mode<synchronous>, transform_indices = @transform_4, window_bounds = array<i64: 16, 256>}, {pipeline_mode = #tpu.pipeline_mode<synchronous>, transform_indices = @transform_5, window_bounds = array<i64: 8, 4>}, {pipeline_mode = #tpu.pipeline_mode<synchronous>, transform_indices = @transform_6, window_bounds = array<i64: 8, 1>}, {pipeline_mode = #tpu.pipeline_mode<synchronous>, transform_indices = @transform_7, window_bounds = array<i64: 4, 8>}, {pipeline_mode = #tpu.pipeline_mode<synchronous>, transform_indices = @transform_8, window_bounds = array<i64: 4, 1>}, {pipeline_mode = #tpu.pipeline_mode<synchronous>, transform_indices = @transform_9, window_bounds = array<i64: 4, 8>}, {pipeline_mode = #tpu.pipeline_mode<synchronous>, transform_indices = @transform_10, window_bounds = array<i64: 4, 1>}, {transform_indices = @transform_11, window_bounds = array<i64: 1, 4, 256>}]} {
    %cst = arith.constant 0.000000e+00 : f32
    %0 = vector.broadcast %cst : f32 to vector<4x32xf32>
    %c0 = arith.constant 0 : index
    %c0_0 = arith.constant 0 : index
    %1 = vector.load %arg13[%c0, %c0_0] : memref<4x32xf32, #tpu.memory_space<vmem>>, vector<4x32xf32>
    tpu.vector_store %arg13[%c0, %c0_0], %0 {strides = array<i32>} : memref<4x32xf32, #tpu.memory_space<vmem>>, vector<4x32xf32>,
    %c0_1 = arith.constant 0 : index
    %c0_2 = arith.constant 0 : index
    %c0_3 = arith.constant 0 : index
    %2 = vector.load %arg1[%c0_1, %c0_2, %c0_3] : memref<1x4x256xf32, #tpu.memory_space<vmem>>, vector<1x4x256xf32>
    %3 = vector.shape_cast %2 : vector<1x4x256xf32> to vector<4x256xf32>
    %c0_4 = arith.constant 0 : index
    %c0_5 = arith.constant 0 : index
    %4 = vector.load %arg2[%c0_4, %c0_5] : memref<256x32xbf16, #tpu.memory_space<vmem>>, vector<256x32xbf16>
    %c0_6 = arith.constant 0 : index
    %c0_7 = arith.constant 0 : index
    %5 = vector.load %arg13[%c0_6, %c0_7] : memref<4x32xf32, #tpu.memory_space<vmem>>, vector<4x32xf32>
    %cst_8 = arith.constant dense<0.000000e+00> : vector<4x32xf32>
    %6 = tpu.matmul %3, %4, %cst_8 {dimension_numbers = #tpu.dot_dimension_numbers<[1], [0], [0], [1], [0, 0, 1, 1], [], []>} : vector<4x256xf32>, vector<256x32xbf16>, vector<4x32xf32> -> vector<4x32xf32>
    %7 = arith.addf %5, %6 : vector<4x32xf32>
    %c0_9 = arith.constant 0 : index
    %c0_10 = arith.constant 0 : index
    %8 = vector.load %arg13[%c0_9, %c0_10] : memref<4x32xf32, #tpu.memory_space<vmem>>, vector<4x32xf32>
    tpu.vector_store %arg13[%c0_9, %c0_10], %7 {strides = array<i32>} : memref<4x32xf32, #tpu.memory_space<vmem>>, vector<4x32xf32>,
    %c0_11 = arith.constant 0 : index
    %c0_12 = arith.constant 0 : index
    %9 = vector.load %arg13[%c0_11, %c0_12] : memref<4x32xf32, #tpu.memory_space<vmem>>, vector<4x32xf32>
    %c0_13 = arith.constant 0 : index
    %c0_14 = arith.constant 0 : index
    %10 = vector.load %arg3[%c0_13, %c0_14] : memref<1x32xf32, #tpu.memory_space<vmem>>, vector<1x32xf32>
    %11 = vector.broadcast %10 : vector<1x32xf32> to vector<4x32xf32>
    %12 = arith.mulf %9, %11 : vector<4x32xf32>
    %c0_15 = arith.constant 0 : index
    %c0_16 = arith.constant 0 : index
    %13 = vector.load %arg6[%c0_15, %c0_16] : memref<8x4xf32, #tpu.memory_space<vmem>>, vector<8x4xf32>
    %c0_17 = arith.constant 0 : index
    %c0_18 = arith.constant 0 : index
    %14 = vector.load %arg7[%c0_17, %c0_18] : memref<8x1xf32, #tpu.memory_space<vmem>>, vector<8x1xf32>
    %c0_19 = arith.constant 0 : index
    %c0_20 = arith.constant 0 : index
    %15 = vector.load %arg8[%c0_19, %c0_20] : memref<4x8xf32, #tpu.memory_space<vmem>>, vector<4x8xf32>
    %c0_21 = arith.constant 0 : index
    %c0_22 = arith.constant 0 : index
    %16 = vector.load %arg9[%c0_21, %c0_22] : memref<4x1xf32, #tpu.memory_space<vmem>>, vector<4x1xf32>
    %c0_23 = arith.constant 0 : index
    %c0_24 = arith.constant 0 : index
    %17 = vector.load %arg10[%c0_23, %c0_24] : memref<4x8xf32, #tpu.memory_space<vmem>>, vector<4x8xf32>
    %c0_25 = arith.constant 0 : index
    %c0_26 = arith.constant 0 : index
    %18 = vector.load %arg11[%c0_25, %c0_26] : memref<4x1xf32, #tpu.memory_space<vmem>>, vector<4x1xf32>
    %cst_27 = arith.constant dense<0.000000e+00> : vector<8x32xf32>
    %19 = tpu.matmul %13, %12, %cst_27 {dimension_numbers = #tpu.dot_dimension_numbers<[1], [0], [0], [1], [0, 0, 1, 1], [], []>} : vector<8x4xf32>, vector<4x32xf32>, vector<8x32xf32> -> vector<8x32xf32>
    %20 = vector.broadcast %14 : vector<8x1xf32> to vector<8x32xf32>
    %21 = arith.addf %19, %20 : vector<8x32xf32>
    %cst_28 = arith.constant 3.000000e+00 : f32
    %22 = vector.broadcast %cst_28 : f32 to vector<8x32xf32>
    %23 = arith.addf %21, %22 : vector<8x32xf32>
    %cst_29 = arith.constant 0.000000e+00 : f32
    %cst_30 = arith.constant 6.000000e+00 : f32
    %24 = vector.broadcast %cst_29 : f32 to vector<8x32xf32>
    %25 = arith.maximumf %24, %23 : vector<8x32xf32>
    %26 = vector.broadcast %cst_30 : f32 to vector<8x32xf32>
    %27 = arith.minimumf %26, %25 : vector<8x32xf32>
    %28 = arith.mulf %21, %27 : vector<8x32xf32>
    %cst_31 = arith.constant 0.166666672 : f32
    %29 = vector.broadcast %cst_31 : f32 to vector<8x32xf32>
    %30 = arith.mulf %28, %29 : vector<8x32xf32>
    %31 = vector.extract_strided_slice %30 {offsets = [0, 0], sizes = [8, 16], strides = [1, 1]} : vector<8x32xf32> to vector<8x16xf32>
    %cst_32 = arith.constant dense<0.000000e+00> : vector<4x16xf32>
    %32 = tpu.matmul %15, %31, %cst_32 {dimension_numbers = #tpu.dot_dimension_numbers<[1], [0], [0], [1], [0, 0, 1, 1], [], []>} : vector<4x8xf32>, vector<8x16xf32>, vector<4x16xf32> -> vector<4x16xf32>
    %33 = vector.broadcast %16 : vector<4x1xf32> to vector<4x16xf32>
    %34 = arith.addf %32, %33 : vector<4x16xf32>
    %cst_33 = arith.constant 0.000000e+00 : f32
    %35 = vector.broadcast %cst_33 : f32 to vector<4x16xf32>
    %36 = arith.subf %35, %34 : vector<4x16xf32>
    %37 = math.exp %36 : vector<4x16xf32>
    %cst_34 = arith.constant 1.000000e+00 : f32
    %38 = vector.broadcast %cst_34 : f32 to vector<4x16xf32>
    %39 = arith.addf %38, %37 : vector<4x16xf32>
    %cst_35 = arith.constant 1.000000e+00 : f32
    %40 = vector.broadcast %cst_35 : f32 to vector<4x16xf32>
    %41 = arith.divf %40, %39 : vector<4x16xf32>
    %42 = vector.extract_strided_slice %30 {offsets = [0, 16], sizes = [8, 16], strides = [1, 1]} : vector<8x32xf32> to vector<8x16xf32>
    %cst_36 = arith.constant dense<0.000000e+00> : vector<4x16xf32>
    %43 = tpu.matmul %17, %42, %cst_36 {dimension_numbers = #tpu.dot_dimension_numbers<[1], [0], [0], [1], [0, 0, 1, 1], [], []>} : vector<4x8xf32>, vector<8x16xf32>, vector<4x16xf32> -> vector<4x16xf32>
    %44 = vector.broadcast %18 : vector<4x1xf32> to vector<4x16xf32>
    %45 = arith.addf %43, %44 : vector<4x16xf32>
    %cst_37 = arith.constant 0.000000e+00 : f32
    %46 = vector.broadcast %cst_37 : f32 to vector<4x16xf32>
    %47 = arith.subf %46, %45 : vector<4x16xf32>
    %48 = math.exp %47 : vector<4x16xf32>
    %cst_38 = arith.constant 1.000000e+00 : f32
    %49 = vector.broadcast %cst_38 : f32 to vector<4x16xf32>
    %50 = arith.addf %49, %48 : vector<4x16xf32>
    %cst_39 = arith.constant 1.000000e+00 : f32
    %51 = vector.broadcast %cst_39 : f32 to vector<4x16xf32>
    %52 = arith.divf %51, %50 : vector<4x16xf32>
    %c0_40 = arith.constant 0 : index
    %c0_41 = arith.constant 0 : index
    %c0_42 = arith.constant 0 : index
    %53 = vector.load %arg1[%c0_40, %c0_41, %c0_42] : memref<1x4x256xf32, #tpu.memory_space<vmem>>, vector<1x4x256xf32>
    %54 = vector.shape_cast %53 : vector<1x4x256xf32> to vector<4x256xf32>
    %c0_43 = arith.constant 0 : index
    %c0_44 = arith.constant 0 : index
    %55 = vector.load %arg4[%c0_43, %c0_44] : memref<16x256xbf16, #tpu.memory_space<vmem>>, vector<16x256xbf16>
    %cst_45 = arith.constant dense<0.000000e+00> : vector<4x256xf32>
    %56 = tpu.matmul %41, %55, %cst_45 {dimension_numbers = #tpu.dot_dimension_numbers<[1], [0], [0], [1], [0, 0, 1, 1], [], []>} : vector<4x16xf32>, vector<16x256xbf16>, vector<4x256xf32> -> vector<4x256xf32>
    %c0_46 = arith.constant 0 : index
    %c0_47 = arith.constant 0 : index
    %57 = vector.load %arg5[%c0_46, %c0_47] : memref<16x256xbf16, #tpu.memory_space<vmem>>, vector<16x256xbf16>
    %cst_48 = arith.constant dense<0.000000e+00> : vector<4x256xf32>
    %58 = tpu.matmul %52, %57, %cst_48 {dimension_numbers = #tpu.dot_dimension_numbers<[1], [0], [0], [1], [0, 0, 1, 1], [], []>} : vector<4x16xf32>, vector<16x256xbf16>, vector<4x256xf32> -> vector<4x256xf32>
    %59 = arith.mulf %54, %56 : vector<4x256xf32>
    %60 = arith.mulf %59, %58 : vector<4x256xf32>
    %c0_49 = arith.constant 0 : index
    %c0_50 = arith.constant 0 : index
    %c0_51 = arith.constant 0 : index
    %61 = vector.load %arg12[%c0_49, %c0_50, %c0_51] : memref<1x4x256xf32, #tpu.memory_space<vmem>>, vector<1x4x256xf32>
    %62 = vector.shape_cast %61 : vector<1x4x256xf32> to vector<4x256xf32>
    %63 = vector.shape_cast %60 : vector<4x256xf32> to vector<1x4x256xf32>
    tpu.vector_store %arg12[%c0_49, %c0_50, %c0_51], %63 {strides = array<i32>} : memref<1x4x256xf32, #tpu.memory_space<vmem>>, vector<1x4x256xf32>,
    return
  }
  func.func @transform_0(%arg0: i32) -> (i32, i32, i32) {
    %c0_i32 = arith.constant 0 : i32
    %c0_i32_0 = arith.constant 0 : i32
    %c0_i32_1 = arith.constant 0 : i32
    return %arg0, %c0_i32, %c0_i32_0 : i32, i32, i32
  }
  func.func @transform_1(%arg0: i32) -> (i32, i32) {
    %c0_i32 = arith.constant 0 : i32
    %c0_i32_0 = arith.constant 0 : i32
    %c0_i32_1 = arith.constant 0 : i32
    return %c0_i32, %c0_i32_0 : i32, i32
  }
  func.func @transform_2(%arg0: i32) -> (i32, i32) {
    %c0_i32 = arith.constant 0 : i32
    %c0_i32_0 = arith.constant 0 : i32
    %c0_i32_1 = arith.constant 0 : i32
    return %c0_i32, %c0_i32_0 : i32, i32
  }
  func.func @transform_3(%arg0: i32) -> (i32, i32) {
    %c0_i32 = arith.constant 0 : i32
    %c0_i32_0 = arith.constant 0 : i32
    %c0_i32_1 = arith.constant 0 : i32
    return %c0_i32, %c0_i32_0 : i32, i32
  }
  func.func @transform_4(%arg0: i32) -> (i32, i32) {
    %c0_i32 = arith.constant 0 : i32
    %c0_i32_0 = arith.constant 0 : i32
    %c0_i32_1 = arith.constant 0 : i32
    return %c0_i32, %c0_i32_0 : i32, i32
  }
  func.func @transform_5(%arg0: i32) -> (i32, i32) {
    %c0_i32 = arith.constant 0 : i32
    %c0_i32_0 = arith.constant 0 : i32
    %c0_i32_1 = arith.constant 0 : i32
    return %c0_i32, %c0_i32_0 : i32, i32
  }
  func.func @transform_6(%arg0: i32) -> (i32, i32) {
    %c0_i32 = arith.constant 0 : i32
    %c0_i32_0 = arith.constant 0 : i32
    %c0_i32_1 = arith.constant 0 : i32
    return %c0_i32, %c0_i32_0 : i32, i32
  }
  func.func @transform_7(%arg0: i32) -> (i32, i32) {
    %c0_i32 = arith.constant 0 : i32
    %c0_i32_0 = arith.constant 0 : i32
    %c0_i32_1 = arith.constant 0 : i32
    return %c0_i32, %c0_i32_0 : i32, i32
  }
  func.func @transform_8(%arg0: i32) -> (i32, i32) {
    %c0_i32 = arith.constant 0 : i32
    %c0_i32_0 = arith.constant 0 : i32
    %c0_i32_1 = arith.constant 0 : i32
    return %c0_i32, %c0_i32_0 : i32, i32
  }
  func.func @transform_9(%arg0: i32) -> (i32, i32) {
    %c0_i32 = arith.constant 0 : i32
    %c0_i32_0 = arith.constant 0 : i32
    %c0_i32_1 = arith.constant 0 : i32
    return %c0_i32, %c0_i32_0 : i32, i32
  }
  func.func @transform_10(%arg0: i32) -> (i32, i32) {
    %c0_i32 = arith.constant 0 : i32
    %c0_i32_0 = arith.constant 0 : i32
    %c0_i32_1 = arith.constant 0 : i32
    return %c0_i32, %c0_i32_0 : i32, i32
  }
  func.func @transform_11(%arg0: i32) -> (i32, i32, i32) {
    %c0_i32 = arith.constant 0 : i32
    %c0_i32_0 = arith.constant 0 : i32
    %c0_i32_1 = arith.constant 0 : i32
    return %arg0, %c0_i32, %c0_i32_0 : i32, i32, i32
  }
}

module attributes {stable_mosaic.version = 11 : i64} {
  func.func @_coordatt_maps_kernel(%arg0: i32, %arg1: memref<1x4x256xf32, #tpu.memory_space<vmem>>, %arg2: memref<256x32xbf16, #tpu.memory_space<vmem>>, %arg3: memref<1x32xf32, #tpu.memory_space<vmem>>, %arg4: memref<8x4xf32, #tpu.memory_space<vmem>>, %arg5: memref<8x1xf32, #tpu.memory_space<vmem>>, %arg6: memref<4x8xf32, #tpu.memory_space<vmem>>, %arg7: memref<4x1xf32, #tpu.memory_space<vmem>>, %arg8: memref<4x8xf32, #tpu.memory_space<vmem>>, %arg9: memref<4x1xf32, #tpu.memory_space<vmem>>, %arg10: memref<1x4x32xf32, #tpu.memory_space<vmem>>, %arg11: memref<4x32xf32, #tpu.memory_space<vmem>>) attributes {dimension_semantics = [#tpu.dimension_semantics<parallel>], iteration_bounds = array<i64: 2>, scalar_prefetch = 0 : i64, scratch_operands = 1 : i64, tpu.core_type = #tpu.core_type<tc>, window_params = [{transform_indices = @transform_0, window_bounds = array<i64: 1, 4, 256>}, {pipeline_mode = #tpu.pipeline_mode<synchronous>, transform_indices = @transform_1, window_bounds = array<i64: 256, 32>}, {pipeline_mode = #tpu.pipeline_mode<synchronous>, transform_indices = @transform_2, window_bounds = array<i64: 1, 32>}, {pipeline_mode = #tpu.pipeline_mode<synchronous>, transform_indices = @transform_3, window_bounds = array<i64: 8, 4>}, {pipeline_mode = #tpu.pipeline_mode<synchronous>, transform_indices = @transform_4, window_bounds = array<i64: 8, 1>}, {pipeline_mode = #tpu.pipeline_mode<synchronous>, transform_indices = @transform_5, window_bounds = array<i64: 4, 8>}, {pipeline_mode = #tpu.pipeline_mode<synchronous>, transform_indices = @transform_6, window_bounds = array<i64: 4, 1>}, {pipeline_mode = #tpu.pipeline_mode<synchronous>, transform_indices = @transform_7, window_bounds = array<i64: 4, 8>}, {pipeline_mode = #tpu.pipeline_mode<synchronous>, transform_indices = @transform_8, window_bounds = array<i64: 4, 1>}, {transform_indices = @transform_9, window_bounds = array<i64: 1, 4, 32>}]} {
    %cst = arith.constant 0.000000e+00 : f32
    %0 = vector.broadcast %cst : f32 to vector<4x32xf32>
    %c0 = arith.constant 0 : index
    %c0_0 = arith.constant 0 : index
    %1 = vector.load %arg11[%c0, %c0_0] : memref<4x32xf32, #tpu.memory_space<vmem>>, vector<4x32xf32>
    tpu.vector_store %arg11[%c0, %c0_0], %0 {strides = array<i32>} : memref<4x32xf32, #tpu.memory_space<vmem>>, vector<4x32xf32>,
    %c0_1 = arith.constant 0 : index
    %c0_2 = arith.constant 0 : index
    %c0_3 = arith.constant 0 : index
    %2 = vector.load %arg1[%c0_1, %c0_2, %c0_3] : memref<1x4x256xf32, #tpu.memory_space<vmem>>, vector<1x4x256xf32>
    %3 = vector.shape_cast %2 : vector<1x4x256xf32> to vector<4x256xf32>
    %c0_4 = arith.constant 0 : index
    %c0_5 = arith.constant 0 : index
    %4 = vector.load %arg2[%c0_4, %c0_5] : memref<256x32xbf16, #tpu.memory_space<vmem>>, vector<256x32xbf16>
    %c0_6 = arith.constant 0 : index
    %c0_7 = arith.constant 0 : index
    %5 = vector.load %arg11[%c0_6, %c0_7] : memref<4x32xf32, #tpu.memory_space<vmem>>, vector<4x32xf32>
    %cst_8 = arith.constant dense<0.000000e+00> : vector<4x32xf32>
    %6 = tpu.matmul %3, %4, %cst_8 {dimension_numbers = #tpu.dot_dimension_numbers<[1], [0], [0], [1], [0, 0, 1, 1], [], []>} : vector<4x256xf32>, vector<256x32xbf16>, vector<4x32xf32> -> vector<4x32xf32>
    %7 = arith.addf %5, %6 : vector<4x32xf32>
    %c0_9 = arith.constant 0 : index
    %c0_10 = arith.constant 0 : index
    %8 = vector.load %arg11[%c0_9, %c0_10] : memref<4x32xf32, #tpu.memory_space<vmem>>, vector<4x32xf32>
    tpu.vector_store %arg11[%c0_9, %c0_10], %7 {strides = array<i32>} : memref<4x32xf32, #tpu.memory_space<vmem>>, vector<4x32xf32>,
    %c0_11 = arith.constant 0 : index
    %c0_12 = arith.constant 0 : index
    %9 = vector.load %arg11[%c0_11, %c0_12] : memref<4x32xf32, #tpu.memory_space<vmem>>, vector<4x32xf32>
    %c0_13 = arith.constant 0 : index
    %c0_14 = arith.constant 0 : index
    %10 = vector.load %arg3[%c0_13, %c0_14] : memref<1x32xf32, #tpu.memory_space<vmem>>, vector<1x32xf32>
    %11 = vector.broadcast %10 : vector<1x32xf32> to vector<4x32xf32>
    %12 = arith.mulf %9, %11 : vector<4x32xf32>
    %c0_15 = arith.constant 0 : index
    %c0_16 = arith.constant 0 : index
    %13 = vector.load %arg4[%c0_15, %c0_16] : memref<8x4xf32, #tpu.memory_space<vmem>>, vector<8x4xf32>
    %c0_17 = arith.constant 0 : index
    %c0_18 = arith.constant 0 : index
    %14 = vector.load %arg5[%c0_17, %c0_18] : memref<8x1xf32, #tpu.memory_space<vmem>>, vector<8x1xf32>
    %c0_19 = arith.constant 0 : index
    %c0_20 = arith.constant 0 : index
    %15 = vector.load %arg6[%c0_19, %c0_20] : memref<4x8xf32, #tpu.memory_space<vmem>>, vector<4x8xf32>
    %c0_21 = arith.constant 0 : index
    %c0_22 = arith.constant 0 : index
    %16 = vector.load %arg7[%c0_21, %c0_22] : memref<4x1xf32, #tpu.memory_space<vmem>>, vector<4x1xf32>
    %c0_23 = arith.constant 0 : index
    %c0_24 = arith.constant 0 : index
    %17 = vector.load %arg8[%c0_23, %c0_24] : memref<4x8xf32, #tpu.memory_space<vmem>>, vector<4x8xf32>
    %c0_25 = arith.constant 0 : index
    %c0_26 = arith.constant 0 : index
    %18 = vector.load %arg9[%c0_25, %c0_26] : memref<4x1xf32, #tpu.memory_space<vmem>>, vector<4x1xf32>
    %cst_27 = arith.constant dense<0.000000e+00> : vector<8x32xf32>
    %19 = tpu.matmul %13, %12, %cst_27 {dimension_numbers = #tpu.dot_dimension_numbers<[1], [0], [0], [1], [0, 0, 1, 1], [], []>} : vector<8x4xf32>, vector<4x32xf32>, vector<8x32xf32> -> vector<8x32xf32>
    %20 = vector.broadcast %14 : vector<8x1xf32> to vector<8x32xf32>
    %21 = arith.addf %19, %20 : vector<8x32xf32>
    %cst_28 = arith.constant 3.000000e+00 : f32
    %22 = vector.broadcast %cst_28 : f32 to vector<8x32xf32>
    %23 = arith.addf %21, %22 : vector<8x32xf32>
    %cst_29 = arith.constant 0.000000e+00 : f32
    %cst_30 = arith.constant 6.000000e+00 : f32
    %24 = vector.broadcast %cst_29 : f32 to vector<8x32xf32>
    %25 = arith.maximumf %24, %23 : vector<8x32xf32>
    %26 = vector.broadcast %cst_30 : f32 to vector<8x32xf32>
    %27 = arith.minimumf %26, %25 : vector<8x32xf32>
    %28 = arith.mulf %21, %27 : vector<8x32xf32>
    %cst_31 = arith.constant 0.166666672 : f32
    %29 = vector.broadcast %cst_31 : f32 to vector<8x32xf32>
    %30 = arith.mulf %28, %29 : vector<8x32xf32>
    %31 = vector.extract_strided_slice %30 {offsets = [0, 0], sizes = [8, 16], strides = [1, 1]} : vector<8x32xf32> to vector<8x16xf32>
    %cst_32 = arith.constant dense<0.000000e+00> : vector<4x16xf32>
    %32 = tpu.matmul %15, %31, %cst_32 {dimension_numbers = #tpu.dot_dimension_numbers<[1], [0], [0], [1], [0, 0, 1, 1], [], []>} : vector<4x8xf32>, vector<8x16xf32>, vector<4x16xf32> -> vector<4x16xf32>
    %33 = vector.broadcast %16 : vector<4x1xf32> to vector<4x16xf32>
    %34 = arith.addf %32, %33 : vector<4x16xf32>
    %cst_33 = arith.constant 0.000000e+00 : f32
    %35 = vector.broadcast %cst_33 : f32 to vector<4x16xf32>
    %36 = arith.subf %35, %34 : vector<4x16xf32>
    %37 = math.exp %36 : vector<4x16xf32>
    %cst_34 = arith.constant 1.000000e+00 : f32
    %38 = vector.broadcast %cst_34 : f32 to vector<4x16xf32>
    %39 = arith.addf %38, %37 : vector<4x16xf32>
    %cst_35 = arith.constant 1.000000e+00 : f32
    %40 = vector.broadcast %cst_35 : f32 to vector<4x16xf32>
    %41 = arith.divf %40, %39 : vector<4x16xf32>
    %42 = vector.extract_strided_slice %30 {offsets = [0, 16], sizes = [8, 16], strides = [1, 1]} : vector<8x32xf32> to vector<8x16xf32>
    %cst_36 = arith.constant dense<0.000000e+00> : vector<4x16xf32>
    %43 = tpu.matmul %17, %42, %cst_36 {dimension_numbers = #tpu.dot_dimension_numbers<[1], [0], [0], [1], [0, 0, 1, 1], [], []>} : vector<4x8xf32>, vector<8x16xf32>, vector<4x16xf32> -> vector<4x16xf32>
    %44 = vector.broadcast %18 : vector<4x1xf32> to vector<4x16xf32>
    %45 = arith.addf %43, %44 : vector<4x16xf32>
    %cst_37 = arith.constant 0.000000e+00 : f32
    %46 = vector.broadcast %cst_37 : f32 to vector<4x16xf32>
    %47 = arith.subf %46, %45 : vector<4x16xf32>
    %48 = math.exp %47 : vector<4x16xf32>
    %cst_38 = arith.constant 1.000000e+00 : f32
    %49 = vector.broadcast %cst_38 : f32 to vector<4x16xf32>
    %50 = arith.addf %49, %48 : vector<4x16xf32>
    %cst_39 = arith.constant 1.000000e+00 : f32
    %51 = vector.broadcast %cst_39 : f32 to vector<4x16xf32>
    %52 = arith.divf %51, %50 : vector<4x16xf32>
    %c0_40 = arith.constant 0 : index
    %c0_41 = arith.constant 0 : index
    %c0_42 = arith.constant 0 : index
    %53 = vector.load %arg10[%c0_40, %c0_41, %c0_42] : memref<1x4x32xf32, #tpu.memory_space<vmem>>, vector<1x4x16xf32>
    %54 = vector.shape_cast %53 : vector<1x4x16xf32> to vector<4x16xf32>
    %55 = vector.shape_cast %41 : vector<4x16xf32> to vector<1x4x16xf32>
    tpu.vector_store %arg10[%c0_40, %c0_41, %c0_42], %55 {strides = array<i32>} : memref<1x4x32xf32, #tpu.memory_space<vmem>>, vector<1x4x16xf32>,
    %c0_43 = arith.constant 0 : index
    %c0_44 = arith.constant 0 : index
    %c16 = arith.constant 16 : index
    %56 = vector.load %arg10[%c0_43, %c0_44, %c16] : memref<1x4x32xf32, #tpu.memory_space<vmem>>, vector<1x4x16xf32>
    %57 = vector.shape_cast %56 : vector<1x4x16xf32> to vector<4x16xf32>
    %58 = vector.shape_cast %52 : vector<4x16xf32> to vector<1x4x16xf32>
    tpu.vector_store %arg10[%c0_43, %c0_44, %c16], %58 {strides = array<i32>} : memref<1x4x32xf32, #tpu.memory_space<vmem>>, vector<1x4x16xf32>,
    return
  }
  func.func @transform_0(%arg0: i32) -> (i32, i32, i32) {
    %c0_i32 = arith.constant 0 : i32
    %c0_i32_0 = arith.constant 0 : i32
    %c0_i32_1 = arith.constant 0 : i32
    return %arg0, %c0_i32, %c0_i32_0 : i32, i32, i32
  }
  func.func @transform_1(%arg0: i32) -> (i32, i32) {
    %c0_i32 = arith.constant 0 : i32
    %c0_i32_0 = arith.constant 0 : i32
    %c0_i32_1 = arith.constant 0 : i32
    return %c0_i32, %c0_i32_0 : i32, i32
  }
  func.func @transform_2(%arg0: i32) -> (i32, i32) {
    %c0_i32 = arith.constant 0 : i32
    %c0_i32_0 = arith.constant 0 : i32
    %c0_i32_1 = arith.constant 0 : i32
    return %c0_i32, %c0_i32_0 : i32, i32
  }
  func.func @transform_3(%arg0: i32) -> (i32, i32) {
    %c0_i32 = arith.constant 0 : i32
    %c0_i32_0 = arith.constant 0 : i32
    %c0_i32_1 = arith.constant 0 : i32
    return %c0_i32, %c0_i32_0 : i32, i32
  }
  func.func @transform_4(%arg0: i32) -> (i32, i32) {
    %c0_i32 = arith.constant 0 : i32
    %c0_i32_0 = arith.constant 0 : i32
    %c0_i32_1 = arith.constant 0 : i32
    return %c0_i32, %c0_i32_0 : i32, i32
  }
  func.func @transform_5(%arg0: i32) -> (i32, i32) {
    %c0_i32 = arith.constant 0 : i32
    %c0_i32_0 = arith.constant 0 : i32
    %c0_i32_1 = arith.constant 0 : i32
    return %c0_i32, %c0_i32_0 : i32, i32
  }
  func.func @transform_6(%arg0: i32) -> (i32, i32) {
    %c0_i32 = arith.constant 0 : i32
    %c0_i32_0 = arith.constant 0 : i32
    %c0_i32_1 = arith.constant 0 : i32
    return %c0_i32, %c0_i32_0 : i32, i32
  }
  func.func @transform_7(%arg0: i32) -> (i32, i32) {
    %c0_i32 = arith.constant 0 : i32
    %c0_i32_0 = arith.constant 0 : i32
    %c0_i32_1 = arith.constant 0 : i32
    return %c0_i32, %c0_i32_0 : i32, i32
  }
  func.func @transform_8(%arg0: i32) -> (i32, i32) {
    %c0_i32 = arith.constant 0 : i32
    %c0_i32_0 = arith.constant 0 : i32
    %c0_i32_1 = arith.constant 0 : i32
    return %c0_i32, %c0_i32_0 : i32, i32
  }
  func.func @transform_9(%arg0: i32) -> (i32, i32, i32) {
    %c0_i32 = arith.constant 0 : i32
    %c0_i32_0 = arith.constant 0 : i32
    %c0_i32_1 = arith.constant 0 : i32
    return %arg0, %c0_i32, %c0_i32_0 : i32, i32, i32
  }
}

module attributes {stable_mosaic.version = 11 : i64} {
  func.func @_coordatt_maps_kernel(%arg0: i32, %arg1: memref<1x4x256xf32, #tpu.memory_space<vmem>>, %arg2: memref<256x32xbf16, #tpu.memory_space<vmem>>, %arg3: memref<1x32xf32, #tpu.memory_space<vmem>>, %arg4: memref<8x4xf32, #tpu.memory_space<vmem>>, %arg5: memref<8x1xf32, #tpu.memory_space<vmem>>, %arg6: memref<4x8xf32, #tpu.memory_space<vmem>>, %arg7: memref<4x1xf32, #tpu.memory_space<vmem>>, %arg8: memref<4x8xf32, #tpu.memory_space<vmem>>, %arg9: memref<4x1xf32, #tpu.memory_space<vmem>>, %arg10: memref<1x4x32xf32, #tpu.memory_space<vmem>>, %arg11: memref<4x32xf32, #tpu.memory_space<vmem>>) attributes {dimension_semantics = [#tpu.dimension_semantics<parallel>], iteration_bounds = array<i64: 2>, scalar_prefetch = 0 : i64, scratch_operands = 1 : i64, tpu.core_type = #tpu.core_type<tc>, window_params = [{transform_indices = @transform_0, window_bounds = array<i64: 1, 4, 256>}, {pipeline_mode = #tpu.pipeline_mode<synchronous>, transform_indices = @transform_1, window_bounds = array<i64: 256, 32>}, {pipeline_mode = #tpu.pipeline_mode<synchronous>, transform_indices = @transform_2, window_bounds = array<i64: 1, 32>}, {pipeline_mode = #tpu.pipeline_mode<synchronous>, transform_indices = @transform_3, window_bounds = array<i64: 8, 4>}, {pipeline_mode = #tpu.pipeline_mode<synchronous>, transform_indices = @transform_4, window_bounds = array<i64: 8, 1>}, {pipeline_mode = #tpu.pipeline_mode<synchronous>, transform_indices = @transform_5, window_bounds = array<i64: 4, 8>}, {pipeline_mode = #tpu.pipeline_mode<synchronous>, transform_indices = @transform_6, window_bounds = array<i64: 4, 1>}, {pipeline_mode = #tpu.pipeline_mode<synchronous>, transform_indices = @transform_7, window_bounds = array<i64: 4, 8>}, {pipeline_mode = #tpu.pipeline_mode<synchronous>, transform_indices = @transform_8, window_bounds = array<i64: 4, 1>}, {transform_indices = @transform_9, window_bounds = array<i64: 1, 4, 32>}]} {
    %cst = arith.constant 0.000000e+00 : f32
    %0 = vector.broadcast %cst : f32 to vector<4x32xf32>
    %c0 = arith.constant 0 : index
    %c0_0 = arith.constant 0 : index
    %1 = vector.load %arg11[%c0, %c0_0] : memref<4x32xf32, #tpu.memory_space<vmem>>, vector<4x32xf32>
    tpu.vector_store %arg11[%c0, %c0_0], %0 {strides = array<i32>} : memref<4x32xf32, #tpu.memory_space<vmem>>, vector<4x32xf32>,
    %c0_1 = arith.constant 0 : index
    %c0_2 = arith.constant 0 : index
    %c0_3 = arith.constant 0 : index
    %2 = vector.load %arg1[%c0_1, %c0_2, %c0_3] : memref<1x4x256xf32, #tpu.memory_space<vmem>>, vector<1x4x256xf32>
    %3 = vector.shape_cast %2 : vector<1x4x256xf32> to vector<4x256xf32>
    %c0_4 = arith.constant 0 : index
    %c0_5 = arith.constant 0 : index
    %4 = vector.load %arg2[%c0_4, %c0_5] : memref<256x32xbf16, #tpu.memory_space<vmem>>, vector<256x32xbf16>
    %c0_6 = arith.constant 0 : index
    %c0_7 = arith.constant 0 : index
    %5 = vector.load %arg11[%c0_6, %c0_7] : memref<4x32xf32, #tpu.memory_space<vmem>>, vector<4x32xf32>
    %cst_8 = arith.constant dense<0.000000e+00> : vector<4x32xf32>
    %6 = tpu.matmul %3, %4, %cst_8 {dimension_numbers = #tpu.dot_dimension_numbers<[1], [0], [0], [1], [0, 0, 1, 1], [], []>} : vector<4x256xf32>, vector<256x32xbf16>, vector<4x32xf32> -> vector<4x32xf32>
    %7 = arith.addf %5, %6 : vector<4x32xf32>
    %c0_9 = arith.constant 0 : index
    %c0_10 = arith.constant 0 : index
    %8 = vector.load %arg11[%c0_9, %c0_10] : memref<4x32xf32, #tpu.memory_space<vmem>>, vector<4x32xf32>
    tpu.vector_store %arg11[%c0_9, %c0_10], %7 {strides = array<i32>} : memref<4x32xf32, #tpu.memory_space<vmem>>, vector<4x32xf32>,
    %c0_11 = arith.constant 0 : index
    %c0_12 = arith.constant 0 : index
    %9 = vector.load %arg11[%c0_11, %c0_12] : memref<4x32xf32, #tpu.memory_space<vmem>>, vector<4x32xf32>
    %c0_13 = arith.constant 0 : index
    %c0_14 = arith.constant 0 : index
    %10 = vector.load %arg3[%c0_13, %c0_14] : memref<1x32xf32, #tpu.memory_space<vmem>>, vector<1x32xf32>
    %11 = vector.broadcast %10 : vector<1x32xf32> to vector<4x32xf32>
    %12 = arith.mulf %9, %11 : vector<4x32xf32>
    %c0_15 = arith.constant 0 : index
    %c0_16 = arith.constant 0 : index
    %13 = vector.load %arg4[%c0_15, %c0_16] : memref<8x4xf32, #tpu.memory_space<vmem>>, vector<8x4xf32>
    %c0_17 = arith.constant 0 : index
    %c0_18 = arith.constant 0 : index
    %14 = vector.load %arg5[%c0_17, %c0_18] : memref<8x1xf32, #tpu.memory_space<vmem>>, vector<8x1xf32>
    %c0_19 = arith.constant 0 : index
    %c0_20 = arith.constant 0 : index
    %15 = vector.load %arg6[%c0_19, %c0_20] : memref<4x8xf32, #tpu.memory_space<vmem>>, vector<4x8xf32>
    %c0_21 = arith.constant 0 : index
    %c0_22 = arith.constant 0 : index
    %16 = vector.load %arg7[%c0_21, %c0_22] : memref<4x1xf32, #tpu.memory_space<vmem>>, vector<4x1xf32>
    %c0_23 = arith.constant 0 : index
    %c0_24 = arith.constant 0 : index
    %17 = vector.load %arg8[%c0_23, %c0_24] : memref<4x8xf32, #tpu.memory_space<vmem>>, vector<4x8xf32>
    %c0_25 = arith.constant 0 : index
    %c0_26 = arith.constant 0 : index
    %18 = vector.load %arg9[%c0_25, %c0_26] : memref<4x1xf32, #tpu.memory_space<vmem>>, vector<4x1xf32>
    %cst_27 = arith.constant dense<0.000000e+00> : vector<8x32xf32>
    %19 = tpu.matmul %13, %12, %cst_27 {dimension_numbers = #tpu.dot_dimension_numbers<[1], [0], [0], [1], [0, 0, 1, 1], [], []>} : vector<8x4xf32>, vector<4x32xf32>, vector<8x32xf32> -> vector<8x32xf32>
    %20 = vector.broadcast %14 : vector<8x1xf32> to vector<8x32xf32>
    %21 = arith.addf %19, %20 : vector<8x32xf32>
    %cst_28 = arith.constant 3.000000e+00 : f32
    %22 = vector.broadcast %cst_28 : f32 to vector<8x32xf32>
    %23 = arith.addf %21, %22 : vector<8x32xf32>
    %cst_29 = arith.constant 0.000000e+00 : f32
    %cst_30 = arith.constant 6.000000e+00 : f32
    %24 = vector.broadcast %cst_29 : f32 to vector<8x32xf32>
    %25 = arith.maximumf %24, %23 : vector<8x32xf32>
    %26 = vector.broadcast %cst_30 : f32 to vector<8x32xf32>
    %27 = arith.minimumf %26, %25 : vector<8x32xf32>
    %28 = arith.mulf %21, %27 : vector<8x32xf32>
    %cst_31 = arith.constant 0.166666672 : f32
    %29 = vector.broadcast %cst_31 : f32 to vector<8x32xf32>
    %30 = arith.mulf %28, %29 : vector<8x32xf32>
    %31 = vector.extract_strided_slice %30 {offsets = [0, 0], sizes = [8, 16], strides = [1, 1]} : vector<8x32xf32> to vector<8x16xf32>
    %cst_32 = arith.constant dense<0.000000e+00> : vector<4x16xf32>
    %32 = tpu.matmul %15, %31, %cst_32 {dimension_numbers = #tpu.dot_dimension_numbers<[1], [0], [0], [1], [0, 0, 1, 1], [], []>} : vector<4x8xf32>, vector<8x16xf32>, vector<4x16xf32> -> vector<4x16xf32>
    %33 = vector.broadcast %16 : vector<4x1xf32> to vector<4x16xf32>
    %34 = arith.addf %32, %33 : vector<4x16xf32>
    %cst_33 = arith.constant 0.000000e+00 : f32
    %35 = vector.broadcast %cst_33 : f32 to vector<4x16xf32>
    %36 = arith.subf %35, %34 : vector<4x16xf32>
    %37 = math.exp %36 : vector<4x16xf32>
    %cst_34 = arith.constant 1.000000e+00 : f32
    %38 = vector.broadcast %cst_34 : f32 to vector<4x16xf32>
    %39 = arith.addf %38, %37 : vector<4x16xf32>
    %cst_35 = arith.constant 1.000000e+00 : f32
    %40 = vector.broadcast %cst_35 : f32 to vector<4x16xf32>
    %41 = arith.divf %40, %39 : vector<4x16xf32>
    %42 = vector.extract_strided_slice %30 {offsets = [0, 16], sizes = [8, 16], strides = [1, 1]} : vector<8x32xf32> to vector<8x16xf32>
    %cst_36 = arith.constant dense<0.000000e+00> : vector<4x16xf32>
    %43 = tpu.matmul %17, %42, %cst_36 {dimension_numbers = #tpu.dot_dimension_numbers<[1], [0], [0], [1], [0, 0, 1, 1], [], []>} : vector<4x8xf32>, vector<8x16xf32>, vector<4x16xf32> -> vector<4x16xf32>
    %44 = vector.broadcast %18 : vector<4x1xf32> to vector<4x16xf32>
    %45 = arith.addf %43, %44 : vector<4x16xf32>
    %cst_37 = arith.constant 0.000000e+00 : f32
    %46 = vector.broadcast %cst_37 : f32 to vector<4x16xf32>
    %47 = arith.subf %46, %45 : vector<4x16xf32>
    %48 = math.exp %47 : vector<4x16xf32>
    %cst_38 = arith.constant 1.000000e+00 : f32
    %49 = vector.broadcast %cst_38 : f32 to vector<4x16xf32>
    %50 = arith.addf %49, %48 : vector<4x16xf32>
    %cst_39 = arith.constant 1.000000e+00 : f32
    %51 = vector.broadcast %cst_39 : f32 to vector<4x16xf32>
    %52 = arith.divf %51, %50 : vector<4x16xf32>
    %c0_40 = arith.constant 0 : index
    %c0_41 = arith.constant 0 : index
    %c0_42 = arith.constant 0 : index
    %53 = vector.load %arg10[%c0_40, %c0_41, %c0_42] : memref<1x4x32xf32, #tpu.memory_space<vmem>>, vector<1x4x16xf32>
    %54 = vector.shape_cast %53 : vector<1x4x16xf32> to vector<4x16xf32>
    %55 = vector.shape_cast %41 : vector<4x16xf32> to vector<1x4x16xf32>
    tpu.vector_store %arg10[%c0_40, %c0_41, %c0_42], %55 {strides = array<i32>} : memref<1x4x32xf32, #tpu.memory_space<vmem>>, vector<1x4x16xf32>,
    %c0_43 = arith.constant 0 : index
    %c0_44 = arith.constant 0 : index
    %c16 = arith.constant 16 : index
    %56 = vector.load %arg10[%c0_43, %c0_44, %c16] : memref<1x4x32xf32, #tpu.memory_space<vmem>>, vector<1x4x16xf32>
    %57 = vector.shape_cast %56 : vector<1x4x16xf32> to vector<4x16xf32>
    %58 = vector.shape_cast %52 : vector<4x16xf32> to vector<1x4x16xf32>
    tpu.vector_store %arg10[%c0_43, %c0_44, %c16], %58 {strides = array<i32>} : memref<1x4x32xf32, #tpu.memory_space<vmem>>, vector<1x4x16xf32>,
    return
  }
  func.func @transform_0(%arg0: i32) -> (i32, i32, i32) {
    %c0_i32 = arith.constant 0 : i32
    %c0_i32_0 = arith.constant 0 : i32
    %c0_i32_1 = arith.constant 0 : i32
    return %arg0, %c0_i32, %c0_i32_0 : i32, i32, i32
  }
  func.func @transform_1(%arg0: i32) -> (i32, i32) {
    %c0_i32 = arith.constant 0 : i32
    %c0_i32_0 = arith.constant 0 : i32
    %c0_i32_1 = arith.constant 0 : i32
    return %c0_i32, %c0_i32_0 : i32, i32
  }
  func.func @transform_2(%arg0: i32) -> (i32, i32) {
    %c0_i32 = arith.constant 0 : i32
    %c0_i32_0 = arith.constant 0 : i32
    %c0_i32_1 = arith.constant 0 : i32
    return %c0_i32, %c0_i32_0 : i32, i32
  }
  func.func @transform_3(%arg0: i32) -> (i32, i32) {
    %c0_i32 = arith.constant 0 : i32
    %c0_i32_0 = arith.constant 0 : i32
    %c0_i32_1 = arith.constant 0 : i32
    return %c0_i32, %c0_i32_0 : i32, i32
  }
  func.func @transform_4(%arg0: i32) -> (i32, i32) {
    %c0_i32 = arith.constant 0 : i32
    %c0_i32_0 = arith.constant 0 : i32
    %c0_i32_1 = arith.constant 0 : i32
    return %c0_i32, %c0_i32_0 : i32, i32
  }
  func.func @transform_5(%arg0: i32) -> (i32, i32) {
    %c0_i32 = arith.constant 0 : i32
    %c0_i32_0 = arith.constant 0 : i32
    %c0_i32_1 = arith.constant 0 : i32
    return %c0_i32, %c0_i32_0 : i32, i32
  }
  func.func @transform_6(%arg0: i32) -> (i32, i32) {
    %c0_i32 = arith.constant 0 : i32
    %c0_i32_0 = arith.constant 0 : i32
    %c0_i32_1 = arith.constant 0 : i32
    return %c0_i32, %c0_i32_0 : i32, i32
  }
  func.func @transform_7(%arg0: i32) -> (i32, i32) {
    %c0_i32 = arith.constant 0 : i32
    %c0_i32_0 = arith.constant 0 : i32
    %c0_i32_1 = arith.constant 0 : i32
    return %c0_i32, %c0_i32_0 : i32, i32
  }
  func.func @transform_8(%arg0: i32) -> (i32, i32) {
    %c0_i32 = arith.constant 0 : i32
    %c0_i32_0 = arith.constant 0 : i32
    %c0_i32_1 = arith.constant 0 : i32
    return %c0_i32, %c0_i32_0 : i32, i32
  }
  func.func @transform_9(%arg0: i32) -> (i32, i32, i32) {
    %c0_i32 = arith.constant 0 : i32
    %c0_i32_0 = arith.constant 0 : i32
    %c0_i32_1 = arith.constant 0 : i32
    return %arg0, %c0_i32, %c0_i32_0 : i32, i32, i32
  }
}

</mosaic_0001>

<llo_original>
// kernel: tpu_custom_call.1
$region0: #{tpu_custom_call.1}
  #allocation0 [shape = 'u32[]', space=smem, size = 0x4, offset = 0x4, fixed_abs, tag = 'smem constant byte address 0x4 - core index']
  #allocation1 [shape = 'u32[144,128]{1,0:T(1,128)}', space=vmem, size = 0x12000, scoped, tag = 'internal scratch']
  #allocation2 [shape = 'f32[4,32]{1,0:T(4,128)}', space=vmem, size = 0x800, scoped, tag = 'scratch operand']
  %s0 = inlined_call_operand.vmem [shape: f32[2,4,256], index: 0, kind: input, shape index: {}]
  %s1 = inlined_call_operand.vmem [shape: bf16[256,32], index: 1, kind: input, shape index: {}]
  %s2 = inlined_call_operand.vmem [shape: f32[1,32], index: 2, kind: input, shape index: {}]
  %s3 = inlined_call_operand.vmem [shape: bf16[16,256], index: 3, kind: input, shape index: {}]
  %s4 = inlined_call_operand.vmem [shape: bf16[16,256], index: 4, kind: input, shape index: {}]
  %s5 = inlined_call_operand.vmem [shape: f32[8,4], index: 5, kind: input, shape index: {}]
  %s6 = inlined_call_operand.vmem [shape: f32[8,1], index: 6, kind: input, shape index: {}]
  %s7 = inlined_call_operand.vmem [shape: f32[4,8], index: 7, kind: input, shape index: {}]
  %s8 = inlined_call_operand.vmem [shape: f32[4,1], index: 8, kind: input, shape index: {}]
  %s9 = inlined_call_operand.vmem [shape: f32[4,8], index: 9, kind: input, shape index: {}]
  %s10 = inlined_call_operand.vmem [shape: f32[4,1], index: 10, kind: input, shape index: {}]
  %s11 = inlined_call_operand.hbm [shape: f32[2,4,256], index: 11, kind: output, shape index: {}]
  %s12 = sld [smem:[#allocation0]]
  $region77: #{tpu_custom_call.1} parent=0
    _
  %s14 = ssub.s32 1, %s12
  %s15 = scalar_select 0, %s14, %s12
  $region1: #{tpu_custom_call.1} parent=0
    #allocation3 [shape = 'u8[8192]{0}', space=vmem, size = 0x2000, scoped, tag = 'output window, operand 0']
    #allocation4 [shape = 's32[2]{0}', space=sflag, size = 0x8, scoped, tag = 'scoped memory for tpu_custom_call.1']
    %16 = vsyncpa [#allocation4], 0
    %s17 = scalar_lea.sflag [#allocation4], 1
    %18 = vsyncpa %s17, 0
    loop: start=0, step=1, limit=4
    $region2: #{tpu_custom_call.1} parent=1 // loop_pre_header
      _
    $region3: #{tpu_custom_call.1} parent=1 // loop_header
      %s20 = sphi 0, %s24
      %p21 = scmp.ge.s32.totalorder %s20, 4
      %s30 = sphi 0, %s32
      %s33 = sphi 0, %s30
      %s34 = sphi 0, %s33
      %s50 = sphi 0, %s34
      %s54 = sphi 0, %s54
      %s56 = sphi 0, %s54
      %s57 = sphi 0, %s56
      %s71 = sphi 0, %s57
      %s75 = sphi 0, %s75
      %s77 = sphi 0, %s75
      %s78 = sphi 0, %s77
      %s92 = sphi 0, %s78
      %s96 = sphi 0, %s96
      %s98 = sphi 0, %s96
      %s99 = sphi 0, %s98
      %s113 = sphi 0, %s99
      %s117 = sphi 0, %s117
      %s119 = sphi 0, %s117
      %s120 = sphi 0, %s119
      %s134 = sphi 0, %s120
      %s138 = sphi 0, %s138
      %s140 = sphi 0, %s138
      %s141 = sphi 0, %s140
      %s155 = sphi 0, %s141
      %s159 = sphi 0, %s159
      %s161 = sphi 0, %s159
      %s162 = sphi 0, %s161
      %s176 = sphi 0, %s162
      %s180 = sphi 0, %s180
      %s182 = sphi 0, %s180
      %s183 = sphi 0, %s182
      %s197 = sphi 0, %s183
      %s201 = sphi 0, %s201
      %s203 = sphi 0, %s201
      %s204 = sphi 0, %s203
      %s218 = sphi 0, %s204
      %s222 = sphi 0, %s222
      %s224 = sphi 0, %s222
      %s225 = sphi 0, %s224
      %s239 = sphi 0, %s225
      %s243 = sphi 0, %s243
      %s245 = sphi 0, %s243
      %s246 = sphi 0, %s245
      %s260 = sphi 0, %s246
      %s266 = sphi 0, %s268
      %s269 = sphi 0, %s266
      %s270 = sphi 0, %s269
      %s286 = sphi 0, %s270
    $region4: #{tpu_custom_call.1} parent=1 // loop_header_branch
      %23 = sbr.rel (%p21) target = $region8
    $region5: #{tpu_custom_call.1} parent=1 // loop_body
      %s25 = ssub.s32 %s20, 1
      %s26 = ssub.s32 %s20, 2
      %s27 = sadd.s32 %s20, 1
      %s28 = ssub.s32 %s20, %s27
      %p29 = scmp.eq.s32.totalorder %s28, 0
      %s31 = sadd.s32 %s30, 1
      %s32 = scalar_select %p29, %s30, %s31
      %p35 = pneg %p29
      %p36 = scmp.eq.s32.totalorder %s20, 1
      %p37 = por %p35, %p36
      %p38 = scmp.ne.s32.totalorder %s30, %s33
      %p39 = scmp.eq.s32.totalorder %s20, 0
      %p40 = por %p38, %p39
      %p41 = scmp.ne.s32.totalorder %s30, %s33
      %p42 = scmp.eq.s32.totalorder %s25, 1
      %p43 = por %p41, %p42
      %p44 = scmp.ne.s32.totalorder %s33, %s34
      %p45 = scmp.eq.s32.totalorder %s25, 0
      %p46 = por %p44, %p45
      %p47 = scmp.ne.s32.totalorder %s33, %s34
      %p48 = scmp.eq.s32.totalorder %s26, 1
      %p49 = por %p47, %p48
      %p51 = scmp.ne.s32.totalorder %s34, %s50
      %p52 = scmp.eq.s32.totalorder %s26, 0
      %p53 = por %p51, %p52
      %s55 = sadd.s32 %s54, 1
      %p58 = scmp.eq.s32.totalorder %s20, 1
      %p59 = scmp.ne.s32.totalorder %s54, %s56
      %p60 = scmp.eq.s32.totalorder %s20, 0
      %p61 = por %p59, %p60
      %p62 = scmp.ne.s32.totalorder %s54, %s56
      %p63 = scmp.eq.s32.totalorder %s25, 1
      %p64 = por %p62, %p63
      %p65 = scmp.ne.s32.totalorder %s56, %s57
      %p66 = scmp.eq.s32.totalorder %s25, 0
      %p67 = por %p65, %p66
      %p68 = scmp.ne.s32.totalorder %s56, %s57
      %p69 = scmp.eq.s32.totalorder %s26, 1
      %p70 = por %p68, %p69
      %p72 = scmp.ne.s32.totalorder %s57, %s71
      %p73 = scmp.eq.s32.totalorder %s26, 0
      %p74 = por %p72, %p73
      %s76 = sadd.s32 %s75, 1
      %p79 = scmp.eq.s32.totalorder %s20, 1
      %p80 = scmp.ne.s32.totalorder %s75, %s77
      %p81 = scmp.eq.s32.totalorder %s20, 0
      %p82 = por %p80, %p81
      %p83 = scmp.ne.s32.totalorder %s75, %s77
      %p84 = scmp.eq.s32.totalorder %s25, 1
      %p85 = por %p83, %p84
      %p86 = scmp.ne.s32.totalorder %s77, %s78
      %p87 = scmp.eq.s32.totalorder %s25, 0
      %p88 = por %p86, %p87
      %p89 = scmp.ne.s32.totalorder %s77, %s78
      %p90 = scmp.eq.s32.totalorder %s26, 1
      %p91 = por %p89, %p90
      %p93 = scmp.ne.s32.totalorder %s78, %s92
      %p94 = scmp.eq.s32.totalorder %s26, 0
      %p95 = por %p93, %p94
      %s97 = sadd.s32 %s96, 1
      %p100 = scmp.eq.s32.totalorder %s20, 1
      %p101 = scmp.ne.s32.totalorder %s96, %s98
      %p102 = scmp.eq.s32.totalorder %s20, 0
      %p103 = por %p101, %p102
      %p104 = scmp.ne.s32.totalorder %s96, %s98
      %p105 = scmp.eq.s32.totalorder %s25, 1
      %p106 = por %p104, %p105
      %p107 = scmp.ne.s32.totalorder %s98, %s99
      %p108 = scmp.eq.s32.totalorder %s25, 0
      %p109 = por %p107, %p108
      %p110 = scmp.ne.s32.totalorder %s98, %s99
      %p111 = scmp.eq.s32.totalorder %s26, 1
      %p112 = por %p110, %p111
      %p114 = scmp.ne.s32.totalorder %s99, %s113
      %p115 = scmp.eq.s32.totalorder %s26, 0
      %p116 = por %p114, %p115
      %s118 = sadd.s32 %s117, 1
      %p121 = scmp.eq.s32.totalorder %s20, 1
      %p122 = scmp.ne.s32.totalorder %s117, %s119
      %p123 = scmp.eq.s32.totalorder %s20, 0
      %p124 = por %p122, %p123
      %p125 = scmp.ne.s32.totalorder %s117, %s119
      %p126 = scmp.eq.s32.totalorder %s25, 1
      %p127 = por %p125, %p126
      %p128 = scmp.ne.s32.totalorder %s119, %s120
      %p129 = scmp.eq.s32.totalorder %s25, 0
      %p130 = por %p128, %p129
      %p131 = scmp.ne.s32.totalorder %s119, %s120
      %p132 = scmp.eq.s32.totalorder %s26, 1
      %p133 = por %p131, %p132
      %p135 = scmp.ne.s32.totalorder %s120, %s134
      %p136 = scmp.eq.s32.totalorder %s26, 0
      %p137 = por %p135, %p136
      %s139 = sadd.s32 %s138, 1
      %p142 = scmp.eq.s32.totalorder %s20, 1
      %p143 = scmp.ne.s32.totalorder %s138, %s140
      %p144 = scmp.eq.s32.totalorder %s20, 0
      %p145 = por %p143, %p144
      %p146 = scmp.ne.s32.totalorder %s138, %s140
      %p147 = scmp.eq.s32.totalorder %s25, 1
      %p148 = por %p146, %p147
      %p149 = scmp.ne.s32.totalorder %s140, %s141
      %p150 = scmp.eq.s32.totalorder %s25, 0
      %p151 = por %p149, %p150
      %p152 = scmp.ne.s32.totalorder %s140, %s141
      %p153 = scmp.eq.s32.totalorder %s26, 1
      %p154 = por %p152, %p153
      %p156 = scmp.ne.s32.totalorder %s141, %s155
      %p157 = scmp.eq.s32.totalorder %s26, 0
      %p158 = por %p156, %p157
      %s160 = sadd.s32 %s159, 1
      %p163 = scmp.eq.s32.totalorder %s20, 1
      %p164 = scmp.ne.s32.totalorder %s159, %s161
      %p165 = scmp.eq.s32.totalorder %s20, 0
      %p166 = por %p164, %p165
      %p167 = scmp.ne.s32.totalorder %s159, %s161
      %p168 = scmp.eq.s32.totalorder %s25, 1
      %p169 = por %p167, %p168
      %p170 = scmp.ne.s32.totalorder %s161, %s162
      %p171 = scmp.eq.s32.totalorder %s25, 0
      %p172 = por %p170, %p171
      %p173 = scmp.ne.s32.totalorder %s161, %s162
      %p174 = scmp.eq.s32.totalorder %s26, 1
      %p175 = por %p173, %p174
      %p177 = scmp.ne.s32.totalorder %s162, %s176
      %p178 = scmp.eq.s32.totalorder %s26, 0
      %p179 = por %p177, %p178
      %s181 = sadd.s32 %s180, 1
      %p184 = scmp.eq.s32.totalorder %s20, 1
      %p185 = scmp.ne.s32.totalorder %s180, %s182
      %p186 = scmp.eq.s32.totalorder %s20, 0
      %p187 = por %p185, %p186
      %p188 = scmp.ne.s32.totalorder %s180, %s182
      %p189 = scmp.eq.s32.totalorder %s25, 1
      %p190 = por %p188, %p189
      %p191 = scmp.ne.s32.totalorder %s182, %s183
      %p192 = scmp.eq.s32.totalorder %s25, 0
      %p193 = por %p191, %p192
      %p194 = scmp.ne.s32.totalorder %s182, %s183
      %p195 = scmp.eq.s32.totalorder %s26, 1
      %p196 = por %p194, %p195
      %p198 = scmp.ne.s32.totalorder %s183, %s197
      %p199 = scmp.eq.s32.totalorder %s26, 0
      %p200 = por %p198, %p199
      %s202 = sadd.s32 %s201, 1
      %p205 = scmp.eq.s32.totalorder %s20, 1
      %p206 = scmp.ne.s32.totalorder %s201, %s203
      %p207 = scmp.eq.s32.totalorder %s20, 0
      %p208 = por %p206, %p207
      %p209 = scmp.ne.s32.totalorder %s201, %s203
      %p210 = scmp.eq.s32.totalorder %s25, 1
      %p211 = por %p209, %p210
      %p212 = scmp.ne.s32.totalorder %s203, %s204
      %p213 = scmp.eq.s32.totalorder %s25, 0
      %p214 = por %p212, %p213
      %p215 = scmp.ne.s32.totalorder %s203, %s204
      %p216 = scmp.eq.s32.totalorder %s26, 1
      %p217 = por %p215, %p216
      %p219 = scmp.ne.s32.totalorder %s204, %s218
      %p220 = scmp.eq.s32.totalorder %s26, 0
      %p221 = por %p219, %p220
      %s223 = sadd.s32 %s222, 1
      %p226 = scmp.eq.s32.totalorder %s20, 1
      %p227 = scmp.ne.s32.totalorder %s222, %s224
      %p228 = scmp.eq.s32.totalorder %s20, 0
      %p229 = por %p227, %p228
      %p230 = scmp.ne.s32.totalorder %s222, %s224
      %p231 = scmp.eq.s32.totalorder %s25, 1
      %p232 = por %p230, %p231
      %p233 = scmp.ne.s32.totalorder %s224, %s225
      %p234 = scmp.eq.s32.totalorder %s25, 0
      %p235 = por %p233, %p234
      %p236 = scmp.ne.s32.totalorder %s224, %s225
      %p237 = scmp.eq.s32.totalorder %s26, 1
      %p238 = por %p236, %p237
      %p240 = scmp.ne.s32.totalorder %s225, %s239
      %p241 = scmp.eq.s32.totalorder %s26, 0
      %p242 = por %p240, %p241
      %s244 = sadd.s32 %s243, 1
      %p247 = scmp.eq.s32.totalorder %s20, 1
      %p248 = scmp.ne.s32.totalorder %s243, %s245
      %p249 = scmp.eq.s32.totalorder %s20, 0
      %p250 = por %p248, %p249
      %p251 = scmp.ne.s32.totalorder %s243, %s245
      %p252 = scmp.eq.s32.totalorder %s25, 1
      %p253 = por %p251, %p252
      %p254 = scmp.ne.s32.totalorder %s245, %s246
      %p255 = scmp.eq.s32.totalorder %s25, 0
      %p256 = por %p254, %p255
      %p257 = scmp.ne.s32.totalorder %s245, %s246
      %p258 = scmp.eq.s32.totalorder %s26, 1
      %p259 = por %p257, %p258
      %p261 = scmp.ne.s32.totalorder %s246, %s260
      %p262 = scmp.eq.s32.totalorder %s26, 0
      %p263 = por %p261, %p262
      %s264 = ssub.s32 %s20, %s27
      %p265 = scmp.eq.s32.totalorder %s264, 0
      %s267 = sadd.s32 %s266, 1
      %s268 = scalar_select %p265, %s266, %s267
      %p271 = pneg %p265
      %p272 = scmp.eq.s32.totalorder %s20, 1
      %p273 = por %p271, %p272
      %p274 = scmp.ne.s32.totalorder %s266, %s269
      %p275 = scmp.eq.s32.totalorder %s20, 0
      %p276 = por %p274, %p275
      %p277 = scmp.ne.s32.totalorder %s266, %s269
      %p278 = scmp.eq.s32.totalorder %s25, 1
      %p279 = por %p277, %p278
      %p280 = scmp.ne.s32.totalorder %s269, %s270
      %p281 = scmp.eq.s32.totalorder %s25, 0
      %p282 = por %p280, %p281
      %p283 = scmp.ne.s32.totalorder %s269, %s270
      %p284 = scmp.eq.s32.totalorder %s26, 1
      %p285 = por %p283, %p284
      %p287 = scmp.ne.s32.totalorder %s270, %s286
      %p288 = scmp.eq.s32.totalorder %s26, 0
      %p289 = por %p287, %p288
      %p290 = scmp.le.s32.totalorder 1, %s20
      %p291 = scmp.lt.s32.totalorder %s20, 3
      %p292 = pnand %p290, %p291
      %p293 = pneg %p292
      // Predicated region
      $region9: #{tpu_custom_call.1} parent=5 // pred_check
        _
      $region10: #{tpu_custom_call.1} parent=5 // pred_check_branch
        %295 = sbr.rel (%p292) target = $region12
      $region11: #{tpu_custom_call.1} parent=5 // pred_region
        %s296 = ssub.s32 %s20, 1
        // Predicated region
        $region13: #{tpu_custom_call.1} parent=11 // pred_check
          %p297 = pneg %p67
        $region14: #{tpu_custom_call.1} parent=11 // pred_check_branch
          %299 = sbr.rel (%p297) target = $region16
        $region15: #{tpu_custom_call.1} parent=11 // pred_region
          _
        $region16: #{tpu_custom_call.1} parent=11 // pred_fallthru
          _
        // Predicated region
        $region17: #{tpu_custom_call.1} parent=11 // pred_check
          %p300 = pneg %p88
        $region18: #{tpu_custom_call.1} parent=11 // pred_check_branch
          %302 = sbr.rel (%p300) target = $region20
        $region19: #{tpu_custom_call.1} parent=11 // pred_region
          _
        $region20: #{tpu_custom_call.1} parent=11 // pred_fallthru
          _
        // Predicated region
        $region21: #{tpu_custom_call.1} parent=11 // pred_check
          %p303 = pneg %p109
        $region22: #{tpu_custom_call.1} parent=11 // pred_check_branch
          %305 = sbr.rel (%p303) target = $region24
        $region23: #{tpu_custom_call.1} parent=11 // pred_region
          _
        $region24: #{tpu_custom_call.1} parent=11 // pred_fallthru
          _
        // Predicated region
        $region25: #{tpu_custom_call.1} parent=11 // pred_check
          %p306 = pneg %p130
        $region26: #{tpu_custom_call.1} parent=11 // pred_check_branch
          %308 = sbr.rel (%p306) target = $region28
        $region27: #{tpu_custom_call.1} parent=11 // pred_region
          _
        $region28: #{tpu_custom_call.1} parent=11 // pred_fallthru
          _
        // Predicated region
        $region29: #{tpu_custom_call.1} parent=11 // pred_check
          %p309 = pneg %p151
        $region30: #{tpu_custom_call.1} parent=11 // pred_check_branch
          %311 = sbr.rel (%p309) target = $region32
        $region31: #{tpu_custom_call.1} parent=11 // pred_region
          _
        $region32: #{tpu_custom_call.1} parent=11 // pred_fallthru
          _
        // Predicated region
        $region33: #{tpu_custom_call.1} parent=11 // pred_check
          %p312 = pneg %p172
        $region34: #{tpu_custom_call.1} parent=11 // pred_check_branch
          %314 = sbr.rel (%p312) target = $region36
        $region35: #{tpu_custom_call.1} parent=11 // pred_region
          _
        $region36: #{tpu_custom_call.1} parent=11 // pred_fallthru
          _
        // Predicated region
        $region37: #{tpu_custom_call.1} parent=11 // pred_check
          %p315 = pneg %p193
        $region38: #{tpu_custom_call.1} parent=11 // pred_check_branch
          %317 = sbr.rel (%p315) target = $region40
        $region39: #{tpu_custom_call.1} parent=11 // pred_region
          _
        $region40: #{tpu_custom_call.1} parent=11 // pred_fallthru
          _
        // Predicated region
        $region41: #{tpu_custom_call.1} parent=11 // pred_check
          %p318 = pneg %p214
        $region42: #{tpu_custom_call.1} parent=11 // pred_check_branch
          %320 = sbr.rel (%p318) target = $region44
        $region43: #{tpu_custom_call.1} parent=11 // pred_region
          _
        $region44: #{tpu_custom_call.1} parent=11 // pred_fallthru
          _
        // Predicated region
        $region45: #{tpu_custom_call.1} parent=11 // pred_check
          %p321 = pneg %p235
        $region46: #{tpu_custom_call.1} parent=11 // pred_check_branch
          %323 = sbr.rel (%p321) target = $region48
        $region47: #{tpu_custom_call.1} parent=11 // pred_region
          _
        $region48: #{tpu_custom_call.1} parent=11 // pred_fallthru
          _
        // Predicated region
        $region49: #{tpu_custom_call.1} parent=11 // pred_check
          %p324 = pneg %p256
        $region50: #{tpu_custom_call.1} parent=11 // pred_check_branch
          %326 = sbr.rel (%p324) target = $region52
        $region51: #{tpu_custom_call.1} parent=11 // pred_region
          _
        $region52: #{tpu_custom_call.1} parent=11 // pred_fallthru
          _
      $region12: #{tpu_custom_call.1} parent=5 // pred_fallthru
        _
      %p327 = scmp.lt.s32.totalorder %s20, 2
      // Predicated region
      $region53: #{tpu_custom_call.1} parent=5 // pred_check
        %p328 = pneg %p327
      $region54: #{tpu_custom_call.1} parent=5 // pred_check_branch
        %330 = sbr.rel (%p328) target = $region56
      $region55: #{tpu_custom_call.1} parent=5 // pred_region
        // Predicated region
        $region57: #{tpu_custom_call.1} parent=55 // pred_check
          %p331 = pneg %p40
        $region58: #{tpu_custom_call.1} parent=55 // pred_check_branch
          %333 = sbr.rel (%p331) target = $region60
        $region59: #{tpu_custom_call.1} parent=55 // pred_region
          %p334 = scmp.lt.s32.totalorder %s20, 1
          %s335 = scalar_select %p334, %s20, 1
          %s336 = smul.addr %s335, 2
          %s337 = smul.addr %s336, 4
          %s338 = scalar_lea.vmem %s0, %s337
        $region60: #{tpu_custom_call.1} parent=55 // pred_fallthru
          _
      $region56: #{tpu_custom_call.1} parent=5 // pred_fallthru
        _
      %p339 = scmp.le.s32.totalorder 1, %s20
      %p340 = scmp.lt.s32.totalorder %s20, 3
      %p341 = pnand %p339, %p340
      %p342 = pneg %p341
      // Predicated region
      $region61: #{tpu_custom_call.1} parent=5 // pred_check
        _
      $region62: #{tpu_custom_call.1} parent=5 // pred_check_branch
        %344 = sbr.rel (%p341) target = $region64
      $region63: #{tpu_custom_call.1} parent=5 // pred_region
        %s345 = ssub.s32 %s20, 1
        %p346 = scmp.lt.s32.totalorder %s25, 1
        %s347 = scalar_select %p346, %s25, 1
        %s348 = smul.addr %s347, 2
        %s349 = smul.addr %s348, 4
        %s350 = scalar_lea.vmem %s0, %s349
        %p351 = pneg %p46
        %p352 = pneg %p43
        %p353 = pneg %p67
        %p354 = pneg %p64
        %p355 = pneg %p88
        %p356 = pneg %p85
        %p357 = pneg %p109
        %p358 = pneg %p106
        %p359 = pneg %p130
        %p360 = pneg %p127
        %p361 = pneg %p151
        %p362 = pneg %p148
        %p363 = pneg %p172
        %p364 = pneg %p169
        %p365 = pneg %p193
        %p366 = pneg %p190
        %p367 = pneg %p214
        %p368 = pneg %p211
        %p369 = pneg %p235
        %p370 = pneg %p232
        %p371 = pneg %p256
        %p372 = pneg %p253
        %p373 = pneg %p282
        %p374 = pneg %p279
        %s375 = sand.u32 %s269, 1
        %s376 = scalar_lea.sflag [#allocation4], %s375
        %s377 = sand.u32 %s269, 1
        %s378 = smul.addr %s377, 8
        %s379 = scalar_lea.vmem [#allocation3], %s378
        %p380 = scmp.lt.s32.totalorder %s25, 1
        %s381 = scalar_select %p380, %s25, 1
        %s382 = smul.addr %s381, 2
        %s383 = smul.addr %s382, 4
        %s384 = scalar_lea.vmem %s0, %s383
        %vm386 = vcmask 257024
        %387 = vst.msk [vmem:[#allocation2] sm:$0xf] %vm386, 0.0
        %v388 = vld [vmem:[%s384] sm:$0xff]
        %v389 = vld [vmem:[%s1] sm:$0xf]
        %v390 = vld [vmem:[%s1 + $0x4] sm:$0xf]
        %v391 = vld [vmem:[%s1 + $0x8] sm:$0xf]
        %v392 = vld [vmem:[%s1 + $0xc] sm:$0xf]
        %v393 = vld [vmem:[%s1 + $0x10] sm:$0xf]
        %v394 = vld [vmem:[%s1 + $0x14] sm:$0xf]
        %v395 = vld [vmem:[%s1 + $0x18] sm:$0xf]
        %v396 = vld [vmem:[%s1 + $0x1c] sm:$0xf]
        %v397 = vld [vmem:[%s1 + $0x20] sm:$0xf]
        %v398 = vld [vmem:[%s1 + $0x24] sm:$0xf]
        %v399 = vld [vmem:[%s1 + $0x28] sm:$0xf]
        %v400 = vld [vmem:[%s1 + $0x2c] sm:$0xf]
        %v401 = vld [vmem:[%s1 + $0x30] sm:$0xf]
        %v402 = vld [vmem:[%s1 + $0x34] sm:$0xf]
        %v403 = vld [vmem:[%s1 + $0x38] sm:$0xf]
        %v404 = vld [vmem:[%s1 + $0x3c] sm:$0xf]
        %v405 = vld [vmem:[%s1 + $0x40] sm:$0xf]
        %v406 = vld [vmem:[%s1 + $0x44] sm:$0xf]
        %v407 = vld [vmem:[%s1 + $0x48] sm:$0xf]
        %v408 = vld [vmem:[%s1 + $0x4c] sm:$0xf]
        %v409 = vld [vmem:[%s1 + $0x50] sm:$0xf]
        %v410 = vld [vmem:[%s1 + $0x54] sm:$0xf]
        %v411 = vld [vmem:[%s1 + $0x58] sm:$0xf]
        %v412 = vld [vmem:[%s1 + $0x5c] sm:$0xf]
        %v413 = vld [vmem:[%s1 + $0x60] sm:$0xf]
        %v414 = vld [vmem:[%s1 + $0x64] sm:$0xf]
        %v415 = vld [vmem:[%s1 + $0x68] sm:$0xf]
        %v416 = vld [vmem:[%s1 + $0x6c] sm:$0xf]
        %v417 = vld [vmem:[%s1 + $0x70] sm:$0xf]
        %v418 = vld [vmem:[%s1 + $0x74] sm:$0xf]
        %v419 = vld [vmem:[%s1 + $0x78] sm:$0xf]
        %v420 = vld [vmem:[%s1 + $0x7c] sm:$0xf]
        %v421 = vld [vmem:[#allocation2] sm:$0xf]
        %v423 = vcombine.high %v388, %v388
        %v457 = vunpack.c.l.b16 %v389
        %v458 = vunpack.c.l.b16 %v390
        %v459 = vunpack.c.l.b16 %v391
        %v460 = vunpack.c.l.b16 %v392
        %v461 = vunpack.c.l.b16 %v393
        %v462 = vunpack.c.l.b16 %v394
        %v463 = vunpack.c.l.b16 %v395
        %v464 = vunpack.c.l.b16 %v396
        %v465 = vunpack.c.l.b16 %v397
        %v466 = vunpack.c.l.b16 %v398
        %v467 = vunpack.c.l.b16 %v399
        %v468 = vunpack.c.l.b16 %v400
        %v469 = vunpack.c.l.b16 %v401
        %v470 = vunpack.c.l.b16 %v402
        %v471 = vunpack.c.l.b16 %v403
        %v472 = vunpack.c.l.b16 %v404
        %v473 = vunpack.c.l.b16 %v405
        %v474 = vunpack.c.l.b16 %v406
        %v475 = vunpack.c.l.b16 %v407
        %v476 = vunpack.c.l.b16 %v408
        %v477 = vunpack.c.l.b16 %v409
        %v478 = vunpack.c.l.b16 %v410
        %v479 = vunpack.c.l.b16 %v411
        %v480 = vunpack.c.l.b16 %v412
        %v481 = vunpack.c.l.b16 %v413
        %v482 = vunpack.c.l.b16 %v414
        %v483 = vunpack.c.l.b16 %v415
        %v484 = vunpack.c.l.b16 %v416
        %v485 = vunpack.c.l.b16 %v417
        %v486 = vunpack.c.l.b16 %v418
        %v487 = vunpack.c.l.b16 %v419
        %v488 = vunpack.c.l.b16 %v420
        %v489 = vpack.c.b16 %v458, %v457
        %v490 = vpack.c.b16 %v460, %v459
        %v491 = vpack.c.b16 %v462, %v461
        %v492 = vpack.c.b16 %v464, %v463
        %v493 = vpack.c.b16 %v466, %v465
        %v494 = vpack.c.b16 %v468, %v467
        %v495 = vpack.c.b16 %v470, %v469
        %v496 = vpack.c.b16 %v472, %v471
        %v497 = vpack.c.b16 %v474, %v473
        %v498 = vpack.c.b16 %v476, %v475
        %v499 = vpack.c.b16 %v478, %v477
        %v500 = vpack.c.b16 %v480, %v479
        %v501 = vpack.c.b16 %v482, %v481
        %v502 = vpack.c.b16 %v484, %v483
        %v503 = vpack.c.b16 %v486, %v485
        %v504 = vpack.c.b16 %v488, %v487
        %521 = vmatprep.subr.bf16.mxu0 0
        %522 = vmatpush1.bf16.msra.mxu0 %v489
        %523 = vmatprep.subr.bf16.mxu0 0
        %524 = vmatpush1.bf16.msra.mxu0 %v490
        %525 = vmatprep.subr.bf16.mxu0 0
        %526 = vmatpush1.bf16.msra.mxu0 %v491
        %527 = vmatprep.subr.bf16.mxu0 0
        %528 = vmatpush1.bf16.msra.mxu0 %v492
        %529 = vmatprep.subr.bf16.mxu0 0
        %530 = vmatpush1.bf16.msra.mxu0 %v493
        %531 = vmatprep.subr.bf16.mxu0 0
        %532 = vmatpush1.bf16.msra.mxu0 %v494
        %533 = vmatprep.subr.bf16.mxu0 0
        %534 = vmatpush1.bf16.msra.mxu0 %v495
        %535 = vmatprep.subr.bf16.mxu0 0
        %536 = vmatpush1.bf16.msra.mxu0 %v496
        %537 = vmatprep.subr.bf16.mxu0 0
        %538 = vmatpush1.bf16.msra.mxu0 %v497
        %539 = vmatprep.subr.bf16.mxu0 0
        %540 = vmatpush1.bf16.msra.mxu0 %v498
        %541 = vmatprep.subr.bf16.mxu0 0
        %542 = vmatpush1.bf16.msra.mxu0 %v499
        %543 = vmatprep.subr.bf16.mxu0 0
        %544 = vmatpush1.bf16.msra.mxu0 %v500
        %545 = vmatprep.subr.bf16.mxu0 0
        %546 = vmatpush1.bf16.msra.mxu0 %v501
        %547 = vmatprep.subr.bf16.mxu0 0
        %548 = vmatpush1.bf16.msra.mxu0 %v502
        %549 = vmatprep.subr.bf16.mxu0 0
        %550 = vmatpush1.bf16.msra.mxu0 %v503
        %551 = vmatprep.subr.bf16.mxu0 0
        %552 = vmatpush1.bf16.msra.mxu0 %v504
        %553 = vmatprep.mubr.f32.mxu0 %v423
        %554 = vmatmul.mubr.f32.gmra.mrb[0].mxu0 %v388
        %v555 = vpop.f32.mrb[0].mxu0
        %v556 = vadd.f32 0.0, %v555
        %v557 = vpop.f32.mrb[0].mxu0
        %558 = vdwg.mxu0
        %v559 = vadd.f32 %v421, %v556
        %560 = vst.msk [vmem:[#allocation2] sm:$0xf] %vm386, %v559
        %v561 = vld [vmem:[#allocation2] sm:$0xf]
        %v562 = vld [vmem:[%s2] sm:$0x1]
        %v564 = vlaneseq
        %v565 = vshrl.u32 %v564, 7
        %v566 = vsub.s32 0, %v565
        %v567 = vrot.slane %v562, %v566
        %v569 = vmul.f32 %v561, %v567
        %v570 = vld [vmem:[%s5] sm:$0xff]
        %v571 = vld [vmem:[%s6] sm:$0xff]
        %v572 = vld [vmem:[%s7] sm:$0xf]
        %v573 = vld [vmem:[%s8] sm:$0xf]
        %v574 = vld [vmem:[%s9] sm:$0xf]
        %v575 = vld [vmem:[%s10] sm:$0xf]
        %577 = vset.pattern.permute.xlu0 0
        %578 = vperm.xlu0 %577, %v571
        %v579 = vpop.permute.xlu0 %578
        %vm581 = vcmask 31744
        %v583 = vsel %vm581, %v570, 0
        %vm585 = vcmask 1043456
        %v587 = vsel %vm585, %v569, 0
        %589 = vmatprep.subr.mxu0 0.0
        %590 = vmatpush1.msra.mxu0 %v587
        %591 = vmatprep.subr.mxu0 0.0
        %592 = vmatpush1.msra.mxu0 0.0
        %593 = vmatprep.subr.mxu0 0.0
        %594 = vmatpush1.msra.mxu0 0.0
        %595 = vmatprep.subr.mxu0 0.0
        %596 = vmatpush1.msra.mxu0 0.0
        %597 = vmatprep.subr.mxu0 0.0
        %598 = vmatpush1.msra.mxu0 0.0
        %599 = vmatprep.subr.mxu0 0.0
        %600 = vmatpush1.msra.mxu0 0.0
        %601 = vmatprep.subr.mxu0 0.0
        %602 = vmatpush1.msra.mxu0 0.0
        %603 = vmatprep.subr.mxu0 0.0
        %604 = vmatpush1.msra.mxu0 0.0
        %605 = vmatprep.subr.mxu0 0.0
        %606 = vmatpush1.msra.mxu0 0.0
        %607 = vmatprep.subr.mxu0 0.0
        %608 = vmatpush1.msra.mxu0 0.0
        %609 = vmatprep.subr.mxu0 0.0
        %610 = vmatpush1.msra.mxu0 0.0
        %611 = vmatprep.subr.mxu0 0.0
        %612 = vmatpush1.msra.mxu0 0.0
        %613 = vmatprep.subr.mxu0 0.0
        %614 = vmatpush1.msra.mxu0 0.0
        %615 = vmatprep.subr.mxu0 0.0
        %616 = vmatpush1.msra.mxu0 0.0
        %617 = vmatprep.subr.mxu0 0.0
        %618 = vmatpush1.msra.mxu0 0.0
        %619 = vmatprep.subr.mxu0 0.0
        %620 = vmatpush1.msra.mxu0 0.0
        %621 = vmatprep.subr.mxu0 0.0
        %622 = vmatpush1.msra.mxu0 0.0
        %623 = vmatprep.subr.mxu0 0.0
        %624 = vmatpush1.msra.mxu0 0.0
        %625 = vmatprep.subr.mxu0 0.0
        %626 = vmatpush1.msra.mxu0 0.0
        %627 = vmatprep.subr.mxu0 0.0
        %628 = vmatpush1.msra.mxu0 0.0
        %629 = vmatprep.subr.mxu0 0.0
        %630 = vmatpush1.msra.mxu0 0.0
        %631 = vmatprep.subr.mxu0 0.0
        %632 = vmatpush1.msra.mxu0 0.0
        %633 = vmatprep.subr.mxu0 0.0
        %634 = vmatpush1.msra.mxu0 0.0
        %635 = vmatprep.subr.mxu0 0.0
        %636 = vmatpush1.msra.mxu0 0.0
        %637 = vmatprep.subr.mxu0 0.0
        %638 = vmatpush1.msra.mxu0 0.0
        %639 = vmatprep.subr.mxu0 0.0
        %640 = vmatpush1.msra.mxu0 0.0
        %641 = vmatprep.subr.mxu0 0.0
        %642 = vmatpush1.msra.mxu0 0.0
        %643 = vmatprep.subr.mxu0 0.0
        %644 = vmatpush1.msra.mxu0 0.0
        %645 = vmatprep.subr.mxu0 0.0
        %646 = vmatpush1.msra.mxu0 0.0
        %647 = vmatprep.subr.mxu0 0.0
        %648 = vmatpush1.msra.mxu0 0.0
        %649 = vmatprep.subr.mxu0 0.0
        %650 = vmatpush1.msra.mxu0 0.0
        %651 = vmatprep.subr.mxu0 0.0
        %652 = vmatpush1.msra.mxu0 0.0
        %653 = vmatprep.mubr.f32.mxu0 0.0
        %654 = vmatmul.mubr.f32.gmra.mrb[0].mxu0 %v583
        %v655 = vpop.f32.mrb[0].mxu0
        %v656 = vadd.f32 %v579, %v655
        %v657 = vpop.f32.mrb[0].mxu0
        %658 = vdwg.mxu0
        %v659 = vadd.f32 %v656, 3.0
        %v660 = vmax.f32 %v659, 0.0
        %v661 = vmin.f32 %v660, 6.0
        %v662 = vmul.f32 %v656, %v661
        %v663 = vmul.f32 %v662, 0.16666667
        %665 = vset.pattern.permute.xlu0 0
        %666 = vperm.xlu0 %665, %v573
        %v667 = vpop.permute.xlu0 %666
        %vm669 = vcmask 64512
        %v671 = vsel %vm669, %v572, 0
        %673 = vmatprep.subr.mxu0 0.0
        %674 = vmatpush1.msra.mxu0 %v663
        %675 = vmatprep.subr.mxu0 0.0
        %676 = vmatpush1.msra.mxu0 0.0
        %677 = vmatprep.subr.mxu0 0.0
        %678 = vmatpush1.msra.mxu0 0.0
        %679 = vmatprep.subr.mxu0 0.0
        %680 = vmatpush1.msra.mxu0 0.0
        %681 = vmatprep.subr.mxu0 0.0
        %682 = vmatpush1.msra.mxu0 0.0
        %683 = vmatprep.subr.mxu0 0.0
        %684 = vmatpush1.msra.mxu0 0.0
        %685 = vmatprep.subr.mxu0 0.0
        %686 = vmatpush1.msra.mxu0 0.0
        %687 = vmatprep.subr.mxu0 0.0
        %688 = vmatpush1.msra.mxu0 0.0
        %689 = vmatprep.subr.mxu0 0.0
        %690 = vmatpush1.msra.mxu0 0.0
        %691 = vmatprep.subr.mxu0 0.0
        %692 = vmatpush1.msra.mxu0 0.0
        %693 = vmatprep.subr.mxu0 0.0
        %694 = vmatpush1.msra.mxu0 0.0
        %695 = vmatprep.subr.mxu0 0.0
        %696 = vmatpush1.msra.mxu0 0.0
        %697 = vmatprep.subr.mxu0 0.0
        %698 = vmatpush1.msra.mxu0 0.0
        %699 = vmatprep.subr.mxu0 0.0
        %700 = vmatpush1.msra.mxu0 0.0
        %701 = vmatprep.subr.mxu0 0.0
        %702 = vmatpush1.msra.mxu0 0.0
        %703 = vmatprep.subr.mxu0 0.0
        %704 = vmatpush1.msra.mxu0 0.0
        %705 = vmatprep.subr.mxu0 0.0
        %706 = vmatpush1.msra.mxu0 0.0
        %707 = vmatprep.subr.mxu0 0.0
        %708 = vmatpush1.msra.mxu0 0.0
        %709 = vmatprep.subr.mxu0 0.0
        %710 = vmatpush1.msra.mxu0 0.0
        %711 = vmatprep.subr.mxu0 0.0
        %712 = vmatpush1.msra.mxu0 0.0
        %713 = vmatprep.subr.mxu0 0.0
        %714 = vmatpush1.msra.mxu0 0.0
        %715 = vmatprep.subr.mxu0 0.0
        %716 = vmatpush1.msra.mxu0 0.0
        %717 = vmatprep.subr.mxu0 0.0
        %718 = vmatpush1.msra.mxu0 0.0
        %719 = vmatprep.subr.mxu0 0.0
        %720 = vmatpush1.msra.mxu0 0.0
        %721 = vmatprep.subr.mxu0 0.0
        %722 = vmatpush1.msra.mxu0 0.0
        %723 = vmatprep.subr.mxu0 0.0
        %724 = vmatpush1.msra.mxu0 0.0
        %725 = vmatprep.subr.mxu0 0.0
        %726 = vmatpush1.msra.mxu0 0.0
        %727 = vmatprep.subr.mxu0 0.0
        %728 = vmatpush1.msra.mxu0 0.0
        %729 = vmatprep.subr.mxu0 0.0
        %730 = vmatpush1.msra.mxu0 0.0
        %731 = vmatprep.subr.mxu0 0.0
        %732 = vmatpush1.msra.mxu0 0.0
        %733 = vmatprep.subr.mxu0 0.0
        %734 = vmatpush1.msra.mxu0 0.0
        %735 = vmatprep.subr.mxu0 0.0
        %736 = vmatpush1.msra.mxu0 0.0
        %737 = vmatprep.mubr.f32.mxu0 0.0
        %738 = vmatmul.mubr.f32.gmra.mrb[0].mxu0 %v671
        %v739 = vpop.f32.mrb[0].mxu0
        %v740 = vadd.f32 %v667, %v739
        %v741 = vpop.f32.mrb[0].mxu0
        %742 = vdwg.mxu0
        %v743 = vsub.f32 0.0, %v740
        %v744 = vmul.f32 %v743, 1.442695
        %v745 = vpow.pop %v744
        %v746 = vadd.f32 %v745, 1.0
        %v747 = vrcp.pop %v746
        %v748 = vmul.f32 1.0, %v747
        %750 = vset.pattern.permute.xlu0 0
        %751 = vperm.xlu0 %750, %v575
        %v752 = vpop.permute.xlu0 %751
        %755 = vrot.lane.b32.xlu0 %v663, 112
        %v756 = vpop.permute.xlu0 %755
        %v759 = vsel %vm669, %v574, 0
        %761 = vmatprep.subr.mxu0 0.0
        %762 = vmatpush1.msra.mxu0 %v756
        %763 = vmatprep.subr.mxu0 0.0
        %764 = vmatpush1.msra.mxu0 0.0
        %765 = vmatprep.subr.mxu0 0.0
        %766 = vmatpush1.msra.mxu0 0.0
        %767 = vmatprep.subr.mxu0 0.0
        %768 = vmatpush1.msra.mxu0 0.0
        %769 = vmatprep.subr.mxu0 0.0
        %770 = vmatpush1.msra.mxu0 0.0
        %771 = vmatprep.subr.mxu0 0.0
        %772 = vmatpush1.msra.mxu0 0.0
        %773 = vmatprep.subr.mxu0 0.0
        %774 = vmatpush1.msra.mxu0 0.0
        %775 = vmatprep.subr.mxu0 0.0
        %776 = vmatpush1.msra.mxu0 0.0
        %777 = vmatprep.subr.mxu0 0.0
        %778 = vmatpush1.msra.mxu0 0.0
        %779 = vmatprep.subr.mxu0 0.0
        %780 = vmatpush1.msra.mxu0 0.0
        %781 = vmatprep.subr.mxu0 0.0
        %782 = vmatpush1.msra.mxu0 0.0
        %783 = vmatprep.subr.mxu0 0.0
        %784 = vmatpush1.msra.mxu0 0.0
        %785 = vmatprep.subr.mxu0 0.0
        %786 = vmatpush1.msra.mxu0 0.0
        %787 = vmatprep.subr.mxu0 0.0
        %788 = vmatpush1.msra.mxu0 0.0
        %789 = vmatprep.subr.mxu0 0.0
        %790 = vmatpush1.msra.mxu0 0.0
        %791 = vmatprep.subr.mxu0 0.0
        %792 = vmatpush1.msra.mxu0 0.0
        %793 = vmatprep.subr.mxu0 0.0
        %794 = vmatpush1.msra.mxu0 0.0
        %795 = vmatprep.subr.mxu0 0.0
        %796 = vmatpush1.msra.mxu0 0.0
        %797 = vmatprep.subr.mxu0 0.0
        %798 = vmatpush1.msra.mxu0 0.0
        %799 = vmatprep.subr.mxu0 0.0
        %800 = vmatpush1.msra.mxu0 0.0
        %801 = vmatprep.subr.mxu0 0.0
        %802 = vmatpush1.msra.mxu0 0.0
        %803 = vmatprep.subr.mxu0 0.0
        %804 = vmatpush1.msra.mxu0 0.0
        %805 = vmatprep.subr.mxu0 0.0
        %806 = vmatpush1.msra.mxu0 0.0
        %807 = vmatprep.subr.mxu0 0.0
        %808 = vmatpush1.msra.mxu0 0.0
        %809 = vmatprep.subr.mxu0 0.0
        %810 = vmatpush1.msra.mxu0 0.0
        %811 = vmatprep.subr.mxu0 0.0
        %812 = vmatpush1.msra.mxu0 0.0
        %813 = vmatprep.subr.mxu0 0.0
        %814 = vmatpush1.msra.mxu0 0.0
        %815 = vmatprep.subr.mxu0 0.0
        %816 = vmatpush1.msra.mxu0 0.0
        %817 = vmatprep.subr.mxu0 0.0
        %818 = vmatpush1.msra.mxu0 0.0
        %819 = vmatprep.subr.mxu0 0.0
        %820 = vmatpush1.msra.mxu0 0.0
        %821 = vmatprep.subr.mxu0 0.0
        %822 = vmatpush1.msra.mxu0 0.0
        %823 = vmatprep.subr.mxu0 0.0
        %824 = vmatpush1.msra.mxu0 0.0
        %825 = vmatprep.mubr.f32.mxu0 0.0
        %826 = vmatmul.mubr.f32.gmra.mrb[0].mxu0 %v759
        %v827 = vpop.f32.mrb[0].mxu0
        %v828 = vadd.f32 %v752, %v827
        %v829 = vpop.f32.mrb[0].mxu0
        %830 = vdwg.mxu0
        %v831 = vsub.f32 0.0, %v828
        %v832 = vmul.f32 %v831, 1.442695
        %v833 = vpow.pop %v832
        %v834 = vadd.f32 %v833, 1.0
        %v835 = vrcp.pop %v834
        %v836 = vmul.f32 1.0, %v835
        %v837 = vld [vmem:[%s384] sm:$0xff]
        %v838 = vld [vmem:[%s3] sm:$0xff]
        %v839 = vld [vmem:[%s3 + $0x8] sm:$0xff]
        %v842 = vunpack.c.l.b16 %v838
        %v843 = vunpack.c.h.b16 %v838
        %v844 = vunpack.c.l.b16 %v839
        %v845 = vunpack.c.h.b16 %v839
        %v846 = vpack.c.b16 %v844, %v842
        %v847 = vpack.c.b16 %v845, %v843
        %vm850 = vcmask 130048
        %v852 = vsel %vm850, %v748, 0
        %854 = vmatprep.subr.bf16.mxu0 %v847
        %855 = vmatpush1.bf16.msra.mxu0 %v846
        %856 = vmatprep.subr.bf16.mxu0 0
        %857 = vmatpush1.bf16.msra.mxu0 0
        %858 = vmatprep.subr.bf16.mxu0 0
        %859 = vmatpush1.bf16.msra.mxu0 0
        %860 = vmatprep.subr.bf16.mxu0 0
        %861 = vmatpush1.bf16.msra.mxu0 0
        %862 = vmatprep.subr.bf16.mxu0 0
        %863 = vmatpush1.bf16.msra.mxu0 0
        %864 = vmatprep.subr.bf16.mxu0 0
        %865 = vmatpush1.bf16.msra.mxu0 0
        %866 = vmatprep.subr.bf16.mxu0 0
        %867 = vmatpush1.bf16.msra.mxu0 0
        %868 = vmatprep.subr.bf16.mxu0 0
        %869 = vmatpush1.bf16.msra.mxu0 0
        %870 = vmatprep.subr.bf16.mxu0 0
        %871 = vmatpush1.bf16.msra.mxu0 0
        %872 = vmatprep.subr.bf16.mxu0 0
        %873 = vmatpush1.bf16.msra.mxu0 0
        %874 = vmatprep.subr.bf16.mxu0 0
        %875 = vmatpush1.bf16.msra.mxu0 0
        %876 = vmatprep.subr.bf16.mxu0 0
        %877 = vmatpush1.bf16.msra.mxu0 0
        %878 = vmatprep.subr.bf16.mxu0 0
        %879 = vmatpush1.bf16.msra.mxu0 0
        %880 = vmatprep.subr.bf16.mxu0 0
        %881 = vmatpush1.bf16.msra.mxu0 0
        %882 = vmatprep.subr.bf16.mxu0 0
        %883 = vmatpush1.bf16.msra.mxu0 0
        %884 = vmatprep.subr.bf16.mxu0 0
        %885 = vmatpush1.bf16.msra.mxu0 0
        %886 = vmatprep.mubr.f32.mxu0 0.0
        %887 = vmatmul.mubr.f32.gmra.mrb[0].mxu0 %v852
        %v888 = vpop.f32.mrb[0].mxu0
        %v889 = vadd.f32 0.0, %v888
        %v890 = vpop.f32.mrb[0].mxu0
        %v891 = vadd.f32 0.0, %v890
        %892 = vdwg.mxu0
        %v893 = vld [vmem:[%s4] sm:$0xff]
        %v894 = vld [vmem:[%s4 + $0x8] sm:$0xff]
        %v897 = vunpack.c.l.b16 %v893
        %v898 = vunpack.c.h.b16 %v893
        %v899 = vunpack.c.l.b16 %v894
        %v900 = vunpack.c.h.b16 %v894
        %v901 = vpack.c.b16 %v899, %v897
        %v902 = vpack.c.b16 %v900, %v898
        %v906 = vsel %vm850, %v836, 0
        %908 = vmatprep.subr.bf16.mxu0 %v902
        %909 = vmatpush1.bf16.msra.mxu0 %v901
        %910 = vmatprep.subr.bf16.mxu0 0
        %911 = vmatpush1.bf16.msra.mxu0 0
        %912 = vmatprep.subr.bf16.mxu0 0
        %913 = vmatpush1.bf16.msra.mxu0 0
        %914 = vmatprep.subr.bf16.mxu0 0
        %915 = vmatpush1.bf16.msra.mxu0 0
        %916 = vmatprep.subr.bf16.mxu0 0
        %917 = vmatpush1.bf16.msra.mxu0 0
        %918 = vmatprep.subr.bf16.mxu0 0
        %919 = vmatpush1.bf16.msra.mxu0 0
        %920 = vmatprep.subr.bf16.mxu0 0
        %921 = vmatpush1.bf16.msra.mxu0 0
        %922 = vmatprep.subr.bf16.mxu0 0
        %923 = vmatpush1.bf16.msra.mxu0 0
        %924 = vmatprep.subr.bf16.mxu0 0
        %925 = vmatpush1.bf16.msra.mxu0 0
        %926 = vmatprep.subr.bf16.mxu0 0
        %927 = vmatpush1.bf16.msra.mxu0 0
        %928 = vmatprep.subr.bf16.mxu0 0
        %929 = vmatpush1.bf16.msra.mxu0 0
        %930 = vmatprep.subr.bf16.mxu0 0
        %931 = vmatpush1.bf16.msra.mxu0 0
        %932 = vmatprep.subr.bf16.mxu0 0
        %933 = vmatpush1.bf16.msra.mxu0 0
        %934 = vmatprep.subr.bf16.mxu0 0
        %935 = vmatpush1.bf16.msra.mxu0 0
        %936 = vmatprep.subr.bf16.mxu0 0
        %937 = vmatpush1.bf16.msra.mxu0 0
        %938 = vmatprep.subr.bf16.mxu0 0
        %939 = vmatpush1.bf16.msra.mxu0 0
        %940 = vmatprep.mubr.f32.mxu0 0.0
        %941 = vmatmul.mubr.f32.gmra.mrb[0].mxu0 %v906
        %v942 = vpop.f32.mrb[0].mxu0
        %v943 = vadd.f32 0.0, %v942
        %v944 = vpop.f32.mrb[0].mxu0
        %v945 = vadd.f32 0.0, %v944
        %946 = vdwg.mxu0
        %v949 = vcombine.low %v889, %v891
        %v951 = vmul.f32 %v837, %v949
        %v954 = vcombine.low %v943, %v945
        %v956 = vmul.f32 %v951, %v954
        %957 = vst [vmem:[%s379] sm:$0xff] %v956
        %s958 = sand.u32 %s269, 1
        %s959 = scalar_lea.sflag [#allocation4], %s958
        %s960 = sand.u32 %s269, 1
        %s961 = smul.addr %s960, 8
        %s962 = scalar_lea.vmem [#allocation3], %s961
        // Predicated region
        $region65: #{tpu_custom_call.1} parent=63 // pred_check
          %p963 = pneg %p279
        $region66: #{tpu_custom_call.1} parent=63 // pred_check_branch
          %965 = sbr.rel (%p963) target = $region68
        $region67: #{tpu_custom_call.1} parent=63 // pred_region
          %s967 = ssub.s32 128, 128
          %968 = vsyncadd %s959, %s967
          %s969 = smul.addr %s25, 2
          %s970 = smul.addr %s969, 64
          %s971 = scalar_lea.hbm %s11, %s970
          %s973 = sshll.u32 %s962, 4
          %s974 = int_to_ptr.vmem [resolvable:$true] %s973
          %976 = dma.vmem_to_hbm [thread:$0]  %s974, 128, %s971, %s959
        $region68: #{tpu_custom_call.1} parent=63 // pred_fallthru
          _
      $region64: #{tpu_custom_call.1} parent=5 // pred_fallthru
        _
      %p977 = scmp.le.s32.totalorder 2, %s20
      // Predicated region
      $region69: #{tpu_custom_call.1} parent=5 // pred_check
        %p978 = pneg %p977
      $region70: #{tpu_custom_call.1} parent=5 // pred_check_branch
        %980 = sbr.rel (%p978) target = $region72
      $region71: #{tpu_custom_call.1} parent=5 // pred_region
        %s981 = ssub.s32 %s20, 2
        // Predicated region
        $region73: #{tpu_custom_call.1} parent=71 // pred_check
          %p982 = pneg %p285
        $region74: #{tpu_custom_call.1} parent=71 // pred_check_branch
          %984 = sbr.rel (%p982) target = $region76
        $region75: #{tpu_custom_call.1} parent=71 // pred_region
          %s985 = sand.u32 %s270, 1
          %s986 = scalar_lea.sflag [#allocation4], %s985
          %s987 = sand.u32 %s270, 1
          %s988 = smul.addr %s987, 8
          %s989 = scalar_lea.vmem [#allocation3], %s988
          %990 = dma.done %s986, 128
        $region76: #{tpu_custom_call.1} parent=71 // pred_fallthru
          _
      $region72: #{tpu_custom_call.1} parent=5 // pred_fallthru
        _
    $region6: #{tpu_custom_call.1} parent=1 // loop_footer
      %s24 = sadd.s32 1, %s20
    $region7: #{tpu_custom_call.1} parent=1 // loop_footer_branch
      %19 = sbr.rel target = $region3
    $region8: #{tpu_custom_call.1} parent=1 // loop_exit
      _
    %991 = vsyncpa [#allocation4], 1
    %s992 = scalar_lea.sflag [#allocation4], 1
    %993 = vsyncpa %s992, 1

// kernel: tpu_custom_call.1
$region0: #{tpu_custom_call.1}
  #allocation0 [shape = 'u32[]', space=smem, size = 0x4, offset = 0x4, fixed_abs, tag = 'smem constant byte address 0x4 - core index']
  #allocation1 [shape = 'u32[144,128]{1,0:T(1,128)}', space=vmem, size = 0x12000, scoped, tag = 'internal scratch']
  #allocation2 [shape = 'f32[4,32]{1,0:T(4,128)}', space=vmem, size = 0x800, scoped, tag = 'scratch operand']
  %s0 = inlined_call_operand.vmem [shape: f32[2,4,256], index: 0, kind: input, shape index: {}]
  %s1 = inlined_call_operand.vmem [shape: bf16[256,32], index: 1, kind: input, shape index: {}]
  %s2 = inlined_call_operand.vmem [shape: f32[1,32], index: 2, kind: input, shape index: {}]
  %s3 = inlined_call_operand.vmem [shape: bf16[16,256], index: 3, kind: input, shape index: {}]
  %s4 = inlined_call_operand.vmem [shape: bf16[16,256], index: 4, kind: input, shape index: {}]
  %s5 = inlined_call_operand.vmem [shape: f32[8,4], index: 5, kind: input, shape index: {}]
  %s6 = inlined_call_operand.vmem [shape: f32[8,1], index: 6, kind: input, shape index: {}]
  %s7 = inlined_call_operand.vmem [shape: f32[4,8], index: 7, kind: input, shape index: {}]
  %s8 = inlined_call_operand.vmem [shape: f32[4,1], index: 8, kind: input, shape index: {}]
  %s9 = inlined_call_operand.vmem [shape: f32[4,8], index: 9, kind: input, shape index: {}]
  %s10 = inlined_call_operand.vmem [shape: f32[4,1], index: 10, kind: input, shape index: {}]
  %s11 = inlined_call_operand.hbm [shape: f32[2,4,256], index: 11, kind: output, shape index: {}]
  %s12 = sld [smem:[#allocation0]]
  $region77: #{tpu_custom_call.1} parent=0
    _
  %s14 = ssub.s32 1, %s12
  %s15 = scalar_select 0, %s14, %s12
  $region1: #{tpu_custom_call.1} parent=0
    #allocation3 [shape = 'u8[8192]{0}', space=vmem, size = 0x2000, scoped, tag = 'output window, operand 0']
    #allocation4 [shape = 's32[2]{0}', space=sflag, size = 0x8, scoped, tag = 'scoped memory for tpu_custom_call.1']
    %16 = vsyncpa [#allocation4], 0
    %s17 = scalar_lea.sflag [#allocation4], 1
    %18 = vsyncpa %s17, 0
    loop: start=0, step=1, limit=4
    $region2: #{tpu_custom_call.1} parent=1 // loop_pre_header
      _
    $region3: #{tpu_custom_call.1} parent=1 // loop_header
      %s20 = sphi 0, %s24
      %p21 = scmp.ge.s32.totalorder %s20, 4
      %s30 = sphi 0, %s32
      %s33 = sphi 0, %s30
      %s34 = sphi 0, %s33
      %s50 = sphi 0, %s34
      %s54 = sphi 0, %s54
      %s56 = sphi 0, %s54
      %s57 = sphi 0, %s56
      %s71 = sphi 0, %s57
      %s75 = sphi 0, %s75
      %s77 = sphi 0, %s75
      %s78 = sphi 0, %s77
      %s92 = sphi 0, %s78
      %s96 = sphi 0, %s96
      %s98 = sphi 0, %s96
      %s99 = sphi 0, %s98
      %s113 = sphi 0, %s99
      %s117 = sphi 0, %s117
      %s119 = sphi 0, %s117
      %s120 = sphi 0, %s119
      %s134 = sphi 0, %s120
      %s138 = sphi 0, %s138
      %s140 = sphi 0, %s138
      %s141 = sphi 0, %s140
      %s155 = sphi 0, %s141
      %s159 = sphi 0, %s159
      %s161 = sphi 0, %s159
      %s162 = sphi 0, %s161
      %s176 = sphi 0, %s162
      %s180 = sphi 0, %s180
      %s182 = sphi 0, %s180
      %s183 = sphi 0, %s182
      %s197 = sphi 0, %s183
      %s201 = sphi 0, %s201
      %s203 = sphi 0, %s201
      %s204 = sphi 0, %s203
      %s218 = sphi 0, %s204
      %s222 = sphi 0, %s222
      %s224 = sphi 0, %s222
      %s225 = sphi 0, %s224
      %s239 = sphi 0, %s225
      %s243 = sphi 0, %s243
      %s245 = sphi 0, %s243
      %s246 = sphi 0, %s245
      %s260 = sphi 0, %s246
      %s266 = sphi 0, %s268
      %s269 = sphi 0, %s266
      %s270 = sphi 0, %s269
      %s286 = sphi 0, %s270
    $region4: #{tpu_custom_call.1} parent=1 // loop_header_branch
      %23 = sbr.rel (%p21) target = $region8
    $region5: #{tpu_custom_call.1} parent=1 // loop_body
      %s25 = ssub.s32 %s20, 1
      %s26 = ssub.s32 %s20, 2
      %s27 = sadd.s32 %s20, 1
      %s28 = ssub.s32 %s20, %s27
      %p29 = scmp.eq.s32.totalorder %s28, 0
      %s31 = sadd.s32 %s30, 1
      %s32 = scalar_select %p29, %s30, %s31
      %p35 = pneg %p29
      %p36 = scmp.eq.s32.totalorder %s20, 1
      %p37 = por %p35, %p36
      %p38 = scmp.ne.s32.totalorder %s30, %s33
      %p39 = scmp.eq.s32.totalorder %s20, 0
      %p40 = por %p38, %p39
      %p41 = scmp.ne.s32.totalorder %s30, %s33
      %p42 = scmp.eq.s32.totalorder %s25, 1
      %p43 = por %p41, %p42
      %p44 = scmp.ne.s32.totalorder %s33, %s34
      %p45 = scmp.eq.s32.totalorder %s25, 0
      %p46 = por %p44, %p45
      %p47 = scmp.ne.s32.totalorder %s33, %s34
      %p48 = scmp.eq.s32.totalorder %s26, 1
      %p49 = por %p47, %p48
      %p51 = scmp.ne.s32.totalorder %s34, %s50
      %p52 = scmp.eq.s32.totalorder %s26, 0
      %p53 = por %p51, %p52
      %s55 = sadd.s32 %s54, 1
      %p58 = scmp.eq.s32.totalorder %s20, 1
      %p59 = scmp.ne.s32.totalorder %s54, %s56
      %p60 = scmp.eq.s32.totalorder %s20, 0
      %p61 = por %p59, %p60
      %p62 = scmp.ne.s32.totalorder %s54, %s56
      %p63 = scmp.eq.s32.totalorder %s25, 1
      %p64 = por %p62, %p63
      %p65 = scmp.ne.s32.totalorder %s56, %s57
      %p66 = scmp.eq.s32.totalorder %s25, 0
      %p67 = por %p65, %p66
      %p68 = scmp.ne.s32.totalorder %s56, %s57
      %p69 = scmp.eq.s32.totalorder %s26, 1
      %p70 = por %p68, %p69
      %p72 = scmp.ne.s32.totalorder %s57, %s71
      %p73 = scmp.eq.s32.totalorder %s26, 0
      %p74 = por %p72, %p73
      %s76 = sadd.s32 %s75, 1
      %p79 = scmp.eq.s32.totalorder %s20, 1
      %p80 = scmp.ne.s32.totalorder %s75, %s77
      %p81 = scmp.eq.s32.totalorder %s20, 0
      %p82 = por %p80, %p81
      %p83 = scmp.ne.s32.totalorder %s75, %s77
      %p84 = scmp.eq.s32.totalorder %s25, 1
      %p85 = por %p83, %p84
      %p86 = scmp.ne.s32.totalorder %s77, %s78
      %p87 = scmp.eq.s32.totalorder %s25, 0
      %p88 = por %p86, %p87
      %p89 = scmp.ne.s32.totalorder %s77, %s78
      %p90 = scmp.eq.s32.totalorder %s26, 1
      %p91 = por %p89, %p90
      %p93 = scmp.ne.s32.totalorder %s78, %s92
      %p94 = scmp.eq.s32.totalorder %s26, 0
      %p95 = por %p93, %p94
      %s97 = sadd.s32 %s96, 1
      %p100 = scmp.eq.s32.totalorder %s20, 1
      %p101 = scmp.ne.s32.totalorder %s96, %s98
      %p102 = scmp.eq.s32.totalorder %s20, 0
      %p103 = por %p101, %p102
      %p104 = scmp.ne.s32.totalorder %s96, %s98
      %p105 = scmp.eq.s32.totalorder %s25, 1
      %p106 = por %p104, %p105
      %p107 = scmp.ne.s32.totalorder %s98, %s99
      %p108 = scmp.eq.s32.totalorder %s25, 0
      %p109 = por %p107, %p108
      %p110 = scmp.ne.s32.totalorder %s98, %s99
      %p111 = scmp.eq.s32.totalorder %s26, 1
      %p112 = por %p110, %p111
      %p114 = scmp.ne.s32.totalorder %s99, %s113
      %p115 = scmp.eq.s32.totalorder %s26, 0
      %p116 = por %p114, %p115
      %s118 = sadd.s32 %s117, 1
      %p121 = scmp.eq.s32.totalorder %s20, 1
      %p122 = scmp.ne.s32.totalorder %s117, %s119
      %p123 = scmp.eq.s32.totalorder %s20, 0
      %p124 = por %p122, %p123
      %p125 = scmp.ne.s32.totalorder %s117, %s119
      %p126 = scmp.eq.s32.totalorder %s25, 1
      %p127 = por %p125, %p126
      %p128 = scmp.ne.s32.totalorder %s119, %s120
      %p129 = scmp.eq.s32.totalorder %s25, 0
      %p130 = por %p128, %p129
      %p131 = scmp.ne.s32.totalorder %s119, %s120
      %p132 = scmp.eq.s32.totalorder %s26, 1
      %p133 = por %p131, %p132
      %p135 = scmp.ne.s32.totalorder %s120, %s134
      %p136 = scmp.eq.s32.totalorder %s26, 0
      %p137 = por %p135, %p136
      %s139 = sadd.s32 %s138, 1
      %p142 = scmp.eq.s32.totalorder %s20, 1
      %p143 = scmp.ne.s32.totalorder %s138, %s140
      %p144 = scmp.eq.s32.totalorder %s20, 0
      %p145 = por %p143, %p144
      %p146 = scmp.ne.s32.totalorder %s138, %s140
      %p147 = scmp.eq.s32.totalorder %s25, 1
      %p148 = por %p146, %p147
      %p149 = scmp.ne.s32.totalorder %s140, %s141
      %p150 = scmp.eq.s32.totalorder %s25, 0
      %p151 = por %p149, %p150
      %p152 = scmp.ne.s32.totalorder %s140, %s141
      %p153 = scmp.eq.s32.totalorder %s26, 1
      %p154 = por %p152, %p153
      %p156 = scmp.ne.s32.totalorder %s141, %s155
      %p157 = scmp.eq.s32.totalorder %s26, 0
      %p158 = por %p156, %p157
      %s160 = sadd.s32 %s159, 1
      %p163 = scmp.eq.s32.totalorder %s20, 1
      %p164 = scmp.ne.s32.totalorder %s159, %s161
      %p165 = scmp.eq.s32.totalorder %s20, 0
      %p166 = por %p164, %p165
      %p167 = scmp.ne.s32.totalorder %s159, %s161
      %p168 = scmp.eq.s32.totalorder %s25, 1
      %p169 = por %p167, %p168
      %p170 = scmp.ne.s32.totalorder %s161, %s162
      %p171 = scmp.eq.s32.totalorder %s25, 0
      %p172 = por %p170, %p171
      %p173 = scmp.ne.s32.totalorder %s161, %s162
      %p174 = scmp.eq.s32.totalorder %s26, 1
      %p175 = por %p173, %p174
      %p177 = scmp.ne.s32.totalorder %s162, %s176
      %p178 = scmp.eq.s32.totalorder %s26, 0
      %p179 = por %p177, %p178
      %s181 = sadd.s32 %s180, 1
      %p184 = scmp.eq.s32.totalorder %s20, 1
      %p185 = scmp.ne.s32.totalorder %s180, %s182
      %p186 = scmp.eq.s32.totalorder %s20, 0
      %p187 = por %p185, %p186
      %p188 = scmp.ne.s32.totalorder %s180, %s182
      %p189 = scmp.eq.s32.totalorder %s25, 1
      %p190 = por %p188, %p189
      %p191 = scmp.ne.s32.totalorder %s182, %s183
      %p192 = scmp.eq.s32.totalorder %s25, 0
      %p193 = por %p191, %p192
      %p194 = scmp.ne.s32.totalorder %s182, %s183
      %p195 = scmp.eq.s32.totalorder %s26, 1
      %p196 = por %p194, %p195
      %p198 = scmp.ne.s32.totalorder %s183, %s197
      %p199 = scmp.eq.s32.totalorder %s26, 0
      %p200 = por %p198, %p199
      %s202 = sadd.s32 %s201, 1
      %p205 = scmp.eq.s32.totalorder %s20, 1
      %p206 = scmp.ne.s32.totalorder %s201, %s203
      %p207 = scmp.eq.s32.totalorder %s20, 0
      %p208 = por %p206, %p207
      %p209 = scmp.ne.s32.totalorder %s201, %s203
      %p210 = scmp.eq.s32.totalorder %s25, 1
      %p211 = por %p209, %p210
      %p212 = scmp.ne.s32.totalorder %s203, %s204
      %p213 = scmp.eq.s32.totalorder %s25, 0
      %p214 = por %p212, %p213
      %p215 = scmp.ne.s32.totalorder %s203, %s204
      %p216 = scmp.eq.s32.totalorder %s26, 1
      %p217 = por %p215, %p216
      %p219 = scmp.ne.s32.totalorder %s204, %s218
      %p220 = scmp.eq.s32.totalorder %s26, 0
      %p221 = por %p219, %p220
      %s223 = sadd.s32 %s222, 1
      %p226 = scmp.eq.s32.totalorder %s20, 1
      %p227 = scmp.ne.s32.totalorder %s222, %s224
      %p228 = scmp.eq.s32.totalorder %s20, 0
      %p229 = por %p227, %p228
      %p230 = scmp.ne.s32.totalorder %s222, %s224
      %p231 = scmp.eq.s32.totalorder %s25, 1
      %p232 = por %p230, %p231
      %p233 = scmp.ne.s32.totalorder %s224, %s225
      %p234 = scmp.eq.s32.totalorder %s25, 0
      %p235 = por %p233, %p234
      %p236 = scmp.ne.s32.totalorder %s224, %s225
      %p237 = scmp.eq.s32.totalorder %s26, 1
      %p238 = por %p236, %p237
      %p240 = scmp.ne.s32.totalorder %s225, %s239
      %p241 = scmp.eq.s32.totalorder %s26, 0
      %p242 = por %p240, %p241
      %s244 = sadd.s32 %s243, 1
      %p247 = scmp.eq.s32.totalorder %s20, 1
      %p248 = scmp.ne.s32.totalorder %s243, %s245
      %p249 = scmp.eq.s32.totalorder %s20, 0
      %p250 = por %p248, %p249
      %p251 = scmp.ne.s32.totalorder %s243, %s245
      %p252 = scmp.eq.s32.totalorder %s25, 1
      %p253 = por %p251, %p252
      %p254 = scmp.ne.s32.totalorder %s245, %s246
      %p255 = scmp.eq.s32.totalorder %s25, 0
      %p256 = por %p254, %p255
      %p257 = scmp.ne.s32.totalorder %s245, %s246
      %p258 = scmp.eq.s32.totalorder %s26, 1
      %p259 = por %p257, %p258
      %p261 = scmp.ne.s32.totalorder %s246, %s260
      %p262 = scmp.eq.s32.totalorder %s26, 0
      %p263 = por %p261, %p262
      %s264 = ssub.s32 %s20, %s27
      %p265 = scmp.eq.s32.totalorder %s264, 0
      %s267 = sadd.s32 %s266, 1
      %s268 = scalar_select %p265, %s266, %s267
      %p271 = pneg %p265
      %p272 = scmp.eq.s32.totalorder %s20, 1
      %p273 = por %p271, %p272
      %p274 = scmp.ne.s32.totalorder %s266, %s269
      %p275 = scmp.eq.s32.totalorder %s20, 0
      %p276 = por %p274, %p275
      %p277 = scmp.ne.s32.totalorder %s266, %s269
      %p278 = scmp.eq.s32.totalorder %s25, 1
      %p279 = por %p277, %p278
      %p280 = scmp.ne.s32.totalorder %s269, %s270
      %p281 = scmp.eq.s32.totalorder %s25, 0
      %p282 = por %p280, %p281
      %p283 = scmp.ne.s32.totalorder %s269, %s270
      %p284 = scmp.eq.s32.totalorder %s26, 1
      %p285 = por %p283, %p284
      %p287 = scmp.ne.s32.totalorder %s270, %s286
      %p288 = scmp.eq.s32.totalorder %s26, 0
      %p289 = por %p287, %p288
      %p290 = scmp.le.s32.totalorder 1, %s20
      %p291 = scmp.lt.s32.totalorder %s20, 3
      %p292 = pnand %p290, %p291
      %p293 = pneg %p292
      // Predicated region
      $region9: #{tpu_custom_call.1} parent=5 // pred_check
        _
      $region10: #{tpu_custom_call.1} parent=5 // pred_check_branch
        %295 = sbr.rel (%p292) target = $region12
      $region11: #{tpu_custom_call.1} parent=5 // pred_region
        %s296 = ssub.s32 %s20, 1
        // Predicated region
        $region13: #{tpu_custom_call.1} parent=11 // pred_check
          %p297 = pneg %p67
        $region14: #{tpu_custom_call.1} parent=11 // pred_check_branch
          %299 = sbr.rel (%p297) target = $region16
        $region15: #{tpu_custom_call.1} parent=11 // pred_region
          _
        $region16: #{tpu_custom_call.1} parent=11 // pred_fallthru
          _
        // Predicated region
        $region17: #{tpu_custom_call.1} parent=11 // pred_check
          %p300 = pneg %p88
        $region18: #{tpu_custom_call.1} parent=11 // pred_check_branch
          %302 = sbr.rel (%p300) target = $region20
        $region19: #{tpu_custom_call.1} parent=11 // pred_region
          _
        $region20: #{tpu_custom_call.1} parent=11 // pred_fallthru
          _
        // Predicated region
        $region21: #{tpu_custom_call.1} parent=11 // pred_check
          %p303 = pneg %p109
        $region22: #{tpu_custom_call.1} parent=11 // pred_check_branch
          %305 = sbr.rel (%p303) target = $region24
        $region23: #{tpu_custom_call.1} parent=11 // pred_region
          _
        $region24: #{tpu_custom_call.1} parent=11 // pred_fallthru
          _
        // Predicated region
        $region25: #{tpu_custom_call.1} parent=11 // pred_check
          %p306 = pneg %p130
        $region26: #{tpu_custom_call.1} parent=11 // pred_check_branch
          %308 = sbr.rel (%p306) target = $region28
        $region27: #{tpu_custom_call.1} parent=11 // pred_region
          _
        $region28: #{tpu_custom_call.1} parent=11 // pred_fallthru
          _
        // Predicated region
        $region29: #{tpu_custom_call.1} parent=11 // pred_check
          %p309 = pneg %p151
        $region30: #{tpu_custom_call.1} parent=11 // pred_check_branch
          %311 = sbr.rel (%p309) target = $region32
        $region31: #{tpu_custom_call.1} parent=11 // pred_region
          _
        $region32: #{tpu_custom_call.1} parent=11 // pred_fallthru
          _
        // Predicated region
        $region33: #{tpu_custom_call.1} parent=11 // pred_check
          %p312 = pneg %p172
        $region34: #{tpu_custom_call.1} parent=11 // pred_check_branch
          %314 = sbr.rel (%p312) target = $region36
        $region35: #{tpu_custom_call.1} parent=11 // pred_region
          _
        $region36: #{tpu_custom_call.1} parent=11 // pred_fallthru
          _
        // Predicated region
        $region37: #{tpu_custom_call.1} parent=11 // pred_check
          %p315 = pneg %p193
        $region38: #{tpu_custom_call.1} parent=11 // pred_check_branch
          %317 = sbr.rel (%p315) target = $region40
        $region39: #{tpu_custom_call.1} parent=11 // pred_region
          _
        $region40: #{tpu_custom_call.1} parent=11 // pred_fallthru
          _
        // Predicated region
        $region41: #{tpu_custom_call.1} parent=11 // pred_check
          %p318 = pneg %p214
        $region42: #{tpu_custom_call.1} parent=11 // pred_check_branch
          %320 = sbr.rel (%p318) target = $region44
        $region43: #{tpu_custom_call.1} parent=11 // pred_region
          _
        $region44: #{tpu_custom_call.1} parent=11 // pred_fallthru
          _
        // Predicated region
        $region45: #{tpu_custom_call.1} parent=11 // pred_check
          %p321 = pneg %p235
        $region46: #{tpu_custom_call.1} parent=11 // pred_check_branch
          %323 = sbr.rel (%p321) target = $region48
        $region47: #{tpu_custom_call.1} parent=11 // pred_region
          _
        $region48: #{tpu_custom_call.1} parent=11 // pred_fallthru
          _
        // Predicated region
        $region49: #{tpu_custom_call.1} parent=11 // pred_check
          %p324 = pneg %p256
        $region50: #{tpu_custom_call.1} parent=11 // pred_check_branch
          %326 = sbr.rel (%p324) target = $region52
        $region51: #{tpu_custom_call.1} parent=11 // pred_region
          _
        $region52: #{tpu_custom_call.1} parent=11 // pred_fallthru
          _
      $region12: #{tpu_custom_call.1} parent=5 // pred_fallthru
        _
      %p327 = scmp.lt.s32.totalorder %s20, 2
      // Predicated region
      $region53: #{tpu_custom_call.1} parent=5 // pred_check
        %p328 = pneg %p327
      $region54: #{tpu_custom_call.1} parent=5 // pred_check_branch
        %330 = sbr.rel (%p328) target = $region56
      $region55: #{tpu_custom_call.1} parent=5 // pred_region
        // Predicated region
        $region57: #{tpu_custom_call.1} parent=55 // pred_check
          %p331 = pneg %p40
        $region58: #{tpu_custom_call.1} parent=55 // pred_check_branch
          %333 = sbr.rel (%p331) target = $region60
        $region59: #{tpu_custom_call.1} parent=55 // pred_region
          %p334 = scmp.lt.s32.totalorder %s20, 1
          %s335 = scalar_select %p334, %s20, 1
          %s336 = smul.addr %s335, 2
          %s337 = smul.addr %s336, 4
          %s338 = scalar_lea.vmem %s0, %s337
        $region60: #{tpu_custom_call.1} parent=55 // pred_fallthru
          _
      $region56: #{tpu_custom_call.1} parent=5 // pred_fallthru
        _
      %p339 = scmp.le.s32.totalorder 1, %s20
      %p340 = scmp.lt.s32.totalorder %s20, 3
      %p341 = pnand %p339, %p340
      %p342 = pneg %p341
      // Predicated region
      $region61: #{tpu_custom_call.1} parent=5 // pred_check
        _
      $region62: #{tpu_custom_call.1} parent=5 // pred_check_branch
        %344 = sbr.rel (%p341) target = $region64
      $region63: #{tpu_custom_call.1} parent=5 // pred_region
        %s345 = ssub.s32 %s20, 1
        %p346 = scmp.lt.s32.totalorder %s25, 1
        %s347 = scalar_select %p346, %s25, 1
        %s348 = smul.addr %s347, 2
        %s349 = smul.addr %s348, 4
        %s350 = scalar_lea.vmem %s0, %s349
        %p351 = pneg %p46
        %p352 = pneg %p43
        %p353 = pneg %p67
        %p354 = pneg %p64
        %p355 = pneg %p88
        %p356 = pneg %p85
        %p357 = pneg %p109
        %p358 = pneg %p106
        %p359 = pneg %p130
        %p360 = pneg %p127
        %p361 = pneg %p151
        %p362 = pneg %p148
        %p363 = pneg %p172
        %p364 = pneg %p169
        %p365 = pneg %p193
        %p366 = pneg %p190
        %p367 = pneg %p214
        %p368 = pneg %p211
        %p369 = pneg %p235
        %p370 = pneg %p232
        %p371 = pneg %p256
        %p372 = pneg %p253
        %p373 = pneg %p282
        %p374 = pneg %p279
        %s375 = sand.u32 %s269, 1
        %s376 = scalar_lea.sflag [#allocation4], %s375
        %s377 = sand.u32 %s269, 1
        %s378 = smul.addr %s377, 8
        %s379 = scalar_lea.vmem [#allocation3], %s378
        %p380 = scmp.lt.s32.totalorder %s25, 1
        %s381 = scalar_select %p380, %s25, 1
        %s382 = smul.addr %s381, 2
        %s383 = smul.addr %s382, 4
        %s384 = scalar_lea.vmem %s0, %s383
        %vm386 = vcmask 257024
        %387 = vst.msk [vmem:[#allocation2] sm:$0xf] %vm386, 0.0
        %v388 = vld [vmem:[%s384] sm:$0xff]
        %v389 = vld [vmem:[%s1] sm:$0xf]
        %v390 = vld [vmem:[%s1 + $0x4] sm:$0xf]
        %v391 = vld [vmem:[%s1 + $0x8] sm:$0xf]
        %v392 = vld [vmem:[%s1 + $0xc] sm:$0xf]
        %v393 = vld [vmem:[%s1 + $0x10] sm:$0xf]
        %v394 = vld [vmem:[%s1 + $0x14] sm:$0xf]
        %v395 = vld [vmem:[%s1 + $0x18] sm:$0xf]
        %v396 = vld [vmem:[%s1 + $0x1c] sm:$0xf]
        %v397 = vld [vmem:[%s1 + $0x20] sm:$0xf]
        %v398 = vld [vmem:[%s1 + $0x24] sm:$0xf]
        %v399 = vld [vmem:[%s1 + $0x28] sm:$0xf]
        %v400 = vld [vmem:[%s1 + $0x2c] sm:$0xf]
        %v401 = vld [vmem:[%s1 + $0x30] sm:$0xf]
        %v402 = vld [vmem:[%s1 + $0x34] sm:$0xf]
        %v403 = vld [vmem:[%s1 + $0x38] sm:$0xf]
        %v404 = vld [vmem:[%s1 + $0x3c] sm:$0xf]
        %v405 = vld [vmem:[%s1 + $0x40] sm:$0xf]
        %v406 = vld [vmem:[%s1 + $0x44] sm:$0xf]
        %v407 = vld [vmem:[%s1 + $0x48] sm:$0xf]
        %v408 = vld [vmem:[%s1 + $0x4c] sm:$0xf]
        %v409 = vld [vmem:[%s1 + $0x50] sm:$0xf]
        %v410 = vld [vmem:[%s1 + $0x54] sm:$0xf]
        %v411 = vld [vmem:[%s1 + $0x58] sm:$0xf]
        %v412 = vld [vmem:[%s1 + $0x5c] sm:$0xf]
        %v413 = vld [vmem:[%s1 + $0x60] sm:$0xf]
        %v414 = vld [vmem:[%s1 + $0x64] sm:$0xf]
        %v415 = vld [vmem:[%s1 + $0x68] sm:$0xf]
        %v416 = vld [vmem:[%s1 + $0x6c] sm:$0xf]
        %v417 = vld [vmem:[%s1 + $0x70] sm:$0xf]
        %v418 = vld [vmem:[%s1 + $0x74] sm:$0xf]
        %v419 = vld [vmem:[%s1 + $0x78] sm:$0xf]
        %v420 = vld [vmem:[%s1 + $0x7c] sm:$0xf]
        %v421 = vld [vmem:[#allocation2] sm:$0xf]
        %v423 = vcombine.high %v388, %v388
        %v457 = vunpack.c.l.b16 %v389
        %v458 = vunpack.c.l.b16 %v390
        %v459 = vunpack.c.l.b16 %v391
        %v460 = vunpack.c.l.b16 %v392
        %v461 = vunpack.c.l.b16 %v393
        %v462 = vunpack.c.l.b16 %v394
        %v463 = vunpack.c.l.b16 %v395
        %v464 = vunpack.c.l.b16 %v396
        %v465 = vunpack.c.l.b16 %v397
        %v466 = vunpack.c.l.b16 %v398
        %v467 = vunpack.c.l.b16 %v399
        %v468 = vunpack.c.l.b16 %v400
        %v469 = vunpack.c.l.b16 %v401
        %v470 = vunpack.c.l.b16 %v402
        %v471 = vunpack.c.l.b16 %v403
        %v472 = vunpack.c.l.b16 %v404
        %v473 = vunpack.c.l.b16 %v405
        %v474 = vunpack.c.l.b16 %v406
        %v475 = vunpack.c.l.b16 %v407
        %v476 = vunpack.c.l.b16 %v408
        %v477 = vunpack.c.l.b16 %v409
        %v478 = vunpack.c.l.b16 %v410
        %v479 = vunpack.c.l.b16 %v411
        %v480 = vunpack.c.l.b16 %v412
        %v481 = vunpack.c.l.b16 %v413
        %v482 = vunpack.c.l.b16 %v414
        %v483 = vunpack.c.l.b16 %v415
        %v484 = vunpack.c.l.b16 %v416
        %v485 = vunpack.c.l.b16 %v417
        %v486 = vunpack.c.l.b16 %v418
        %v487 = vunpack.c.l.b16 %v419
        %v488 = vunpack.c.l.b16 %v420
        %v489 = vpack.c.b16 %v458, %v457
        %v490 = vpack.c.b16 %v460, %v459
        %v491 = vpack.c.b16 %v462, %v461
        %v492 = vpack.c.b16 %v464, %v463
        %v493 = vpack.c.b16 %v466, %v465
        %v494 = vpack.c.b16 %v468, %v467
        %v495 = vpack.c.b16 %v470, %v469
        %v496 = vpack.c.b16 %v472, %v471
        %v497 = vpack.c.b16 %v474, %v473
        %v498 = vpack.c.b16 %v476, %v475
        %v499 = vpack.c.b16 %v478, %v477
        %v500 = vpack.c.b16 %v480, %v479
        %v501 = vpack.c.b16 %v482, %v481
        %v502 = vpack.c.b16 %v484, %v483
        %v503 = vpack.c.b16 %v486, %v485
        %v504 = vpack.c.b16 %v488, %v487
        %521 = vmatprep.subr.bf16.mxu0 0
        %522 = vmatpush1.bf16.msra.mxu0 %v489
        %523 = vmatprep.subr.bf16.mxu0 0
        %524 = vmatpush1.bf16.msra.mxu0 %v490
        %525 = vmatprep.subr.bf16.mxu0 0
        %526 = vmatpush1.bf16.msra.mxu0 %v491
        %527 = vmatprep.subr.bf16.mxu0 0
        %528 = vmatpush1.bf16.msra.mxu0 %v492
        %529 = vmatprep.subr.bf16.mxu0 0
        %530 = vmatpush1.bf16.msra.mxu0 %v493
        %531 = vmatprep.subr.bf16.mxu0 0
        %532 = vmatpush1.bf16.msra.mxu0 %v494
        %533 = vmatprep.subr.bf16.mxu0 0
        %534 = vmatpush1.bf16.msra.mxu0 %v495
        %535 = vmatprep.subr.bf16.mxu0 0
        %536 = vmatpush1.bf16.msra.mxu0 %v496
        %537 = vmatprep.subr.bf16.mxu0 0
        %538 = vmatpush1.bf16.msra.mxu0 %v497
        %539 = vmatprep.subr.bf16.mxu0 0
        %540 = vmatpush1.bf16.msra.mxu0 %v498
        %541 = vmatprep.subr.bf16.mxu0 0
        %542 = vmatpush1.bf16.msra.mxu0 %v499
        %543 = vmatprep.subr.bf16.mxu0 0
        %544 = vmatpush1.bf16.msra.mxu0 %v500
        %545 = vmatprep.subr.bf16.mxu0 0
        %546 = vmatpush1.bf16.msra.mxu0 %v501
        %547 = vmatprep.subr.bf16.mxu0 0
        %548 = vmatpush1.bf16.msra.mxu0 %v502
        %549 = vmatprep.subr.bf16.mxu0 0
        %550 = vmatpush1.bf16.msra.mxu0 %v503
        %551 = vmatprep.subr.bf16.mxu0 0
        %552 = vmatpush1.bf16.msra.mxu0 %v504
        %553 = vmatprep.mubr.f32.mxu0 %v423
        %554 = vmatmul.mubr.f32.gmra.mrb[0].mxu0 %v388
        %v555 = vpop.f32.mrb[0].mxu0
        %v556 = vadd.f32 0.0, %v555
        %v557 = vpop.f32.mrb[0].mxu0
        %558 = vdwg.mxu0
        %v559 = vadd.f32 %v421, %v556
        %560 = vst.msk [vmem:[#allocation2] sm:$0xf] %vm386, %v559
        %v561 = vld [vmem:[#allocation2] sm:$0xf]
        %v562 = vld [vmem:[%s2] sm:$0x1]
        %v564 = vlaneseq
        %v565 = vshrl.u32 %v564, 7
        %v566 = vsub.s32 0, %v565
        %v567 = vrot.slane %v562, %v566
        %v569 = vmul.f32 %v561, %v567
        %v570 = vld [vmem:[%s5] sm:$0xff]
        %v571 = vld [vmem:[%s6] sm:$0xff]
        %v572 = vld [vmem:[%s7] sm:$0xf]
        %v573 = vld [vmem:[%s8] sm:$0xf]
        %v574 = vld [vmem:[%s9] sm:$0xf]
        %v575 = vld [vmem:[%s10] sm:$0xf]
        %577 = vset.pattern.permute.xlu0 0
        %578 = vperm.xlu0 %577, %v571
        %v579 = vpop.permute.xlu0 %578
        %vm581 = vcmask 31744
        %v583 = vsel %vm581, %v570, 0
        %vm585 = vcmask 1043456
        %v587 = vsel %vm585, %v569, 0
        %589 = vmatprep.subr.mxu0 0.0
        %590 = vmatpush1.msra.mxu0 %v587
        %591 = vmatprep.subr.mxu0 0.0
        %592 = vmatpush1.msra.mxu0 0.0
        %593 = vmatprep.subr.mxu0 0.0
        %594 = vmatpush1.msra.mxu0 0.0
        %595 = vmatprep.subr.mxu0 0.0
        %596 = vmatpush1.msra.mxu0 0.0
        %597 = vmatprep.subr.mxu0 0.0
        %598 = vmatpush1.msra.mxu0 0.0
        %599 = vmatprep.subr.mxu0 0.0
        %600 = vmatpush1.msra.mxu0 0.0
        %601 = vmatprep.subr.mxu0 0.0
        %602 = vmatpush1.msra.mxu0 0.0
        %603 = vmatprep.subr.mxu0 0.0
        %604 = vmatpush1.msra.mxu0 0.0
        %605 = vmatprep.subr.mxu0 0.0
        %606 = vmatpush1.msra.mxu0 0.0
        %607 = vmatprep.subr.mxu0 0.0
        %608 = vmatpush1.msra.mxu0 0.0
        %609 = vmatprep.subr.mxu0 0.0
        %610 = vmatpush1.msra.mxu0 0.0
        %611 = vmatprep.subr.mxu0 0.0
        %612 = vmatpush1.msra.mxu0 0.0
        %613 = vmatprep.subr.mxu0 0.0
        %614 = vmatpush1.msra.mxu0 0.0
        %615 = vmatprep.subr.mxu0 0.0
        %616 = vmatpush1.msra.mxu0 0.0
        %617 = vmatprep.subr.mxu0 0.0
        %618 = vmatpush1.msra.mxu0 0.0
        %619 = vmatprep.subr.mxu0 0.0
        %620 = vmatpush1.msra.mxu0 0.0
        %621 = vmatprep.subr.mxu0 0.0
        %622 = vmatpush1.msra.mxu0 0.0
        %623 = vmatprep.subr.mxu0 0.0
        %624 = vmatpush1.msra.mxu0 0.0
        %625 = vmatprep.subr.mxu0 0.0
        %626 = vmatpush1.msra.mxu0 0.0
        %627 = vmatprep.subr.mxu0 0.0
        %628 = vmatpush1.msra.mxu0 0.0
        %629 = vmatprep.subr.mxu0 0.0
        %630 = vmatpush1.msra.mxu0 0.0
        %631 = vmatprep.subr.mxu0 0.0
        %632 = vmatpush1.msra.mxu0 0.0
        %633 = vmatprep.subr.mxu0 0.0
        %634 = vmatpush1.msra.mxu0 0.0
        %635 = vmatprep.subr.mxu0 0.0
        %636 = vmatpush1.msra.mxu0 0.0
        %637 = vmatprep.subr.mxu0 0.0
        %638 = vmatpush1.msra.mxu0 0.0
        %639 = vmatprep.subr.mxu0 0.0
        %640 = vmatpush1.msra.mxu0 0.0
        %641 = vmatprep.subr.mxu0 0.0
        %642 = vmatpush1.msra.mxu0 0.0
        %643 = vmatprep.subr.mxu0 0.0
        %644 = vmatpush1.msra.mxu0 0.0
        %645 = vmatprep.subr.mxu0 0.0
        %646 = vmatpush1.msra.mxu0 0.0
        %647 = vmatprep.subr.mxu0 0.0
        %648 = vmatpush1.msra.mxu0 0.0
        %649 = vmatprep.subr.mxu0 0.0
        %650 = vmatpush1.msra.mxu0 0.0
        %651 = vmatprep.subr.mxu0 0.0
        %652 = vmatpush1.msra.mxu0 0.0
        %653 = vmatprep.mubr.f32.mxu0 0.0
        %654 = vmatmul.mubr.f32.gmra.mrb[0].mxu0 %v583
        %v655 = vpop.f32.mrb[0].mxu0
        %v656 = vadd.f32 %v579, %v655
        %v657 = vpop.f32.mrb[0].mxu0
        %658 = vdwg.mxu0
        %v659 = vadd.f32 %v656, 3.0
        %v660 = vmax.f32 %v659, 0.0
        %v661 = vmin.f32 %v660, 6.0
        %v662 = vmul.f32 %v656, %v661
        %v663 = vmul.f32 %v662, 0.16666667
        %665 = vset.pattern.permute.xlu0 0
        %666 = vperm.xlu0 %665, %v573
        %v667 = vpop.permute.xlu0 %666
        %vm669 = vcmask 64512
        %v671 = vsel %vm669, %v572, 0
        %673 = vmatprep.subr.mxu0 0.0
        %674 = vmatpush1.msra.mxu0 %v663
        %675 = vmatprep.subr.mxu0 0.0
        %676 = vmatpush1.msra.mxu0 0.0
        %677 = vmatprep.subr.mxu0 0.0
        %678 = vmatpush1.msra.mxu0 0.0
        %679 = vmatprep.subr.mxu0 0.0
        %680 = vmatpush1.msra.mxu0 0.0
        %681 = vmatprep.subr.mxu0 0.0
        %682 = vmatpush1.msra.mxu0 0.0
        %683 = vmatprep.subr.mxu0 0.0
        %684 = vmatpush1.msra.mxu0 0.0
        %685 = vmatprep.subr.mxu0 0.0
        %686 = vmatpush1.msra.mxu0 0.0
        %687 = vmatprep.subr.mxu0 0.0
        %688 = vmatpush1.msra.mxu0 0.0
        %689 = vmatprep.subr.mxu0 0.0
        %690 = vmatpush1.msra.mxu0 0.0
        %691 = vmatprep.subr.mxu0 0.0
        %692 = vmatpush1.msra.mxu0 0.0
        %693 = vmatprep.subr.mxu0 0.0
        %694 = vmatpush1.msra.mxu0 0.0
        %695 = vmatprep.subr.mxu0 0.0
        %696 = vmatpush1.msra.mxu0 0.0
        %697 = vmatprep.subr.mxu0 0.0
        %698 = vmatpush1.msra.mxu0 0.0
        %699 = vmatprep.subr.mxu0 0.0
        %700 = vmatpush1.msra.mxu0 0.0
        %701 = vmatprep.subr.mxu0 0.0
        %702 = vmatpush1.msra.mxu0 0.0
        %703 = vmatprep.subr.mxu0 0.0
        %704 = vmatpush1.msra.mxu0 0.0
        %705 = vmatprep.subr.mxu0 0.0
        %706 = vmatpush1.msra.mxu0 0.0
        %707 = vmatprep.subr.mxu0 0.0
        %708 = vmatpush1.msra.mxu0 0.0
        %709 = vmatprep.subr.mxu0 0.0
        %710 = vmatpush1.msra.mxu0 0.0
        %711 = vmatprep.subr.mxu0 0.0
        %712 = vmatpush1.msra.mxu0 0.0
        %713 = vmatprep.subr.mxu0 0.0
        %714 = vmatpush1.msra.mxu0 0.0
        %715 = vmatprep.subr.mxu0 0.0
        %716 = vmatpush1.msra.mxu0 0.0
        %717 = vmatprep.subr.mxu0 0.0
        %718 = vmatpush1.msra.mxu0 0.0
        %719 = vmatprep.subr.mxu0 0.0
        %720 = vmatpush1.msra.mxu0 0.0
        %721 = vmatprep.subr.mxu0 0.0
        %722 = vmatpush1.msra.mxu0 0.0
        %723 = vmatprep.subr.mxu0 0.0
        %724 = vmatpush1.msra.mxu0 0.0
        %725 = vmatprep.subr.mxu0 0.0
        %726 = vmatpush1.msra.mxu0 0.0
        %727 = vmatprep.subr.mxu0 0.0
        %728 = vmatpush1.msra.mxu0 0.0
        %729 = vmatprep.subr.mxu0 0.0
        %730 = vmatpush1.msra.mxu0 0.0
        %731 = vmatprep.subr.mxu0 0.0
        %732 = vmatpush1.msra.mxu0 0.0
        %733 = vmatprep.subr.mxu0 0.0
        %734 = vmatpush1.msra.mxu0 0.0
        %735 = vmatprep.subr.mxu0 0.0
        %736 = vmatpush1.msra.mxu0 0.0
        %737 = vmatprep.mubr.f32.mxu0 0.0
        %738 = vmatmul.mubr.f32.gmra.mrb[0].mxu0 %v671
        %v739 = vpop.f32.mrb[0].mxu0
        %v740 = vadd.f32 %v667, %v739
        %v741 = vpop.f32.mrb[0].mxu0
        %742 = vdwg.mxu0
        %v743 = vsub.f32 0.0, %v740
        %v744 = vmul.f32 %v743, 1.442695
        %v745 = vpow.pop %v744
        %v746 = vadd.f32 %v745, 1.0
        %v747 = vrcp.pop %v746
        %v748 = vmul.f32 1.0, %v747
        %750 = vset.pattern.permute.xlu0 0
        %751 = vperm.xlu0 %750, %v575
        %v752 = vpop.permute.xlu0 %751
        %755 = vrot.lane.b32.xlu0 %v663, 112
        %v756 = vpop.permute.xlu0 %755
        %v759 = vsel %vm669, %v574, 0
        %761 = vmatprep.subr.mxu0 0.0
        %762 = vmatpush1.msra.mxu0 %v756
        %763 = vmatprep.subr.mxu0 0.0
        %764 = vmatpush1.msra.mxu0 0.0
        %765 = vmatprep.subr.mxu0 0.0
        %766 = vmatpush1.msra.mxu0 0.0
        %767 = vmatprep.subr.mxu0 0.0
        %768 = vmatpush1.msra.mxu0 0.0
        %769 = vmatprep.subr.mxu0 0.0
        %770 = vmatpush1.msra.mxu0 0.0
        %771 = vmatprep.subr.mxu0 0.0
        %772 = vmatpush1.msra.mxu0 0.0
        %773 = vmatprep.subr.mxu0 0.0
        %774 = vmatpush1.msra.mxu0 0.0
        %775 = vmatprep.subr.mxu0 0.0
        %776 = vmatpush1.msra.mxu0 0.0
        %777 = vmatprep.subr.mxu0 0.0
        %778 = vmatpush1.msra.mxu0 0.0
        %779 = vmatprep.subr.mxu0 0.0
        %780 = vmatpush1.msra.mxu0 0.0
        %781 = vmatprep.subr.mxu0 0.0
        %782 = vmatpush1.msra.mxu0 0.0
        %783 = vmatprep.subr.mxu0 0.0
        %784 = vmatpush1.msra.mxu0 0.0
        %785 = vmatprep.subr.mxu0 0.0
        %786 = vmatpush1.msra.mxu0 0.0
        %787 = vmatprep.subr.mxu0 0.0
        %788 = vmatpush1.msra.mxu0 0.0
        %789 = vmatprep.subr.mxu0 0.0
        %790 = vmatpush1.msra.mxu0 0.0
        %791 = vmatprep.subr.mxu0 0.0
        %792 = vmatpush1.msra.mxu0 0.0
        %793 = vmatprep.subr.mxu0 0.0
        %794 = vmatpush1.msra.mxu0 0.0
        %795 = vmatprep.subr.mxu0 0.0
        %796 = vmatpush1.msra.mxu0 0.0
        %797 = vmatprep.subr.mxu0 0.0
        %798 = vmatpush1.msra.mxu0 0.0
        %799 = vmatprep.subr.mxu0 0.0
        %800 = vmatpush1.msra.mxu0 0.0
        %801 = vmatprep.subr.mxu0 0.0
        %802 = vmatpush1.msra.mxu0 0.0
        %803 = vmatprep.subr.mxu0 0.0
        %804 = vmatpush1.msra.mxu0 0.0
        %805 = vmatprep.subr.mxu0 0.0
        %806 = vmatpush1.msra.mxu0 0.0
        %807 = vmatprep.subr.mxu0 0.0
        %808 = vmatpush1.msra.mxu0 0.0
        %809 = vmatprep.subr.mxu0 0.0
        %810 = vmatpush1.msra.mxu0 0.0
        %811 = vmatprep.subr.mxu0 0.0
        %812 = vmatpush1.msra.mxu0 0.0
        %813 = vmatprep.subr.mxu0 0.0
        %814 = vmatpush1.msra.mxu0 0.0
        %815 = vmatprep.subr.mxu0 0.0
        %816 = vmatpush1.msra.mxu0 0.0
        %817 = vmatprep.subr.mxu0 0.0
        %818 = vmatpush1.msra.mxu0 0.0
        %819 = vmatprep.subr.mxu0 0.0
        %820 = vmatpush1.msra.mxu0 0.0
        %821 = vmatprep.subr.mxu0 0.0
        %822 = vmatpush1.msra.mxu0 0.0
        %823 = vmatprep.subr.mxu0 0.0
        %824 = vmatpush1.msra.mxu0 0.0
        %825 = vmatprep.mubr.f32.mxu0 0.0
        %826 = vmatmul.mubr.f32.gmra.mrb[0].mxu0 %v759
        %v827 = vpop.f32.mrb[0].mxu0
        %v828 = vadd.f32 %v752, %v827
        %v829 = vpop.f32.mrb[0].mxu0
        %830 = vdwg.mxu0
        %v831 = vsub.f32 0.0, %v828
        %v832 = vmul.f32 %v831, 1.442695
        %v833 = vpow.pop %v832
        %v834 = vadd.f32 %v833, 1.0
        %v835 = vrcp.pop %v834
        %v836 = vmul.f32 1.0, %v835
        %v837 = vld [vmem:[%s384] sm:$0xff]
        %v838 = vld [vmem:[%s3] sm:$0xff]
        %v839 = vld [vmem:[%s3 + $0x8] sm:$0xff]
        %v842 = vunpack.c.l.b16 %v838
        %v843 = vunpack.c.h.b16 %v838
        %v844 = vunpack.c.l.b16 %v839
        %v845 = vunpack.c.h.b16 %v839
        %v846 = vpack.c.b16 %v844, %v842
        %v847 = vpack.c.b16 %v845, %v843
        %vm850 = vcmask 130048
        %v852 = vsel %vm850, %v748, 0
        %854 = vmatprep.subr.bf16.mxu0 %v847
        %855 = vmatpush1.bf16.msra.mxu0 %v846
        %856 = vmatprep.subr.bf16.mxu0 0
        %857 = vmatpush1.bf16.msra.mxu0 0
        %858 = vmatprep.subr.bf16.mxu0 0
        %859 = vmatpush1.bf16.msra.mxu0 0
        %860 = vmatprep.subr.bf16.mxu0 0
        %861 = vmatpush1.bf16.msra.mxu0 0
        %862 = vmatprep.subr.bf16.mxu0 0
        %863 = vmatpush1.bf16.msra.mxu0 0
        %864 = vmatprep.subr.bf16.mxu0 0
        %865 = vmatpush1.bf16.msra.mxu0 0
        %866 = vmatprep.subr.bf16.mxu0 0
        %867 = vmatpush1.bf16.msra.mxu0 0
        %868 = vmatprep.subr.bf16.mxu0 0
        %869 = vmatpush1.bf16.msra.mxu0 0
        %870 = vmatprep.subr.bf16.mxu0 0
        %871 = vmatpush1.bf16.msra.mxu0 0
        %872 = vmatprep.subr.bf16.mxu0 0
        %873 = vmatpush1.bf16.msra.mxu0 0
        %874 = vmatprep.subr.bf16.mxu0 0
        %875 = vmatpush1.bf16.msra.mxu0 0
        %876 = vmatprep.subr.bf16.mxu0 0
        %877 = vmatpush1.bf16.msra.mxu0 0
        %878 = vmatprep.subr.bf16.mxu0 0
        %879 = vmatpush1.bf16.msra.mxu0 0
        %880 = vmatprep.subr.bf16.mxu0 0
        %881 = vmatpush1.bf16.msra.mxu0 0
        %882 = vmatprep.subr.bf16.mxu0 0
        %883 = vmatpush1.bf16.msra.mxu0 0
        %884 = vmatprep.subr.bf16.mxu0 0
        %885 = vmatpush1.bf16.msra.mxu0 0
        %886 = vmatprep.mubr.f32.mxu0 0.0
        %887 = vmatmul.mubr.f32.gmra.mrb[0].mxu0 %v852
        %v888 = vpop.f32.mrb[0].mxu0
        %v889 = vadd.f32 0.0, %v888
        %v890 = vpop.f32.mrb[0].mxu0
        %v891 = vadd.f32 0.0, %v890
        %892 = vdwg.mxu0
        %v893 = vld [vmem:[%s4] sm:$0xff]
        %v894 = vld [vmem:[%s4 + $0x8] sm:$0xff]
        %v897 = vunpack.c.l.b16 %v893
        %v898 = vunpack.c.h.b16 %v893
        %v899 = vunpack.c.l.b16 %v894
        %v900 = vunpack.c.h.b16 %v894
        %v901 = vpack.c.b16 %v899, %v897
        %v902 = vpack.c.b16 %v900, %v898
        %v906 = vsel %vm850, %v836, 0
        %908 = vmatprep.subr.bf16.mxu0 %v902
        %909 = vmatpush1.bf16.msra.mxu0 %v901
        %910 = vmatprep.subr.bf16.mxu0 0
        %911 = vmatpush1.bf16.msra.mxu0 0
        %912 = vmatprep.subr.bf16.mxu0 0
        %913 = vmatpush1.bf16.msra.mxu0 0
        %914 = vmatprep.subr.bf16.mxu0 0
        %915 = vmatpush1.bf16.msra.mxu0 0
        %916 = vmatprep.subr.bf16.mxu0 0
        %917 = vmatpush1.bf16.msra.mxu0 0
        %918 = vmatprep.subr.bf16.mxu0 0
        %919 = vmatpush1.bf16.msra.mxu0 0
        %920 = vmatprep.subr.bf16.mxu0 0
        %921 = vmatpush1.bf16.msra.mxu0 0
        %922 = vmatprep.subr.bf16.mxu0 0
        %923 = vmatpush1.bf16.msra.mxu0 0
        %924 = vmatprep.subr.bf16.mxu0 0
        %925 = vmatpush1.bf16.msra.mxu0 0
        %926 = vmatprep.subr.bf16.mxu0 0
        %927 = vmatpush1.bf16.msra.mxu0 0
        %928 = vmatprep.subr.bf16.mxu0 0
        %929 = vmatpush1.bf16.msra.mxu0 0
        %930 = vmatprep.subr.bf16.mxu0 0
        %931 = vmatpush1.bf16.msra.mxu0 0
        %932 = vmatprep.subr.bf16.mxu0 0
        %933 = vmatpush1.bf16.msra.mxu0 0
        %934 = vmatprep.subr.bf16.mxu0 0
        %935 = vmatpush1.bf16.msra.mxu0 0
        %936 = vmatprep.subr.bf16.mxu0 0
        %937 = vmatpush1.bf16.msra.mxu0 0
        %938 = vmatprep.subr.bf16.mxu0 0
        %939 = vmatpush1.bf16.msra.mxu0 0
        %940 = vmatprep.mubr.f32.mxu0 0.0
        %941 = vmatmul.mubr.f32.gmra.mrb[0].mxu0 %v906
        %v942 = vpop.f32.mrb[0].mxu0
        %v943 = vadd.f32 0.0, %v942
        %v944 = vpop.f32.mrb[0].mxu0
        %v945 = vadd.f32 0.0, %v944
        %946 = vdwg.mxu0
        %v949 = vcombine.low %v889, %v891
        %v951 = vmul.f32 %v837, %v949
        %v954 = vcombine.low %v943, %v945
        %v956 = vmul.f32 %v951, %v954
        %957 = vst [vmem:[%s379] sm:$0xff] %v956
        %s958 = sand.u32 %s269, 1
        %s959 = scalar_lea.sflag [#allocation4], %s958
        %s960 = sand.u32 %s269, 1
        %s961 = smul.addr %s960, 8
        %s962 = scalar_lea.vmem [#allocation3], %s961
        // Predicated region
        $region65: #{tpu_custom_call.1} parent=63 // pred_check
          %p963 = pneg %p279
        $region66: #{tpu_custom_call.1} parent=63 // pred_check_branch
          %965 = sbr.rel (%p963) target = $region68
        $region67: #{tpu_custom_call.1} parent=63 // pred_region
          %s967 = ssub.s32 128, 128
          %968 = vsyncadd %s959, %s967
          %s969 = smul.addr %s25, 2
          %s970 = smul.addr %s969, 64
          %s971 = scalar_lea.hbm %s11, %s970
          %s973 = sshll.u32 %s962, 4
          %s974 = int_to_ptr.vmem [resolvable:$true] %s973
          %976 = dma.vmem_to_hbm [thread:$0]  %s974, 128, %s971, %s959
        $region68: #{tpu_custom_call.1} parent=63 // pred_fallthru
          _
      $region64: #{tpu_custom_call.1} parent=5 // pred_fallthru
        _
      %p977 = scmp.le.s32.totalorder 2, %s20
      // Predicated region
      $region69: #{tpu_custom_call.1} parent=5 // pred_check
        %p978 = pneg %p977
      $region70: #{tpu_custom_call.1} parent=5 // pred_check_branch
        %980 = sbr.rel (%p978) target = $region72
      $region71: #{tpu_custom_call.1} parent=5 // pred_region
        %s981 = ssub.s32 %s20, 2
        // Predicated region
        $region73: #{tpu_custom_call.1} parent=71 // pred_check
          %p982 = pneg %p285
        $region74: #{tpu_custom_call.1} parent=71 // pred_check_branch
          %984 = sbr.rel (%p982) target = $region76
        $region75: #{tpu_custom_call.1} parent=71 // pred_region
          %s985 = sand.u32 %s270, 1
          %s986 = scalar_lea.sflag [#allocation4], %s985
          %s987 = sand.u32 %s270, 1
          %s988 = smul.addr %s987, 8
          %s989 = scalar_lea.vmem [#allocation3], %s988
          %990 = dma.done %s986, 128
        $region76: #{tpu_custom_call.1} parent=71 // pred_fallthru
          _
      $region72: #{tpu_custom_call.1} parent=5 // pred_fallthru
        _
    $region6: #{tpu_custom_call.1} parent=1 // loop_footer
      %s24 = sadd.s32 1, %s20
    $region7: #{tpu_custom_call.1} parent=1 // loop_footer_branch
      %19 = sbr.rel target = $region3
    $region8: #{tpu_custom_call.1} parent=1 // loop_exit
      _
    %991 = vsyncpa [#allocation4], 1
    %s992 = scalar_lea.sflag [#allocation4], 1
    %993 = vsyncpa %s992, 1

// kernel: tpu_custom_call.1
$region0: #{tpu_custom_call.1}
  #allocation0 [shape = 'u32[]', space=smem, size = 0x4, offset = 0x4, fixed_abs, tag = 'smem constant byte address 0x4 - core index']
  #allocation1 [shape = 'u32[144,128]{1,0:T(1,128)}', space=vmem, size = 0x12000, scoped, tag = 'internal scratch']
  #allocation2 [shape = 'f32[4,32]{1,0:T(4,128)}', space=vmem, size = 0x800, scoped, tag = 'scratch operand']
  %s0 = inlined_call_operand.vmem [shape: f32[2,4,256], index: 0, kind: input, shape index: {}]
  %s1 = inlined_call_operand.vmem [shape: bf16[256,32], index: 1, kind: input, shape index: {}]
  %s2 = inlined_call_operand.vmem [shape: f32[1,32], index: 2, kind: input, shape index: {}]
  %s3 = inlined_call_operand.vmem [shape: f32[8,4], index: 3, kind: input, shape index: {}]
  %s4 = inlined_call_operand.vmem [shape: f32[8,1], index: 4, kind: input, shape index: {}]
  %s5 = inlined_call_operand.vmem [shape: f32[4,8], index: 5, kind: input, shape index: {}]
  %s6 = inlined_call_operand.vmem [shape: f32[4,1], index: 6, kind: input, shape index: {}]
  %s7 = inlined_call_operand.vmem [shape: f32[4,8], index: 7, kind: input, shape index: {}]
  %s8 = inlined_call_operand.vmem [shape: f32[4,1], index: 8, kind: input, shape index: {}]
  %s9 = inlined_call_operand.hbm [shape: f32[2,4,32], index: 9, kind: output, shape index: {}]
  %s10 = sld [smem:[#allocation0]]
  $region69: #{tpu_custom_call.1} parent=0
    _
  %s12 = ssub.s32 1, %s10
  %s13 = scalar_select 0, %s12, %s10
  $region1: #{tpu_custom_call.1} parent=0
    #allocation3 [shape = 'u8[4096]{0}', space=vmem, size = 0x1000, scoped, tag = 'output window, operand 0']
    #allocation4 [shape = 's32[2]{0}', space=sflag, size = 0x8, scoped, tag = 'scoped memory for tpu_custom_call.1']
    %14 = vsyncpa [#allocation4], 0
    %s15 = scalar_lea.sflag [#allocation4], 1
    %16 = vsyncpa %s15, 0
    loop: start=0, step=1, limit=4
    $region2: #{tpu_custom_call.1} parent=1 // loop_pre_header
      _
    $region3: #{tpu_custom_call.1} parent=1 // loop_header
      %s18 = sphi 0, %s22
      %p19 = scmp.ge.s32.totalorder %s18, 4
      %s28 = sphi 0, %s30
      %s31 = sphi 0, %s28
      %s32 = sphi 0, %s31
      %s48 = sphi 0, %s32
      %s52 = sphi 0, %s52
      %s54 = sphi 0, %s52
      %s55 = sphi 0, %s54
      %s69 = sphi 0, %s55
      %s73 = sphi 0, %s73
      %s75 = sphi 0, %s73
      %s76 = sphi 0, %s75
      %s90 = sphi 0, %s76
      %s94 = sphi 0, %s94
      %s96 = sphi 0, %s94
      %s97 = sphi 0, %s96
      %s111 = sphi 0, %s97
      %s115 = sphi 0, %s115
      %s117 = sphi 0, %s115
      %s118 = sphi 0, %s117
      %s132 = sphi 0, %s118
      %s136 = sphi 0, %s136
      %s138 = sphi 0, %s136
      %s139 = sphi 0, %s138
      %s153 = sphi 0, %s139
      %s157 = sphi 0, %s157
      %s159 = sphi 0, %s157
      %s160 = sphi 0, %s159
      %s174 = sphi 0, %s160
      %s178 = sphi 0, %s178
      %s180 = sphi 0, %s178
      %s181 = sphi 0, %s180
      %s195 = sphi 0, %s181
      %s199 = sphi 0, %s199
      %s201 = sphi 0, %s199
      %s202 = sphi 0, %s201
      %s216 = sphi 0, %s202
      %s222 = sphi 0, %s224
      %s225 = sphi 0, %s222
      %s226 = sphi 0, %s225
      %s242 = sphi 0, %s226
    $region4: #{tpu_custom_call.1} parent=1 // loop_header_branch
      %21 = sbr.rel (%p19) target = $region8
    $region5: #{tpu_custom_call.1} parent=1 // loop_body
      %s23 = ssub.s32 %s18, 1
      %s24 = ssub.s32 %s18, 2
      %s25 = sadd.s32 %s18, 1
      %s26 = ssub.s32 %s18, %s25
      %p27 = scmp.eq.s32.totalorder %s26, 0
      %s29 = sadd.s32 %s28, 1
      %s30 = scalar_select %p27, %s28, %s29
      %p33 = pneg %p27
      %p34 = scmp.eq.s32.totalorder %s18, 1
      %p35 = por %p33, %p34
      %p36 = scmp.ne.s32.totalorder %s28, %s31
      %p37 = scmp.eq.s32.totalorder %s18, 0
      %p38 = por %p36, %p37
      %p39 = scmp.ne.s32.totalorder %s28, %s31
      %p40 = scmp.eq.s32.totalorder %s23, 1
      %p41 = por %p39, %p40
      %p42 = scmp.ne.s32.totalorder %s31, %s32
      %p43 = scmp.eq.s32.totalorder %s23, 0
      %p44 = por %p42, %p43
      %p45 = scmp.ne.s32.totalorder %s31, %s32
      %p46 = scmp.eq.s32.totalorder %s24, 1
      %p47 = por %p45, %p46
      %p49 = scmp.ne.s32.totalorder %s32, %s48
      %p50 = scmp.eq.s32.totalorder %s24, 0
      %p51 = por %p49, %p50
      %s53 = sadd.s32 %s52, 1
      %p56 = scmp.eq.s32.totalorder %s18, 1
      %p57 = scmp.ne.s32.totalorder %s52, %s54
      %p58 = scmp.eq.s32.totalorder %s18, 0
      %p59 = por %p57, %p58
      %p60 = scmp.ne.s32.totalorder %s52, %s54
      %p61 = scmp.eq.s32.totalorder %s23, 1
      %p62 = por %p60, %p61
      %p63 = scmp.ne.s32.totalorder %s54, %s55
      %p64 = scmp.eq.s32.totalorder %s23, 0
      %p65 = por %p63, %p64
      %p66 = scmp.ne.s32.totalorder %s54, %s55
      %p67 = scmp.eq.s32.totalorder %s24, 1
      %p68 = por %p66, %p67
      %p70 = scmp.ne.s32.totalorder %s55, %s69
      %p71 = scmp.eq.s32.totalorder %s24, 0
      %p72 = por %p70, %p71
      %s74 = sadd.s32 %s73, 1
      %p77 = scmp.eq.s32.totalorder %s18, 1
      %p78 = scmp.ne.s32.totalorder %s73, %s75
      %p79 = scmp.eq.s32.totalorder %s18, 0
      %p80 = por %p78, %p79
      %p81 = scmp.ne.s32.totalorder %s73, %s75
      %p82 = scmp.eq.s32.totalorder %s23, 1
      %p83 = por %p81, %p82
      %p84 = scmp.ne.s32.totalorder %s75, %s76
      %p85 = scmp.eq.s32.totalorder %s23, 0
      %p86 = por %p84, %p85
      %p87 = scmp.ne.s32.totalorder %s75, %s76
      %p88 = scmp.eq.s32.totalorder %s24, 1
      %p89 = por %p87, %p88
      %p91 = scmp.ne.s32.totalorder %s76, %s90
      %p92 = scmp.eq.s32.totalorder %s24, 0
      %p93 = por %p91, %p92
      %s95 = sadd.s32 %s94, 1
      %p98 = scmp.eq.s32.totalorder %s18, 1
      %p99 = scmp.ne.s32.totalorder %s94, %s96
      %p100 = scmp.eq.s32.totalorder %s18, 0
      %p101 = por %p99, %p100
      %p102 = scmp.ne.s32.totalorder %s94, %s96
      %p103 = scmp.eq.s32.totalorder %s23, 1
      %p104 = por %p102, %p103
      %p105 = scmp.ne.s32.totalorder %s96, %s97
      %p106 = scmp.eq.s32.totalorder %s23, 0
      %p107 = por %p105, %p106
      %p108 = scmp.ne.s32.totalorder %s96, %s97
      %p109 = scmp.eq.s32.totalorder %s24, 1
      %p110 = por %p108, %p109
      %p112 = scmp.ne.s32.totalorder %s97, %s111
      %p113 = scmp.eq.s32.totalorder %s24, 0
      %p114 = por %p112, %p113
      %s116 = sadd.s32 %s115, 1
      %p119 = scmp.eq.s32.totalorder %s18, 1
      %p120 = scmp.ne.s32.totalorder %s115, %s117
      %p121 = scmp.eq.s32.totalorder %s18, 0
      %p122 = por %p120, %p121
      %p123 = scmp.ne.s32.totalorder %s115, %s117
      %p124 = scmp.eq.s32.totalorder %s23, 1
      %p125 = por %p123, %p124
      %p126 = scmp.ne.s32.totalorder %s117, %s118
      %p127 = scmp.eq.s32.totalorder %s23, 0
      %p128 = por %p126, %p127
      %p129 = scmp.ne.s32.totalorder %s117, %s118
      %p130 = scmp.eq.s32.totalorder %s24, 1
      %p131 = por %p129, %p130
      %p133 = scmp.ne.s32.totalorder %s118, %s132
      %p134 = scmp.eq.s32.totalorder %s24, 0
      %p135 = por %p133, %p134
      %s137 = sadd.s32 %s136, 1
      %p140 = scmp.eq.s32.totalorder %s18, 1
      %p141 = scmp.ne.s32.totalorder %s136, %s138
      %p142 = scmp.eq.s32.totalorder %s18, 0
      %p143 = por %p141, %p142
      %p144 = scmp.ne.s32.totalorder %s136, %s138
      %p145 = scmp.eq.s32.totalorder %s23, 1
      %p146 = por %p144, %p145
      %p147 = scmp.ne.s32.totalorder %s138, %s139
      %p148 = scmp.eq.s32.totalorder %s23, 0
      %p149 = por %p147, %p148
      %p150 = scmp.ne.s32.totalorder %s138, %s139
      %p151 = scmp.eq.s32.totalorder %s24, 1
      %p152 = por %p150, %p151
      %p154 = scmp.ne.s32.totalorder %s139, %s153
      %p155 = scmp.eq.s32.totalorder %s24, 0
      %p156 = por %p154, %p155
      %s158 = sadd.s32 %s157, 1
      %p161 = scmp.eq.s32.totalorder %s18, 1
      %p162 = scmp.ne.s32.totalorder %s157, %s159
      %p163 = scmp.eq.s32.totalorder %s18, 0
      %p164 = por %p162, %p163
      %p165 = scmp.ne.s32.totalorder %s157, %s159
      %p166 = scmp.eq.s32.totalorder %s23, 1
      %p167 = por %p165, %p166
      %p168 = scmp.ne.s32.totalorder %s159, %s160
      %p169 = scmp.eq.s32.totalorder %s23, 0
      %p170 = por %p168, %p169
      %p171 = scmp.ne.s32.totalorder %s159, %s160
      %p172 = scmp.eq.s32.totalorder %s24, 1
      %p173 = por %p171, %p172
      %p175 = scmp.ne.s32.totalorder %s160, %s174
      %p176 = scmp.eq.s32.totalorder %s24, 0
      %p177 = por %p175, %p176
      %s179 = sadd.s32 %s178, 1
      %p182 = scmp.eq.s32.totalorder %s18, 1
      %p183 = scmp.ne.s32.totalorder %s178, %s180
      %p184 = scmp.eq.s32.totalorder %s18, 0
      %p185 = por %p183, %p184
      %p186 = scmp.ne.s32.totalorder %s178, %s180
      %p187 = scmp.eq.s32.totalorder %s23, 1
      %p188 = por %p186, %p187
      %p189 = scmp.ne.s32.totalorder %s180, %s181
      %p190 = scmp.eq.s32.totalorder %s23, 0
      %p191 = por %p189, %p190
      %p192 = scmp.ne.s32.totalorder %s180, %s181
      %p193 = scmp.eq.s32.totalorder %s24, 1
      %p194 = por %p192, %p193
      %p196 = scmp.ne.s32.totalorder %s181, %s195
      %p197 = scmp.eq.s32.totalorder %s24, 0
      %p198 = por %p196, %p197
      %s200 = sadd.s32 %s199, 1
      %p203 = scmp.eq.s32.totalorder %s18, 1
      %p204 = scmp.ne.s32.totalorder %s199, %s201
      %p205 = scmp.eq.s32.totalorder %s18, 0
      %p206 = por %p204, %p205
      %p207 = scmp.ne.s32.totalorder %s199, %s201
      %p208 = scmp.eq.s32.totalorder %s23, 1
      %p209 = por %p207, %p208
      %p210 = scmp.ne.s32.totalorder %s201, %s202
      %p211 = scmp.eq.s32.totalorder %s23, 0
      %p212 = por %p210, %p211
      %p213 = scmp.ne.s32.totalorder %s201, %s202
      %p214 = scmp.eq.s32.totalorder %s24, 1
      %p215 = por %p213, %p214
      %p217 = scmp.ne.s32.totalorder %s202, %s216
      %p218 = scmp.eq.s32.totalorder %s24, 0
      %p219 = por %p217, %p218
      %s220 = ssub.s32 %s18, %s25
      %p221 = scmp.eq.s32.totalorder %s220, 0
      %s223 = sadd.s32 %s222, 1
      %s224 = scalar_select %p221, %s222, %s223
      %p227 = pneg %p221
      %p228 = scmp.eq.s32.totalorder %s18, 1
      %p229 = por %p227, %p228
      %p230 = scmp.ne.s32.totalorder %s222, %s225
      %p231 = scmp.eq.s32.totalorder %s18, 0
      %p232 = por %p230, %p231
      %p233 = scmp.ne.s32.totalorder %s222, %s225
      %p234 = scmp.eq.s32.totalorder %s23, 1
      %p235 = por %p233, %p234
      %p236 = scmp.ne.s32.totalorder %s225, %s226
      %p237 = scmp.eq.s32.totalorder %s23, 0
      %p238 = por %p236, %p237
      %p239 = scmp.ne.s32.totalorder %s225, %s226
      %p240 = scmp.eq.s32.totalorder %s24, 1
      %p241 = por %p239, %p240
      %p243 = scmp.ne.s32.totalorder %s226, %s242
      %p244 = scmp.eq.s32.totalorder %s24, 0
      %p245 = por %p243, %p244
      %p246 = scmp.le.s32.totalorder 1, %s18
      %p247 = scmp.lt.s32.totalorder %s18, 3
      %p248 = pnand %p246, %p247
      %p249 = pneg %p248
      // Predicated region
      $region9: #{tpu_custom_call.1} parent=5 // pred_check
        _
      $region10: #{tpu_custom_call.1} parent=5 // pred_check_branch
        %251 = sbr.rel (%p248) target = $region12
      $region11: #{tpu_custom_call.1} parent=5 // pred_region
        %s252 = ssub.s32 %s18, 1
        // Predicated region
        $region13: #{tpu_custom_call.1} parent=11 // pred_check
          %p253 = pneg %p65
        $region14: #{tpu_custom_call.1} parent=11 // pred_check_branch
          %255 = sbr.rel (%p253) target = $region16
        $region15: #{tpu_custom_call.1} parent=11 // pred_region
          _
        $region16: #{tpu_custom_call.1} parent=11 // pred_fallthru
          _
        // Predicated region
        $region17: #{tpu_custom_call.1} parent=11 // pred_check
          %p256 = pneg %p86
        $region18: #{tpu_custom_call.1} parent=11 // pred_check_branch
          %258 = sbr.rel (%p256) target = $region20
        $region19: #{tpu_custom_call.1} parent=11 // pred_region
          _
        $region20: #{tpu_custom_call.1} parent=11 // pred_fallthru
          _
        // Predicated region
        $region21: #{tpu_custom_call.1} parent=11 // pred_check
          %p259 = pneg %p107
        $region22: #{tpu_custom_call.1} parent=11 // pred_check_branch
          %261 = sbr.rel (%p259) target = $region24
        $region23: #{tpu_custom_call.1} parent=11 // pred_region
          _
        $region24: #{tpu_custom_call.1} parent=11 // pred_fallthru
          _
        // Predicated region
        $region25: #{tpu_custom_call.1} parent=11 // pred_check
          %p262 = pneg %p128
        $region26: #{tpu_custom_call.1} parent=11 // pred_check_branch
          %264 = sbr.rel (%p262) target = $region28
        $region27: #{tpu_custom_call.1} parent=11 // pred_region
          _
        $region28: #{tpu_custom_call.1} parent=11 // pred_fallthru
          _
        // Predicated region
        $region29: #{tpu_custom_call.1} parent=11 // pred_check
          %p265 = pneg %p149
        $region30: #{tpu_custom_call.1} parent=11 // pred_check_branch
          %267 = sbr.rel (%p265) target = $region32
        $region31: #{tpu_custom_call.1} parent=11 // pred_region
          _
        $region32: #{tpu_custom_call.1} parent=11 // pred_fallthru
          _
        // Predicated region
        $region33: #{tpu_custom_call.1} parent=11 // pred_check
          %p268 = pneg %p170
        $region34: #{tpu_custom_call.1} parent=11 // pred_check_branch
          %270 = sbr.rel (%p268) target = $region36
        $region35: #{tpu_custom_call.1} parent=11 // pred_region
          _
        $region36: #{tpu_custom_call.1} parent=11 // pred_fallthru
          _
        // Predicated region
        $region37: #{tpu_custom_call.1} parent=11 // pred_check
          %p271 = pneg %p191
        $region38: #{tpu_custom_call.1} parent=11 // pred_check_branch
          %273 = sbr.rel (%p271) target = $region40
        $region39: #{tpu_custom_call.1} parent=11 // pred_region
          _
        $region40: #{tpu_custom_call.1} parent=11 // pred_fallthru
          _
        // Predicated region
        $region41: #{tpu_custom_call.1} parent=11 // pred_check
          %p274 = pneg %p212
        $region42: #{tpu_custom_call.1} parent=11 // pred_check_branch
          %276 = sbr.rel (%p274) target = $region44
        $region43: #{tpu_custom_call.1} parent=11 // pred_region
          _
        $region44: #{tpu_custom_call.1} parent=11 // pred_fallthru
          _
      $region12: #{tpu_custom_call.1} parent=5 // pred_fallthru
        _
      %p277 = scmp.lt.s32.totalorder %s18, 2
      // Predicated region
      $region45: #{tpu_custom_call.1} parent=5 // pred_check
        %p278 = pneg %p277
      $region46: #{tpu_custom_call.1} parent=5 // pred_check_branch
        %280 = sbr.rel (%p278) target = $region48
      $region47: #{tpu_custom_call.1} parent=5 // pred_region
        // Predicated region
        $region49: #{tpu_custom_call.1} parent=47 // pred_check
          %p281 = pneg %p38
        $region50: #{tpu_custom_call.1} parent=47 // pred_check_branch
          %283 = sbr.rel (%p281) target = $region52
        $region51: #{tpu_custom_call.1} parent=47 // pred_region
          %p284 = scmp.lt.s32.totalorder %s18, 1
          %s285 = scalar_select %p284, %s18, 1
          %s286 = smul.addr %s285, 2
          %s287 = smul.addr %s286, 4
          %s288 = scalar_lea.vmem %s0, %s287
        $region52: #{tpu_custom_call.1} parent=47 // pred_fallthru
          _
      $region48: #{tpu_custom_call.1} parent=5 // pred_fallthru
        _
      %p289 = scmp.le.s32.totalorder 1, %s18
      %p290 = scmp.lt.s32.totalorder %s18, 3
      %p291 = pnand %p289, %p290
      %p292 = pneg %p291
      // Predicated region
      $region53: #{tpu_custom_call.1} parent=5 // pred_check
        _
      $region54: #{tpu_custom_call.1} parent=5 // pred_check_branch
        %294 = sbr.rel (%p291) target = $region56
      $region55: #{tpu_custom_call.1} parent=5 // pred_region
        %s295 = ssub.s32 %s18, 1
        %p296 = scmp.lt.s32.totalorder %s23, 1
        %s297 = scalar_select %p296, %s23, 1
        %s298 = smul.addr %s297, 2
        %s299 = smul.addr %s298, 4
        %s300 = scalar_lea.vmem %s0, %s299
        %p301 = pneg %p44
        %p302 = pneg %p41
        %p303 = pneg %p65
        %p304 = pneg %p62
        %p305 = pneg %p86
        %p306 = pneg %p83
        %p307 = pneg %p107
        %p308 = pneg %p104
        %p309 = pneg %p128
        %p310 = pneg %p125
        %p311 = pneg %p149
        %p312 = pneg %p146
        %p313 = pneg %p170
        %p314 = pneg %p167
        %p315 = pneg %p191
        %p316 = pneg %p188
        %p317 = pneg %p212
        %p318 = pneg %p209
        %p319 = pneg %p238
        %p320 = pneg %p235
        %s321 = sand.u32 %s225, 1
        %s322 = scalar_lea.sflag [#allocation4], %s321
        %s323 = sand.u32 %s225, 1
        %s324 = smul.addr %s323, 4
        %s325 = scalar_lea.vmem [#allocation3], %s324
        %p326 = scmp.lt.s32.totalorder %s23, 1
        %s327 = scalar_select %p326, %s23, 1
        %s328 = smul.addr %s327, 2
        %s329 = smul.addr %s328, 4
        %s330 = scalar_lea.vmem %s0, %s329
        %vm332 = vcmask 257024
        %333 = vst.msk [vmem:[#allocation2] sm:$0xf] %vm332, 0.0
        %v334 = vld [vmem:[%s330] sm:$0xff]
        %v335 = vld [vmem:[%s1] sm:$0xf]
        %v336 = vld [vmem:[%s1 + $0x4] sm:$0xf]
        %v337 = vld [vmem:[%s1 + $0x8] sm:$0xf]
        %v338 = vld [vmem:[%s1 + $0xc] sm:$0xf]
        %v339 = vld [vmem:[%s1 + $0x10] sm:$0xf]
        %v340 = vld [vmem:[%s1 + $0x14] sm:$0xf]
        %v341 = vld [vmem:[%s1 + $0x18] sm:$0xf]
        %v342 = vld [vmem:[%s1 + $0x1c] sm:$0xf]
        %v343 = vld [vmem:[%s1 + $0x20] sm:$0xf]
        %v344 = vld [vmem:[%s1 + $0x24] sm:$0xf]
        %v345 = vld [vmem:[%s1 + $0x28] sm:$0xf]
        %v346 = vld [vmem:[%s1 + $0x2c] sm:$0xf]
        %v347 = vld [vmem:[%s1 + $0x30] sm:$0xf]
        %v348 = vld [vmem:[%s1 + $0x34] sm:$0xf]
        %v349 = vld [vmem:[%s1 + $0x38] sm:$0xf]
        %v350 = vld [vmem:[%s1 + $0x3c] sm:$0xf]
        %v351 = vld [vmem:[%s1 + $0x40] sm:$0xf]
        %v352 = vld [vmem:[%s1 + $0x44] sm:$0xf]
        %v353 = vld [vmem:[%s1 + $0x48] sm:$0xf]
        %v354 = vld [vmem:[%s1 + $0x4c] sm:$0xf]
        %v355 = vld [vmem:[%s1 + $0x50] sm:$0xf]
        %v356 = vld [vmem:[%s1 + $0x54] sm:$0xf]
        %v357 = vld [vmem:[%s1 + $0x58] sm:$0xf]
        %v358 = vld [vmem:[%s1 + $0x5c] sm:$0xf]
        %v359 = vld [vmem:[%s1 + $0x60] sm:$0xf]
        %v360 = vld [vmem:[%s1 + $0x64] sm:$0xf]
        %v361 = vld [vmem:[%s1 + $0x68] sm:$0xf]
        %v362 = vld [vmem:[%s1 + $0x6c] sm:$0xf]
        %v363 = vld [vmem:[%s1 + $0x70] sm:$0xf]
        %v364 = vld [vmem:[%s1 + $0x74] sm:$0xf]
        %v365 = vld [vmem:[%s1 + $0x78] sm:$0xf]
        %v366 = vld [vmem:[%s1 + $0x7c] sm:$0xf]
        %v367 = vld [vmem:[#allocation2] sm:$0xf]
        %v369 = vcombine.high %v334, %v334
        %v403 = vunpack.c.l.b16 %v335
        %v404 = vunpack.c.l.b16 %v336
        %v405 = vunpack.c.l.b16 %v337
        %v406 = vunpack.c.l.b16 %v338
        %v407 = vunpack.c.l.b16 %v339
        %v408 = vunpack.c.l.b16 %v340
        %v409 = vunpack.c.l.b16 %v341
        %v410 = vunpack.c.l.b16 %v342
        %v411 = vunpack.c.l.b16 %v343
        %v412 = vunpack.c.l.b16 %v344
        %v413 = vunpack.c.l.b16 %v345
        %v414 = vunpack.c.l.b16 %v346
        %v415 = vunpack.c.l.b16 %v347
        %v416 = vunpack.c.l.b16 %v348
        %v417 = vunpack.c.l.b16 %v349
        %v418 = vunpack.c.l.b16 %v350
        %v419 = vunpack.c.l.b16 %v351
        %v420 = vunpack.c.l.b16 %v352
        %v421 = vunpack.c.l.b16 %v353
        %v422 = vunpack.c.l.b16 %v354
        %v423 = vunpack.c.l.b16 %v355
        %v424 = vunpack.c.l.b16 %v356
        %v425 = vunpack.c.l.b16 %v357
        %v426 = vunpack.c.l.b16 %v358
        %v427 = vunpack.c.l.b16 %v359
        %v428 = vunpack.c.l.b16 %v360
        %v429 = vunpack.c.l.b16 %v361
        %v430 = vunpack.c.l.b16 %v362
        %v431 = vunpack.c.l.b16 %v363
        %v432 = vunpack.c.l.b16 %v364
        %v433 = vunpack.c.l.b16 %v365
        %v434 = vunpack.c.l.b16 %v366
        %v435 = vpack.c.b16 %v404, %v403
        %v436 = vpack.c.b16 %v406, %v405
        %v437 = vpack.c.b16 %v408, %v407
        %v438 = vpack.c.b16 %v410, %v409
        %v439 = vpack.c.b16 %v412, %v411
        %v440 = vpack.c.b16 %v414, %v413
        %v441 = vpack.c.b16 %v416, %v415
        %v442 = vpack.c.b16 %v418, %v417
        %v443 = vpack.c.b16 %v420, %v419
        %v444 = vpack.c.b16 %v422, %v421
        %v445 = vpack.c.b16 %v424, %v423
        %v446 = vpack.c.b16 %v426, %v425
        %v447 = vpack.c.b16 %v428, %v427
        %v448 = vpack.c.b16 %v430, %v429
        %v449 = vpack.c.b16 %v432, %v431
        %v450 = vpack.c.b16 %v434, %v433
        %467 = vmatprep.subr.bf16.mxu0 0
        %468 = vmatpush1.bf16.msra.mxu0 %v435
        %469 = vmatprep.subr.bf16.mxu0 0
        %470 = vmatpush1.bf16.msra.mxu0 %v436
        %471 = vmatprep.subr.bf16.mxu0 0
        %472 = vmatpush1.bf16.msra.mxu0 %v437
        %473 = vmatprep.subr.bf16.mxu0 0
        %474 = vmatpush1.bf16.msra.mxu0 %v438
        %475 = vmatprep.subr.bf16.mxu0 0
        %476 = vmatpush1.bf16.msra.mxu0 %v439
        %477 = vmatprep.subr.bf16.mxu0 0
        %478 = vmatpush1.bf16.msra.mxu0 %v440
        %479 = vmatprep.subr.bf16.mxu0 0
        %480 = vmatpush1.bf16.msra.mxu0 %v441
        %481 = vmatprep.subr.bf16.mxu0 0
        %482 = vmatpush1.bf16.msra.mxu0 %v442
        %483 = vmatprep.subr.bf16.mxu0 0
        %484 = vmatpush1.bf16.msra.mxu0 %v443
        %485 = vmatprep.subr.bf16.mxu0 0
        %486 = vmatpush1.bf16.msra.mxu0 %v444
        %487 = vmatprep.subr.bf16.mxu0 0
        %488 = vmatpush1.bf16.msra.mxu0 %v445
        %489 = vmatprep.subr.bf16.mxu0 0
        %490 = vmatpush1.bf16.msra.mxu0 %v446
        %491 = vmatprep.subr.bf16.mxu0 0
        %492 = vmatpush1.bf16.msra.mxu0 %v447
        %493 = vmatprep.subr.bf16.mxu0 0
        %494 = vmatpush1.bf16.msra.mxu0 %v448
        %495 = vmatprep.subr.bf16.mxu0 0
        %496 = vmatpush1.bf16.msra.mxu0 %v449
        %497 = vmatprep.subr.bf16.mxu0 0
        %498 = vmatpush1.bf16.msra.mxu0 %v450
        %499 = vmatprep.mubr.f32.mxu0 %v369
        %500 = vmatmul.mubr.f32.gmra.mrb[0].mxu0 %v334
        %v501 = vpop.f32.mrb[0].mxu0
        %v502 = vadd.f32 0.0, %v501
        %v503 = vpop.f32.mrb[0].mxu0
        %504 = vdwg.mxu0
        %v505 = vadd.f32 %v367, %v502
        %506 = vst.msk [vmem:[#allocation2] sm:$0xf] %vm332, %v505
        %v507 = vld [vmem:[#allocation2] sm:$0xf]
        %v508 = vld [vmem:[%s2] sm:$0x1]
        %v510 = vlaneseq
        %v511 = vshrl.u32 %v510, 7
        %v512 = vsub.s32 0, %v511
        %v513 = vrot.slane %v508, %v512
        %v515 = vmul.f32 %v507, %v513
        %v516 = vld [vmem:[%s3] sm:$0xff]
        %v517 = vld [vmem:[%s4] sm:$0xff]
        %v518 = vld [vmem:[%s5] sm:$0xf]
        %v519 = vld [vmem:[%s6] sm:$0xf]
        %v520 = vld [vmem:[%s7] sm:$0xf]
        %v521 = vld [vmem:[%s8] sm:$0xf]
        %523 = vset.pattern.permute.xlu0 0
        %524 = vperm.xlu0 %523, %v517
        %v525 = vpop.permute.xlu0 %524
        %vm527 = vcmask 31744
        %v529 = vsel %vm527, %v516, 0
        %vm531 = vcmask 1043456
        %v533 = vsel %vm531, %v515, 0
        %535 = vmatprep.subr.mxu0 0.0
        %536 = vmatpush1.msra.mxu0 %v533
        %537 = vmatprep.subr.mxu0 0.0
        %538 = vmatpush1.msra.mxu0 0.0
        %539 = vmatprep.subr.mxu0 0.0
        %540 = vmatpush1.msra.mxu0 0.0
        %541 = vmatprep.subr.mxu0 0.0
        %542 = vmatpush1.msra.mxu0 0.0
        %543 = vmatprep.subr.mxu0 0.0
        %544 = vmatpush1.msra.mxu0 0.0
        %545 = vmatprep.subr.mxu0 0.0
        %546 = vmatpush1.msra.mxu0 0.0
        %547 = vmatprep.subr.mxu0 0.0
        %548 = vmatpush1.msra.mxu0 0.0
        %549 = vmatprep.subr.mxu0 0.0
        %550 = vmatpush1.msra.mxu0 0.0
        %551 = vmatprep.subr.mxu0 0.0
        %552 = vmatpush1.msra.mxu0 0.0
        %553 = vmatprep.subr.mxu0 0.0
        %554 = vmatpush1.msra.mxu0 0.0
        %555 = vmatprep.subr.mxu0 0.0
        %556 = vmatpush1.msra.mxu0 0.0
        %557 = vmatprep.subr.mxu0 0.0
        %558 = vmatpush1.msra.mxu0 0.0
        %559 = vmatprep.subr.mxu0 0.0
        %560 = vmatpush1.msra.mxu0 0.0
        %561 = vmatprep.subr.mxu0 0.0
        %562 = vmatpush1.msra.mxu0 0.0
        %563 = vmatprep.subr.mxu0 0.0
        %564 = vmatpush1.msra.mxu0 0.0
        %565 = vmatprep.subr.mxu0 0.0
        %566 = vmatpush1.msra.mxu0 0.0
        %567 = vmatprep.subr.mxu0 0.0
        %568 = vmatpush1.msra.mxu0 0.0
        %569 = vmatprep.subr.mxu0 0.0
        %570 = vmatpush1.msra.mxu0 0.0
        %571 = vmatprep.subr.mxu0 0.0
        %572 = vmatpush1.msra.mxu0 0.0
        %573 = vmatprep.subr.mxu0 0.0
        %574 = vmatpush1.msra.mxu0 0.0
        %575 = vmatprep.subr.mxu0 0.0
        %576 = vmatpush1.msra.mxu0 0.0
        %577 = vmatprep.subr.mxu0 0.0
        %578 = vmatpush1.msra.mxu0 0.0
        %579 = vmatprep.subr.mxu0 0.0
        %580 = vmatpush1.msra.mxu0 0.0
        %581 = vmatprep.subr.mxu0 0.0
        %582 = vmatpush1.msra.mxu0 0.0
        %583 = vmatprep.subr.mxu0 0.0
        %584 = vmatpush1.msra.mxu0 0.0
        %585 = vmatprep.subr.mxu0 0.0
        %586 = vmatpush1.msra.mxu0 0.0
        %587 = vmatprep.subr.mxu0 0.0
        %588 = vmatpush1.msra.mxu0 0.0
        %589 = vmatprep.subr.mxu0 0.0
        %590 = vmatpush1.msra.mxu0 0.0
        %591 = vmatprep.subr.mxu0 0.0
        %592 = vmatpush1.msra.mxu0 0.0
        %593 = vmatprep.subr.mxu0 0.0
        %594 = vmatpush1.msra.mxu0 0.0
        %595 = vmatprep.subr.mxu0 0.0
        %596 = vmatpush1.msra.mxu0 0.0
        %597 = vmatprep.subr.mxu0 0.0
        %598 = vmatpush1.msra.mxu0 0.0
        %599 = vmatprep.mubr.f32.mxu0 0.0
        %600 = vmatmul.mubr.f32.gmra.mrb[0].mxu0 %v529
        %v601 = vpop.f32.mrb[0].mxu0
        %v602 = vadd.f32 %v525, %v601
        %v603 = vpop.f32.mrb[0].mxu0
        %604 = vdwg.mxu0
        %v605 = vadd.f32 %v602, 3.0
        %v606 = vmax.f32 %v605, 0.0
        %v607 = vmin.f32 %v606, 6.0
        %v608 = vmul.f32 %v602, %v607
        %v609 = vmul.f32 %v608, 0.16666667
        %611 = vset.pattern.permute.xlu0 0
        %612 = vperm.xlu0 %611, %v519
        %v613 = vpop.permute.xlu0 %612
        %vm615 = vcmask 64512
        %v617 = vsel %vm615, %v518, 0
        %619 = vmatprep.subr.mxu0 0.0
        %620 = vmatpush1.msra.mxu0 %v609
        %621 = vmatprep.subr.mxu0 0.0
        %622 = vmatpush1.msra.mxu0 0.0
        %623 = vmatprep.subr.mxu0 0.0
        %624 = vmatpush1.msra.mxu0 0.0
        %625 = vmatprep.subr.mxu0 0.0
        %626 = vmatpush1.msra.mxu0 0.0
        %627 = vmatprep.subr.mxu0 0.0
        %628 = vmatpush1.msra.mxu0 0.0
        %629 = vmatprep.subr.mxu0 0.0
        %630 = vmatpush1.msra.mxu0 0.0
        %631 = vmatprep.subr.mxu0 0.0
        %632 = vmatpush1.msra.mxu0 0.0
        %633 = vmatprep.subr.mxu0 0.0
        %634 = vmatpush1.msra.mxu0 0.0
        %635 = vmatprep.subr.mxu0 0.0
        %636 = vmatpush1.msra.mxu0 0.0
        %637 = vmatprep.subr.mxu0 0.0
        %638 = vmatpush1.msra.mxu0 0.0
        %639 = vmatprep.subr.mxu0 0.0
        %640 = vmatpush1.msra.mxu0 0.0
        %641 = vmatprep.subr.mxu0 0.0
        %642 = vmatpush1.msra.mxu0 0.0
        %643 = vmatprep.subr.mxu0 0.0
        %644 = vmatpush1.msra.mxu0 0.0
        %645 = vmatprep.subr.mxu0 0.0
        %646 = vmatpush1.msra.mxu0 0.0
        %647 = vmatprep.subr.mxu0 0.0
        %648 = vmatpush1.msra.mxu0 0.0
        %649 = vmatprep.subr.mxu0 0.0
        %650 = vmatpush1.msra.mxu0 0.0
        %651 = vmatprep.subr.mxu0 0.0
        %652 = vmatpush1.msra.mxu0 0.0
        %653 = vmatprep.subr.mxu0 0.0
        %654 = vmatpush1.msra.mxu0 0.0
        %655 = vmatprep.subr.mxu0 0.0
        %656 = vmatpush1.msra.mxu0 0.0
        %657 = vmatprep.subr.mxu0 0.0
        %658 = vmatpush1.msra.mxu0 0.0
        %659 = vmatprep.subr.mxu0 0.0
        %660 = vmatpush1.msra.mxu0 0.0
        %661 = vmatprep.subr.mxu0 0.0
        %662 = vmatpush1.msra.mxu0 0.0
        %663 = vmatprep.subr.mxu0 0.0
        %664 = vmatpush1.msra.mxu0 0.0
        %665 = vmatprep.subr.mxu0 0.0
        %666 = vmatpush1.msra.mxu0 0.0
        %667 = vmatprep.subr.mxu0 0.0
        %668 = vmatpush1.msra.mxu0 0.0
        %669 = vmatprep.subr.mxu0 0.0
        %670 = vmatpush1.msra.mxu0 0.0
        %671 = vmatprep.subr.mxu0 0.0
        %672 = vmatpush1.msra.mxu0 0.0
        %673 = vmatprep.subr.mxu0 0.0
        %674 = vmatpush1.msra.mxu0 0.0
        %675 = vmatprep.subr.mxu0 0.0
        %676 = vmatpush1.msra.mxu0 0.0
        %677 = vmatprep.subr.mxu0 0.0
        %678 = vmatpush1.msra.mxu0 0.0
        %679 = vmatprep.subr.mxu0 0.0
        %680 = vmatpush1.msra.mxu0 0.0
        %681 = vmatprep.subr.mxu0 0.0
        %682 = vmatpush1.msra.mxu0 0.0
        %683 = vmatprep.mubr.f32.mxu0 0.0
        %684 = vmatmul.mubr.f32.gmra.mrb[0].mxu0 %v617
        %v685 = vpop.f32.mrb[0].mxu0
        %v686 = vadd.f32 %v613, %v685
        %v687 = vpop.f32.mrb[0].mxu0
        %688 = vdwg.mxu0
        %v689 = vsub.f32 0.0, %v686
        %v690 = vmul.f32 %v689, 1.442695
        %v691 = vpow.pop %v690
        %v692 = vadd.f32 %v691, 1.0
        %v693 = vrcp.pop %v692
        %v694 = vmul.f32 1.0, %v693
        %696 = vset.pattern.permute.xlu0 0
        %697 = vperm.xlu0 %696, %v521
        %v698 = vpop.permute.xlu0 %697
        %701 = vrot.lane.b32.xlu0 %v609, 112
        %v702 = vpop.permute.xlu0 %701
        %v705 = vsel %vm615, %v520, 0
        %707 = vmatprep.subr.mxu0 0.0
        %708 = vmatpush1.msra.mxu0 %v702
        %709 = vmatprep.subr.mxu0 0.0
        %710 = vmatpush1.msra.mxu0 0.0
        %711 = vmatprep.subr.mxu0 0.0
        %712 = vmatpush1.msra.mxu0 0.0
        %713 = vmatprep.subr.mxu0 0.0
        %714 = vmatpush1.msra.mxu0 0.0
        %715 = vmatprep.subr.mxu0 0.0
        %716 = vmatpush1.msra.mxu0 0.0
        %717 = vmatprep.subr.mxu0 0.0
        %718 = vmatpush1.msra.mxu0 0.0
        %719 = vmatprep.subr.mxu0 0.0
        %720 = vmatpush1.msra.mxu0 0.0
        %721 = vmatprep.subr.mxu0 0.0
        %722 = vmatpush1.msra.mxu0 0.0
        %723 = vmatprep.subr.mxu0 0.0
        %724 = vmatpush1.msra.mxu0 0.0
        %725 = vmatprep.subr.mxu0 0.0
        %726 = vmatpush1.msra.mxu0 0.0
        %727 = vmatprep.subr.mxu0 0.0
        %728 = vmatpush1.msra.mxu0 0.0
        %729 = vmatprep.subr.mxu0 0.0
        %730 = vmatpush1.msra.mxu0 0.0
        %731 = vmatprep.subr.mxu0 0.0
        %732 = vmatpush1.msra.mxu0 0.0
        %733 = vmatprep.subr.mxu0 0.0
        %734 = vmatpush1.msra.mxu0 0.0
        %735 = vmatprep.subr.mxu0 0.0
        %736 = vmatpush1.msra.mxu0 0.0
        %737 = vmatprep.subr.mxu0 0.0
        %738 = vmatpush1.msra.mxu0 0.0
        %739 = vmatprep.subr.mxu0 0.0
        %740 = vmatpush1.msra.mxu0 0.0
        %741 = vmatprep.subr.mxu0 0.0
        %742 = vmatpush1.msra.mxu0 0.0
        %743 = vmatprep.subr.mxu0 0.0
        %744 = vmatpush1.msra.mxu0 0.0
        %745 = vmatprep.subr.mxu0 0.0
        %746 = vmatpush1.msra.mxu0 0.0
        %747 = vmatprep.subr.mxu0 0.0
        %748 = vmatpush1.msra.mxu0 0.0
        %749 = vmatprep.subr.mxu0 0.0
        %750 = vmatpush1.msra.mxu0 0.0
        %751 = vmatprep.subr.mxu0 0.0
        %752 = vmatpush1.msra.mxu0 0.0
        %753 = vmatprep.subr.mxu0 0.0
        %754 = vmatpush1.msra.mxu0 0.0
        %755 = vmatprep.subr.mxu0 0.0
        %756 = vmatpush1.msra.mxu0 0.0
        %757 = vmatprep.subr.mxu0 0.0
        %758 = vmatpush1.msra.mxu0 0.0
        %759 = vmatprep.subr.mxu0 0.0
        %760 = vmatpush1.msra.mxu0 0.0
        %761 = vmatprep.subr.mxu0 0.0
        %762 = vmatpush1.msra.mxu0 0.0
        %763 = vmatprep.subr.mxu0 0.0
        %764 = vmatpush1.msra.mxu0 0.0
        %765 = vmatprep.subr.mxu0 0.0
        %766 = vmatpush1.msra.mxu0 0.0
        %767 = vmatprep.subr.mxu0 0.0
        %768 = vmatpush1.msra.mxu0 0.0
        %769 = vmatprep.subr.mxu0 0.0
        %770 = vmatpush1.msra.mxu0 0.0
        %771 = vmatprep.mubr.f32.mxu0 0.0
        %772 = vmatmul.mubr.f32.gmra.mrb[0].mxu0 %v705
        %v773 = vpop.f32.mrb[0].mxu0
        %v774 = vadd.f32 %v698, %v773
        %v775 = vpop.f32.mrb[0].mxu0
        %776 = vdwg.mxu0
        %v777 = vsub.f32 0.0, %v774
        %v778 = vmul.f32 %v777, 1.442695
        %v779 = vpow.pop %v778
        %v780 = vadd.f32 %v779, 1.0
        %v781 = vrcp.pop %v780
        %v782 = vmul.f32 1.0, %v781
        %vm783 = vcmask 125952
        %784 = vst.msk [vmem:[%s325] sm:$0xf] %vm783, %v694
        %786 = vrot.lane.b32.xlu0 %v782, 16
        %v787 = vpop.permute.xlu0 %786
        %vm789 = vcmask 257152
        %790 = vst.msk [vmem:[%s325] sm:$0xf] %vm789, %v787
        %s791 = sand.u32 %s225, 1
        %s792 = scalar_lea.sflag [#allocation4], %s791
        %s793 = sand.u32 %s225, 1
        %s794 = smul.addr %s793, 4
        %s795 = scalar_lea.vmem [#allocation3], %s794
        // Predicated region
        $region57: #{tpu_custom_call.1} parent=55 // pred_check
          %p796 = pneg %p235
        $region58: #{tpu_custom_call.1} parent=55 // pred_check_branch
          %798 = sbr.rel (%p796) target = $region60
        $region59: #{tpu_custom_call.1} parent=55 // pred_region
          %s800 = ssub.s32 64, 64
          %801 = vsyncadd %s792, %s800
          %s802 = smul.addr %s23, 64
          %s803 = scalar_lea.hbm %s9, %s802
          %s805 = sshll.u32 %s795, 4
          %s806 = int_to_ptr.vmem [resolvable:$true] %s805
          %808 = dma.vmem_to_hbm [thread:$0]  %s806, 64, %s803, %s792
        $region60: #{tpu_custom_call.1} parent=55 // pred_fallthru
          _
      $region56: #{tpu_custom_call.1} parent=5 // pred_fallthru
        _
      %p809 = scmp.le.s32.totalorder 2, %s18
      // Predicated region
      $region61: #{tpu_custom_call.1} parent=5 // pred_check
        %p810 = pneg %p809
      $region62: #{tpu_custom_call.1} parent=5 // pred_check_branch
        %812 = sbr.rel (%p810) target = $region64
      $region63: #{tpu_custom_call.1} parent=5 // pred_region
        %s813 = ssub.s32 %s18, 2
        // Predicated region
        $region65: #{tpu_custom_call.1} parent=63 // pred_check
          %p814 = pneg %p241
        $region66: #{tpu_custom_call.1} parent=63 // pred_check_branch
          %816 = sbr.rel (%p814) target = $region68
        $region67: #{tpu_custom_call.1} parent=63 // pred_region
          %s817 = sand.u32 %s226, 1
          %s818 = scalar_lea.sflag [#allocation4], %s817
          %s819 = sand.u32 %s226, 1
          %s820 = smul.addr %s819, 4
          %s821 = scalar_lea.vmem [#allocation3], %s820
          %822 = dma.done %s818, 64
        $region68: #{tpu_custom_call.1} parent=63 // pred_fallthru
          _
      $region64: #{tpu_custom_call.1} parent=5 // pred_fallthru
        _
    $region6: #{tpu_custom_call.1} parent=1 // loop_footer
      %s22 = sadd.s32 1, %s18
    $region7: #{tpu_custom_call.1} parent=1 // loop_footer_branch
      %17 = sbr.rel target = $region3
    $region8: #{tpu_custom_call.1} parent=1 // loop_exit
      _
    %823 = vsyncpa [#allocation4], 1
    %s824 = scalar_lea.sflag [#allocation4], 1
    %825 = vsyncpa %s824, 1

// kernel: tpu_custom_call.1
$region0: #{tpu_custom_call.1}
  #allocation0 [shape = 'u32[]', space=smem, size = 0x4, offset = 0x4, fixed_abs, tag = 'smem constant byte address 0x4 - core index']
  #allocation1 [shape = 'u32[144,128]{1,0:T(1,128)}', space=vmem, size = 0x12000, scoped, tag = 'internal scratch']
  #allocation2 [shape = 'f32[4,32]{1,0:T(4,128)}', space=vmem, size = 0x800, scoped, tag = 'scratch operand']
  %s0 = inlined_call_operand.vmem [shape: f32[2,4,256], index: 0, kind: input, shape index: {}]
  %s1 = inlined_call_operand.vmem [shape: bf16[256,32], index: 1, kind: input, shape index: {}]
  %s2 = inlined_call_operand.vmem [shape: f32[1,32], index: 2, kind: input, shape index: {}]
  %s3 = inlined_call_operand.vmem [shape: f32[8,4], index: 3, kind: input, shape index: {}]
  %s4 = inlined_call_operand.vmem [shape: f32[8,1], index: 4, kind: input, shape index: {}]
  %s5 = inlined_call_operand.vmem [shape: f32[4,8], index: 5, kind: input, shape index: {}]
  %s6 = inlined_call_operand.vmem [shape: f32[4,1], index: 6, kind: input, shape index: {}]
  %s7 = inlined_call_operand.vmem [shape: f32[4,8], index: 7, kind: input, shape index: {}]
  %s8 = inlined_call_operand.vmem [shape: f32[4,1], index: 8, kind: input, shape index: {}]
  %s9 = inlined_call_operand.hbm [shape: f32[2,4,32], index: 9, kind: output, shape index: {}]
  %s10 = sld [smem:[#allocation0]]
  $region69: #{tpu_custom_call.1} parent=0
    _
  %s12 = ssub.s32 1, %s10
  %s13 = scalar_select 0, %s12, %s10
  $region1: #{tpu_custom_call.1} parent=0
    #allocation3 [shape = 'u8[4096]{0}', space=vmem, size = 0x1000, scoped, tag = 'output window, operand 0']
    #allocation4 [shape = 's32[2]{0}', space=sflag, size = 0x8, scoped, tag = 'scoped memory for tpu_custom_call.1']
    %14 = vsyncpa [#allocation4], 0
    %s15 = scalar_lea.sflag [#allocation4], 1
    %16 = vsyncpa %s15, 0
    loop: start=0, step=1, limit=4
    $region2: #{tpu_custom_call.1} parent=1 // loop_pre_header
      _
    $region3: #{tpu_custom_call.1} parent=1 // loop_header
      %s18 = sphi 0, %s22
      %p19 = scmp.ge.s32.totalorder %s18, 4
      %s28 = sphi 0, %s30
      %s31 = sphi 0, %s28
      %s32 = sphi 0, %s31
      %s48 = sphi 0, %s32
      %s52 = sphi 0, %s52
      %s54 = sphi 0, %s52
      %s55 = sphi 0, %s54
      %s69 = sphi 0, %s55
      %s73 = sphi 0, %s73
      %s75 = sphi 0, %s73
      %s76 = sphi 0, %s75
      %s90 = sphi 0, %s76
      %s94 = sphi 0, %s94
      %s96 = sphi 0, %s94
      %s97 = sphi 0, %s96
      %s111 = sphi 0, %s97
      %s115 = sphi 0, %s115
      %s117 = sphi 0, %s115
      %s118 = sphi 0, %s117
      %s132 = sphi 0, %s118
      %s136 = sphi 0, %s136
      %s138 = sphi 0, %s136
      %s139 = sphi 0, %s138
      %s153 = sphi 0, %s139
      %s157 = sphi 0, %s157
      %s159 = sphi 0, %s157
      %s160 = sphi 0, %s159
      %s174 = sphi 0, %s160
      %s178 = sphi 0, %s178
      %s180 = sphi 0, %s178
      %s181 = sphi 0, %s180
      %s195 = sphi 0, %s181
      %s199 = sphi 0, %s199
      %s201 = sphi 0, %s199
      %s202 = sphi 0, %s201
      %s216 = sphi 0, %s202
      %s222 = sphi 0, %s224
      %s225 = sphi 0, %s222
      %s226 = sphi 0, %s225
      %s242 = sphi 0, %s226
    $region4: #{tpu_custom_call.1} parent=1 // loop_header_branch
      %21 = sbr.rel (%p19) target = $region8
    $region5: #{tpu_custom_call.1} parent=1 // loop_body
      %s23 = ssub.s32 %s18, 1
      %s24 = ssub.s32 %s18, 2
      %s25 = sadd.s32 %s18, 1
      %s26 = ssub.s32 %s18, %s25
      %p27 = scmp.eq.s32.totalorder %s26, 0
      %s29 = sadd.s32 %s28, 1
      %s30 = scalar_select %p27, %s28, %s29
      %p33 = pneg %p27
      %p34 = scmp.eq.s32.totalorder %s18, 1
      %p35 = por %p33, %p34
      %p36 = scmp.ne.s32.totalorder %s28, %s31
      %p37 = scmp.eq.s32.totalorder %s18, 0
      %p38 = por %p36, %p37
      %p39 = scmp.ne.s32.totalorder %s28, %s31
      %p40 = scmp.eq.s32.totalorder %s23, 1
      %p41 = por %p39, %p40
      %p42 = scmp.ne.s32.totalorder %s31, %s32
      %p43 = scmp.eq.s32.totalorder %s23, 0
      %p44 = por %p42, %p43
      %p45 = scmp.ne.s32.totalorder %s31, %s32
      %p46 = scmp.eq.s32.totalorder %s24, 1
      %p47 = por %p45, %p46
      %p49 = scmp.ne.s32.totalorder %s32, %s48
      %p50 = scmp.eq.s32.totalorder %s24, 0
      %p51 = por %p49, %p50
      %s53 = sadd.s32 %s52, 1
      %p56 = scmp.eq.s32.totalorder %s18, 1
      %p57 = scmp.ne.s32.totalorder %s52, %s54
      %p58 = scmp.eq.s32.totalorder %s18, 0
      %p59 = por %p57, %p58
      %p60 = scmp.ne.s32.totalorder %s52, %s54
      %p61 = scmp.eq.s32.totalorder %s23, 1
      %p62 = por %p60, %p61
      %p63 = scmp.ne.s32.totalorder %s54, %s55
      %p64 = scmp.eq.s32.totalorder %s23, 0
      %p65 = por %p63, %p64
      %p66 = scmp.ne.s32.totalorder %s54, %s55
      %p67 = scmp.eq.s32.totalorder %s24, 1
      %p68 = por %p66, %p67
      %p70 = scmp.ne.s32.totalorder %s55, %s69
      %p71 = scmp.eq.s32.totalorder %s24, 0
      %p72 = por %p70, %p71
      %s74 = sadd.s32 %s73, 1
      %p77 = scmp.eq.s32.totalorder %s18, 1
      %p78 = scmp.ne.s32.totalorder %s73, %s75
      %p79 = scmp.eq.s32.totalorder %s18, 0
      %p80 = por %p78, %p79
      %p81 = scmp.ne.s32.totalorder %s73, %s75
      %p82 = scmp.eq.s32.totalorder %s23, 1
      %p83 = por %p81, %p82
      %p84 = scmp.ne.s32.totalorder %s75, %s76
      %p85 = scmp.eq.s32.totalorder %s23, 0
      %p86 = por %p84, %p85
      %p87 = scmp.ne.s32.totalorder %s75, %s76
      %p88 = scmp.eq.s32.totalorder %s24, 1
      %p89 = por %p87, %p88
      %p91 = scmp.ne.s32.totalorder %s76, %s90
      %p92 = scmp.eq.s32.totalorder %s24, 0
      %p93 = por %p91, %p92
      %s95 = sadd.s32 %s94, 1
      %p98 = scmp.eq.s32.totalorder %s18, 1
      %p99 = scmp.ne.s32.totalorder %s94, %s96
      %p100 = scmp.eq.s32.totalorder %s18, 0
      %p101 = por %p99, %p100
      %p102 = scmp.ne.s32.totalorder %s94, %s96
      %p103 = scmp.eq.s32.totalorder %s23, 1
      %p104 = por %p102, %p103
      %p105 = scmp.ne.s32.totalorder %s96, %s97
      %p106 = scmp.eq.s32.totalorder %s23, 0
      %p107 = por %p105, %p106
      %p108 = scmp.ne.s32.totalorder %s96, %s97
      %p109 = scmp.eq.s32.totalorder %s24, 1
      %p110 = por %p108, %p109
      %p112 = scmp.ne.s32.totalorder %s97, %s111
      %p113 = scmp.eq.s32.totalorder %s24, 0
      %p114 = por %p112, %p113
      %s116 = sadd.s32 %s115, 1
      %p119 = scmp.eq.s32.totalorder %s18, 1
      %p120 = scmp.ne.s32.totalorder %s115, %s117
      %p121 = scmp.eq.s32.totalorder %s18, 0
      %p122 = por %p120, %p121
      %p123 = scmp.ne.s32.totalorder %s115, %s117
      %p124 = scmp.eq.s32.totalorder %s23, 1
      %p125 = por %p123, %p124
      %p126 = scmp.ne.s32.totalorder %s117, %s118
      %p127 = scmp.eq.s32.totalorder %s23, 0
      %p128 = por %p126, %p127
      %p129 = scmp.ne.s32.totalorder %s117, %s118
      %p130 = scmp.eq.s32.totalorder %s24, 1
      %p131 = por %p129, %p130
      %p133 = scmp.ne.s32.totalorder %s118, %s132
      %p134 = scmp.eq.s32.totalorder %s24, 0
      %p135 = por %p133, %p134
      %s137 = sadd.s32 %s136, 1
      %p140 = scmp.eq.s32.totalorder %s18, 1
      %p141 = scmp.ne.s32.totalorder %s136, %s138
      %p142 = scmp.eq.s32.totalorder %s18, 0
      %p143 = por %p141, %p142
      %p144 = scmp.ne.s32.totalorder %s136, %s138
      %p145 = scmp.eq.s32.totalorder %s23, 1
      %p146 = por %p144, %p145
      %p147 = scmp.ne.s32.totalorder %s138, %s139
      %p148 = scmp.eq.s32.totalorder %s23, 0
      %p149 = por %p147, %p148
      %p150 = scmp.ne.s32.totalorder %s138, %s139
      %p151 = scmp.eq.s32.totalorder %s24, 1
      %p152 = por %p150, %p151
      %p154 = scmp.ne.s32.totalorder %s139, %s153
      %p155 = scmp.eq.s32.totalorder %s24, 0
      %p156 = por %p154, %p155
      %s158 = sadd.s32 %s157, 1
      %p161 = scmp.eq.s32.totalorder %s18, 1
      %p162 = scmp.ne.s32.totalorder %s157, %s159
      %p163 = scmp.eq.s32.totalorder %s18, 0
      %p164 = por %p162, %p163
      %p165 = scmp.ne.s32.totalorder %s157, %s159
      %p166 = scmp.eq.s32.totalorder %s23, 1
      %p167 = por %p165, %p166
      %p168 = scmp.ne.s32.totalorder %s159, %s160
      %p169 = scmp.eq.s32.totalorder %s23, 0
      %p170 = por %p168, %p169
      %p171 = scmp.ne.s32.totalorder %s159, %s160
      %p172 = scmp.eq.s32.totalorder %s24, 1
      %p173 = por %p171, %p172
      %p175 = scmp.ne.s32.totalorder %s160, %s174
      %p176 = scmp.eq.s32.totalorder %s24, 0
      %p177 = por %p175, %p176
      %s179 = sadd.s32 %s178, 1
      %p182 = scmp.eq.s32.totalorder %s18, 1
      %p183 = scmp.ne.s32.totalorder %s178, %s180
      %p184 = scmp.eq.s32.totalorder %s18, 0
      %p185 = por %p183, %p184
      %p186 = scmp.ne.s32.totalorder %s178, %s180
      %p187 = scmp.eq.s32.totalorder %s23, 1
      %p188 = por %p186, %p187
      %p189 = scmp.ne.s32.totalorder %s180, %s181
      %p190 = scmp.eq.s32.totalorder %s23, 0
      %p191 = por %p189, %p190
      %p192 = scmp.ne.s32.totalorder %s180, %s181
      %p193 = scmp.eq.s32.totalorder %s24, 1
      %p194 = por %p192, %p193
      %p196 = scmp.ne.s32.totalorder %s181, %s195
      %p197 = scmp.eq.s32.totalorder %s24, 0
      %p198 = por %p196, %p197
      %s200 = sadd.s32 %s199, 1
      %p203 = scmp.eq.s32.totalorder %s18, 1
      %p204 = scmp.ne.s32.totalorder %s199, %s201
      %p205 = scmp.eq.s32.totalorder %s18, 0
      %p206 = por %p204, %p205
      %p207 = scmp.ne.s32.totalorder %s199, %s201
      %p208 = scmp.eq.s32.totalorder %s23, 1
      %p209 = por %p207, %p208
      %p210 = scmp.ne.s32.totalorder %s201, %s202
      %p211 = scmp.eq.s32.totalorder %s23, 0
      %p212 = por %p210, %p211
      %p213 = scmp.ne.s32.totalorder %s201, %s202
      %p214 = scmp.eq.s32.totalorder %s24, 1
      %p215 = por %p213, %p214
      %p217 = scmp.ne.s32.totalorder %s202, %s216
      %p218 = scmp.eq.s32.totalorder %s24, 0
      %p219 = por %p217, %p218
      %s220 = ssub.s32 %s18, %s25
      %p221 = scmp.eq.s32.totalorder %s220, 0
      %s223 = sadd.s32 %s222, 1
      %s224 = scalar_select %p221, %s222, %s223
      %p227 = pneg %p221
      %p228 = scmp.eq.s32.totalorder %s18, 1
      %p229 = por %p227, %p228
      %p230 = scmp.ne.s32.totalorder %s222, %s225
      %p231 = scmp.eq.s32.totalorder %s18, 0
      %p232 = por %p230, %p231
      %p233 = scmp.ne.s32.totalorder %s222, %s225
      %p234 = scmp.eq.s32.totalorder %s23, 1
      %p235 = por %p233, %p234
      %p236 = scmp.ne.s32.totalorder %s225, %s226
      %p237 = scmp.eq.s32.totalorder %s23, 0
      %p238 = por %p236, %p237
      %p239 = scmp.ne.s32.totalorder %s225, %s226
      %p240 = scmp.eq.s32.totalorder %s24, 1
      %p241 = por %p239, %p240
      %p243 = scmp.ne.s32.totalorder %s226, %s242
      %p244 = scmp.eq.s32.totalorder %s24, 0
      %p245 = por %p243, %p244
      %p246 = scmp.le.s32.totalorder 1, %s18
      %p247 = scmp.lt.s32.totalorder %s18, 3
      %p248 = pnand %p246, %p247
      %p249 = pneg %p248
      // Predicated region
      $region9: #{tpu_custom_call.1} parent=5 // pred_check
        _
      $region10: #{tpu_custom_call.1} parent=5 // pred_check_branch
        %251 = sbr.rel (%p248) target = $region12
      $region11: #{tpu_custom_call.1} parent=5 // pred_region
        %s252 = ssub.s32 %s18, 1
        // Predicated region
        $region13: #{tpu_custom_call.1} parent=11 // pred_check
          %p253 = pneg %p65
        $region14: #{tpu_custom_call.1} parent=11 // pred_check_branch
          %255 = sbr.rel (%p253) target = $region16
        $region15: #{tpu_custom_call.1} parent=11 // pred_region
          _
        $region16: #{tpu_custom_call.1} parent=11 // pred_fallthru
          _
        // Predicated region
        $region17: #{tpu_custom_call.1} parent=11 // pred_check
          %p256 = pneg %p86
        $region18: #{tpu_custom_call.1} parent=11 // pred_check_branch
          %258 = sbr.rel (%p256) target = $region20
        $region19: #{tpu_custom_call.1} parent=11 // pred_region
          _
        $region20: #{tpu_custom_call.1} parent=11 // pred_fallthru
          _
        // Predicated region
        $region21: #{tpu_custom_call.1} parent=11 // pred_check
          %p259 = pneg %p107
        $region22: #{tpu_custom_call.1} parent=11 // pred_check_branch
          %261 = sbr.rel (%p259) target = $region24
        $region23: #{tpu_custom_call.1} parent=11 // pred_region
          _
        $region24: #{tpu_custom_call.1} parent=11 // pred_fallthru
          _
        // Predicated region
        $region25: #{tpu_custom_call.1} parent=11 // pred_check
          %p262 = pneg %p128
        $region26: #{tpu_custom_call.1} parent=11 // pred_check_branch
          %264 = sbr.rel (%p262) target = $region28
        $region27: #{tpu_custom_call.1} parent=11 // pred_region
          _
        $region28: #{tpu_custom_call.1} parent=11 // pred_fallthru
          _
        // Predicated region
        $region29: #{tpu_custom_call.1} parent=11 // pred_check
          %p265 = pneg %p149
        $region30: #{tpu_custom_call.1} parent=11 // pred_check_branch
          %267 = sbr.rel (%p265) target = $region32
        $region31: #{tpu_custom_call.1} parent=11 // pred_region
          _
        $region32: #{tpu_custom_call.1} parent=11 // pred_fallthru
          _
        // Predicated region
        $region33: #{tpu_custom_call.1} parent=11 // pred_check
          %p268 = pneg %p170
        $region34: #{tpu_custom_call.1} parent=11 // pred_check_branch
          %270 = sbr.rel (%p268) target = $region36
        $region35: #{tpu_custom_call.1} parent=11 // pred_region
          _
        $region36: #{tpu_custom_call.1} parent=11 // pred_fallthru
          _
        // Predicated region
        $region37: #{tpu_custom_call.1} parent=11 // pred_check
          %p271 = pneg %p191
        $region38: #{tpu_custom_call.1} parent=11 // pred_check_branch
          %273 = sbr.rel (%p271) target = $region40
        $region39: #{tpu_custom_call.1} parent=11 // pred_region
          _
        $region40: #{tpu_custom_call.1} parent=11 // pred_fallthru
          _
        // Predicated region
        $region41: #{tpu_custom_call.1} parent=11 // pred_check
          %p274 = pneg %p212
        $region42: #{tpu_custom_call.1} parent=11 // pred_check_branch
          %276 = sbr.rel (%p274) target = $region44
        $region43: #{tpu_custom_call.1} parent=11 // pred_region
          _
        $region44: #{tpu_custom_call.1} parent=11 // pred_fallthru
          _
      $region12: #{tpu_custom_call.1} parent=5 // pred_fallthru
        _
      %p277 = scmp.lt.s32.totalorder %s18, 2
      // Predicated region
      $region45: #{tpu_custom_call.1} parent=5 // pred_check
        %p278 = pneg %p277
      $region46: #{tpu_custom_call.1} parent=5 // pred_check_branch
        %280 = sbr.rel (%p278) target = $region48
      $region47: #{tpu_custom_call.1} parent=5 // pred_region
        // Predicated region
        $region49: #{tpu_custom_call.1} parent=47 // pred_check
          %p281 = pneg %p38
        $region50: #{tpu_custom_call.1} parent=47 // pred_check_branch
          %283 = sbr.rel (%p281) target = $region52
        $region51: #{tpu_custom_call.1} parent=47 // pred_region
          %p284 = scmp.lt.s32.totalorder %s18, 1
          %s285 = scalar_select %p284, %s18, 1
          %s286 = smul.addr %s285, 2
          %s287 = smul.addr %s286, 4
          %s288 = scalar_lea.vmem %s0, %s287
        $region52: #{tpu_custom_call.1} parent=47 // pred_fallthru
          _
      $region48: #{tpu_custom_call.1} parent=5 // pred_fallthru
        _
      %p289 = scmp.le.s32.totalorder 1, %s18
      %p290 = scmp.lt.s32.totalorder %s18, 3
      %p291 = pnand %p289, %p290
      %p292 = pneg %p291
      // Predicated region
      $region53: #{tpu_custom_call.1} parent=5 // pred_check
        _
      $region54: #{tpu_custom_call.1} parent=5 // pred_check_branch
        %294 = sbr.rel (%p291) target = $region56
      $region55: #{tpu_custom_call.1} parent=5 // pred_region
        %s295 = ssub.s32 %s18, 1
        %p296 = scmp.lt.s32.totalorder %s23, 1
        %s297 = scalar_select %p296, %s23, 1
        %s298 = smul.addr %s297, 2
        %s299 = smul.addr %s298, 4
        %s300 = scalar_lea.vmem %s0, %s299
        %p301 = pneg %p44
        %p302 = pneg %p41
        %p303 = pneg %p65
        %p304 = pneg %p62
        %p305 = pneg %p86
        %p306 = pneg %p83
        %p307 = pneg %p107
        %p308 = pneg %p104
        %p309 = pneg %p128
        %p310 = pneg %p125
        %p311 = pneg %p149
        %p312 = pneg %p146
        %p313 = pneg %p170
        %p314 = pneg %p167
        %p315 = pneg %p191
        %p316 = pneg %p188
        %p317 = pneg %p212
        %p318 = pneg %p209
        %p319 = pneg %p238
        %p320 = pneg %p235
        %s321 = sand.u32 %s225, 1
        %s322 = scalar_lea.sflag [#allocation4], %s321
        %s323 = sand.u32 %s225, 1
        %s324 = smul.addr %s323, 4
        %s325 = scalar_lea.vmem [#allocation3], %s324
        %p326 = scmp.lt.s32.totalorder %s23, 1
        %s327 = scalar_select %p326, %s23, 1
        %s328 = smul.addr %s327, 2
        %s329 = smul.addr %s328, 4
        %s330 = scalar_lea.vmem %s0, %s329
        %vm332 = vcmask 257024
        %333 = vst.msk [vmem:[#allocation2] sm:$0xf] %vm332, 0.0
        %v334 = vld [vmem:[%s330] sm:$0xff]
        %v335 = vld [vmem:[%s1] sm:$0xf]
        %v336 = vld [vmem:[%s1 + $0x4] sm:$0xf]
        %v337 = vld [vmem:[%s1 + $0x8] sm:$0xf]
        %v338 = vld [vmem:[%s1 + $0xc] sm:$0xf]
        %v339 = vld [vmem:[%s1 + $0x10] sm:$0xf]
        %v340 = vld [vmem:[%s1 + $0x14] sm:$0xf]
        %v341 = vld [vmem:[%s1 + $0x18] sm:$0xf]
        %v342 = vld [vmem:[%s1 + $0x1c] sm:$0xf]
        %v343 = vld [vmem:[%s1 + $0x20] sm:$0xf]
        %v344 = vld [vmem:[%s1 + $0x24] sm:$0xf]
        %v345 = vld [vmem:[%s1 + $0x28] sm:$0xf]
        %v346 = vld [vmem:[%s1 + $0x2c] sm:$0xf]
        %v347 = vld [vmem:[%s1 + $0x30] sm:$0xf]
        %v348 = vld [vmem:[%s1 + $0x34] sm:$0xf]
        %v349 = vld [vmem:[%s1 + $0x38] sm:$0xf]
        %v350 = vld [vmem:[%s1 + $0x3c] sm:$0xf]
        %v351 = vld [vmem:[%s1 + $0x40] sm:$0xf]
        %v352 = vld [vmem:[%s1 + $0x44] sm:$0xf]
        %v353 = vld [vmem:[%s1 + $0x48] sm:$0xf]
        %v354 = vld [vmem:[%s1 + $0x4c] sm:$0xf]
        %v355 = vld [vmem:[%s1 + $0x50] sm:$0xf]
        %v356 = vld [vmem:[%s1 + $0x54] sm:$0xf]
        %v357 = vld [vmem:[%s1 + $0x58] sm:$0xf]
        %v358 = vld [vmem:[%s1 + $0x5c] sm:$0xf]
        %v359 = vld [vmem:[%s1 + $0x60] sm:$0xf]
        %v360 = vld [vmem:[%s1 + $0x64] sm:$0xf]
        %v361 = vld [vmem:[%s1 + $0x68] sm:$0xf]
        %v362 = vld [vmem:[%s1 + $0x6c] sm:$0xf]
        %v363 = vld [vmem:[%s1 + $0x70] sm:$0xf]
        %v364 = vld [vmem:[%s1 + $0x74] sm:$0xf]
        %v365 = vld [vmem:[%s1 + $0x78] sm:$0xf]
        %v366 = vld [vmem:[%s1 + $0x7c] sm:$0xf]
        %v367 = vld [vmem:[#allocation2] sm:$0xf]
        %v369 = vcombine.high %v334, %v334
        %v403 = vunpack.c.l.b16 %v335
        %v404 = vunpack.c.l.b16 %v336
        %v405 = vunpack.c.l.b16 %v337
        %v406 = vunpack.c.l.b16 %v338
        %v407 = vunpack.c.l.b16 %v339
        %v408 = vunpack.c.l.b16 %v340
        %v409 = vunpack.c.l.b16 %v341
        %v410 = vunpack.c.l.b16 %v342
        %v411 = vunpack.c.l.b16 %v343
        %v412 = vunpack.c.l.b16 %v344
        %v413 = vunpack.c.l.b16 %v345
        %v414 = vunpack.c.l.b16 %v346
        %v415 = vunpack.c.l.b16 %v347
        %v416 = vunpack.c.l.b16 %v348
        %v417 = vunpack.c.l.b16 %v349
        %v418 = vunpack.c.l.b16 %v350
        %v419 = vunpack.c.l.b16 %v351
        %v420 = vunpack.c.l.b16 %v352
        %v421 = vunpack.c.l.b16 %v353
        %v422 = vunpack.c.l.b16 %v354
        %v423 = vunpack.c.l.b16 %v355
        %v424 = vunpack.c.l.b16 %v356
        %v425 = vunpack.c.l.b16 %v357
        %v426 = vunpack.c.l.b16 %v358
        %v427 = vunpack.c.l.b16 %v359
        %v428 = vunpack.c.l.b16 %v360
        %v429 = vunpack.c.l.b16 %v361
        %v430 = vunpack.c.l.b16 %v362
        %v431 = vunpack.c.l.b16 %v363
        %v432 = vunpack.c.l.b16 %v364
        %v433 = vunpack.c.l.b16 %v365
        %v434 = vunpack.c.l.b16 %v366
        %v435 = vpack.c.b16 %v404, %v403
        %v436 = vpack.c.b16 %v406, %v405
        %v437 = vpack.c.b16 %v408, %v407
        %v438 = vpack.c.b16 %v410, %v409
        %v439 = vpack.c.b16 %v412, %v411
        %v440 = vpack.c.b16 %v414, %v413
        %v441 = vpack.c.b16 %v416, %v415
        %v442 = vpack.c.b16 %v418, %v417
        %v443 = vpack.c.b16 %v420, %v419
        %v444 = vpack.c.b16 %v422, %v421
        %v445 = vpack.c.b16 %v424, %v423
        %v446 = vpack.c.b16 %v426, %v425
        %v447 = vpack.c.b16 %v428, %v427
        %v448 = vpack.c.b16 %v430, %v429
        %v449 = vpack.c.b16 %v432, %v431
        %v450 = vpack.c.b16 %v434, %v433
        %467 = vmatprep.subr.bf16.mxu0 0
        %468 = vmatpush1.bf16.msra.mxu0 %v435
        %469 = vmatprep.subr.bf16.mxu0 0
        %470 = vmatpush1.bf16.msra.mxu0 %v436
        %471 = vmatprep.subr.bf16.mxu0 0
        %472 = vmatpush1.bf16.msra.mxu0 %v437
        %473 = vmatprep.subr.bf16.mxu0 0
        %474 = vmatpush1.bf16.msra.mxu0 %v438
        %475 = vmatprep.subr.bf16.mxu0 0
        %476 = vmatpush1.bf16.msra.mxu0 %v439
        %477 = vmatprep.subr.bf16.mxu0 0
        %478 = vmatpush1.bf16.msra.mxu0 %v440
        %479 = vmatprep.subr.bf16.mxu0 0
        %480 = vmatpush1.bf16.msra.mxu0 %v441
        %481 = vmatprep.subr.bf16.mxu0 0
        %482 = vmatpush1.bf16.msra.mxu0 %v442
        %483 = vmatprep.subr.bf16.mxu0 0
        %484 = vmatpush1.bf16.msra.mxu0 %v443
        %485 = vmatprep.subr.bf16.mxu0 0
        %486 = vmatpush1.bf16.msra.mxu0 %v444
        %487 = vmatprep.subr.bf16.mxu0 0
        %488 = vmatpush1.bf16.msra.mxu0 %v445
        %489 = vmatprep.subr.bf16.mxu0 0
        %490 = vmatpush1.bf16.msra.mxu0 %v446
        %491 = vmatprep.subr.bf16.mxu0 0
        %492 = vmatpush1.bf16.msra.mxu0 %v447
        %493 = vmatprep.subr.bf16.mxu0 0
        %494 = vmatpush1.bf16.msra.mxu0 %v448
        %495 = vmatprep.subr.bf16.mxu0 0
        %496 = vmatpush1.bf16.msra.mxu0 %v449
        %497 = vmatprep.subr.bf16.mxu0 0
        %498 = vmatpush1.bf16.msra.mxu0 %v450
        %499 = vmatprep.mubr.f32.mxu0 %v369
        %500 = vmatmul.mubr.f32.gmra.mrb[0].mxu0 %v334
        %v501 = vpop.f32.mrb[0].mxu0
        %v502 = vadd.f32 0.0, %v501
        %v503 = vpop.f32.mrb[0].mxu0
        %504 = vdwg.mxu0
        %v505 = vadd.f32 %v367, %v502
        %506 = vst.msk [vmem:[#allocation2] sm:$0xf] %vm332, %v505
        %v507 = vld [vmem:[#allocation2] sm:$0xf]
        %v508 = vld [vmem:[%s2] sm:$0x1]
        %v510 = vlaneseq
        %v511 = vshrl.u32 %v510, 7
        %v512 = vsub.s32 0, %v511
        %v513 = vrot.slane %v508, %v512
        %v515 = vmul.f32 %v507, %v513
        %v516 = vld [vmem:[%s3] sm:$0xff]
        %v517 = vld [vmem:[%s4] sm:$0xff]
        %v518 = vld [vmem:[%s5] sm:$0xf]
        %v519 = vld [vmem:[%s6] sm:$0xf]
        %v520 = vld [vmem:[%s7] sm:$0xf]
        %v521 = vld [vmem:[%s8] sm:$0xf]
        %523 = vset.pattern.permute.xlu0 0
        %524 = vperm.xlu0 %523, %v517
        %v525 = vpop.permute.xlu0 %524
        %vm527 = vcmask 31744
        %v529 = vsel %vm527, %v516, 0
        %vm531 = vcmask 1043456
        %v533 = vsel %vm531, %v515, 0
        %535 = vmatprep.subr.mxu0 0.0
        %536 = vmatpush1.msra.mxu0 %v533
        %537 = vmatprep.subr.mxu0 0.0
        %538 = vmatpush1.msra.mxu0 0.0
        %539 = vmatprep.subr.mxu0 0.0
        %540 = vmatpush1.msra.mxu0 0.0
        %541 = vmatprep.subr.mxu0 0.0
        %542 = vmatpush1.msra.mxu0 0.0
        %543 = vmatprep.subr.mxu0 0.0
        %544 = vmatpush1.msra.mxu0 0.0
        %545 = vmatprep.subr.mxu0 0.0
        %546 = vmatpush1.msra.mxu0 0.0
        %547 = vmatprep.subr.mxu0 0.0
        %548 = vmatpush1.msra.mxu0 0.0
        %549 = vmatprep.subr.mxu0 0.0
        %550 = vmatpush1.msra.mxu0 0.0
        %551 = vmatprep.subr.mxu0 0.0
        %552 = vmatpush1.msra.mxu0 0.0
        %553 = vmatprep.subr.mxu0 0.0
        %554 = vmatpush1.msra.mxu0 0.0
        %555 = vmatprep.subr.mxu0 0.0
        %556 = vmatpush1.msra.mxu0 0.0
        %557 = vmatprep.subr.mxu0 0.0
        %558 = vmatpush1.msra.mxu0 0.0
        %559 = vmatprep.subr.mxu0 0.0
        %560 = vmatpush1.msra.mxu0 0.0
        %561 = vmatprep.subr.mxu0 0.0
        %562 = vmatpush1.msra.mxu0 0.0
        %563 = vmatprep.subr.mxu0 0.0
        %564 = vmatpush1.msra.mxu0 0.0
        %565 = vmatprep.subr.mxu0 0.0
        %566 = vmatpush1.msra.mxu0 0.0
        %567 = vmatprep.subr.mxu0 0.0
        %568 = vmatpush1.msra.mxu0 0.0
        %569 = vmatprep.subr.mxu0 0.0
        %570 = vmatpush1.msra.mxu0 0.0
        %571 = vmatprep.subr.mxu0 0.0
        %572 = vmatpush1.msra.mxu0 0.0
        %573 = vmatprep.subr.mxu0 0.0
        %574 = vmatpush1.msra.mxu0 0.0
        %575 = vmatprep.subr.mxu0 0.0
        %576 = vmatpush1.msra.mxu0 0.0
        %577 = vmatprep.subr.mxu0 0.0
        %578 = vmatpush1.msra.mxu0 0.0
        %579 = vmatprep.subr.mxu0 0.0
        %580 = vmatpush1.msra.mxu0 0.0
        %581 = vmatprep.subr.mxu0 0.0
        %582 = vmatpush1.msra.mxu0 0.0
        %583 = vmatprep.subr.mxu0 0.0
        %584 = vmatpush1.msra.mxu0 0.0
        %585 = vmatprep.subr.mxu0 0.0
        %586 = vmatpush1.msra.mxu0 0.0
        %587 = vmatprep.subr.mxu0 0.0
        %588 = vmatpush1.msra.mxu0 0.0
        %589 = vmatprep.subr.mxu0 0.0
        %590 = vmatpush1.msra.mxu0 0.0
        %591 = vmatprep.subr.mxu0 0.0
        %592 = vmatpush1.msra.mxu0 0.0
        %593 = vmatprep.subr.mxu0 0.0
        %594 = vmatpush1.msra.mxu0 0.0
        %595 = vmatprep.subr.mxu0 0.0
        %596 = vmatpush1.msra.mxu0 0.0
        %597 = vmatprep.subr.mxu0 0.0
        %598 = vmatpush1.msra.mxu0 0.0
        %599 = vmatprep.mubr.f32.mxu0 0.0
        %600 = vmatmul.mubr.f32.gmra.mrb[0].mxu0 %v529
        %v601 = vpop.f32.mrb[0].mxu0
        %v602 = vadd.f32 %v525, %v601
        %v603 = vpop.f32.mrb[0].mxu0
        %604 = vdwg.mxu0
        %v605 = vadd.f32 %v602, 3.0
        %v606 = vmax.f32 %v605, 0.0
        %v607 = vmin.f32 %v606, 6.0
        %v608 = vmul.f32 %v602, %v607
        %v609 = vmul.f32 %v608, 0.16666667
        %611 = vset.pattern.permute.xlu0 0
        %612 = vperm.xlu0 %611, %v519
        %v613 = vpop.permute.xlu0 %612
        %vm615 = vcmask 64512
        %v617 = vsel %vm615, %v518, 0
        %619 = vmatprep.subr.mxu0 0.0
        %620 = vmatpush1.msra.mxu0 %v609
        %621 = vmatprep.subr.mxu0 0.0
        %622 = vmatpush1.msra.mxu0 0.0
        %623 = vmatprep.subr.mxu0 0.0
        %624 = vmatpush1.msra.mxu0 0.0
        %625 = vmatprep.subr.mxu0 0.0
        %626 = vmatpush1.msra.mxu0 0.0
        %627 = vmatprep.subr.mxu0 0.0
        %628 = vmatpush1.msra.mxu0 0.0
        %629 = vmatprep.subr.mxu0 0.0
        %630 = vmatpush1.msra.mxu0 0.0
        %631 = vmatprep.subr.mxu0 0.0
        %632 = vmatpush1.msra.mxu0 0.0
        %633 = vmatprep.subr.mxu0 0.0
        %634 = vmatpush1.msra.mxu0 0.0
        %635 = vmatprep.subr.mxu0 0.0
        %636 = vmatpush1.msra.mxu0 0.0
        %637 = vmatprep.subr.mxu0 0.0
        %638 = vmatpush1.msra.mxu0 0.0
        %639 = vmatprep.subr.mxu0 0.0
        %640 = vmatpush1.msra.mxu0 0.0
        %641 = vmatprep.subr.mxu0 0.0
        %642 = vmatpush1.msra.mxu0 0.0
        %643 = vmatprep.subr.mxu0 0.0
        %644 = vmatpush1.msra.mxu0 0.0
        %645 = vmatprep.subr.mxu0 0.0
        %646 = vmatpush1.msra.mxu0 0.0
        %647 = vmatprep.subr.mxu0 0.0
        %648 = vmatpush1.msra.mxu0 0.0
        %649 = vmatprep.subr.mxu0 0.0
        %650 = vmatpush1.msra.mxu0 0.0
        %651 = vmatprep.subr.mxu0 0.0
        %652 = vmatpush1.msra.mxu0 0.0
        %653 = vmatprep.subr.mxu0 0.0
        %654 = vmatpush1.msra.mxu0 0.0
        %655 = vmatprep.subr.mxu0 0.0
        %656 = vmatpush1.msra.mxu0 0.0
        %657 = vmatprep.subr.mxu0 0.0
        %658 = vmatpush1.msra.mxu0 0.0
        %659 = vmatprep.subr.mxu0 0.0
        %660 = vmatpush1.msra.mxu0 0.0
        %661 = vmatprep.subr.mxu0 0.0
        %662 = vmatpush1.msra.mxu0 0.0
        %663 = vmatprep.subr.mxu0 0.0
        %664 = vmatpush1.msra.mxu0 0.0
        %665 = vmatprep.subr.mxu0 0.0
        %666 = vmatpush1.msra.mxu0 0.0
        %667 = vmatprep.subr.mxu0 0.0
        %668 = vmatpush1.msra.mxu0 0.0
        %669 = vmatprep.subr.mxu0 0.0
        %670 = vmatpush1.msra.mxu0 0.0
        %671 = vmatprep.subr.mxu0 0.0
        %672 = vmatpush1.msra.mxu0 0.0
        %673 = vmatprep.subr.mxu0 0.0
        %674 = vmatpush1.msra.mxu0 0.0
        %675 = vmatprep.subr.mxu0 0.0
        %676 = vmatpush1.msra.mxu0 0.0
        %677 = vmatprep.subr.mxu0 0.0
        %678 = vmatpush1.msra.mxu0 0.0
        %679 = vmatprep.subr.mxu0 0.0
        %680 = vmatpush1.msra.mxu0 0.0
        %681 = vmatprep.subr.mxu0 0.0
        %682 = vmatpush1.msra.mxu0 0.0
        %683 = vmatprep.mubr.f32.mxu0 0.0
        %684 = vmatmul.mubr.f32.gmra.mrb[0].mxu0 %v617
        %v685 = vpop.f32.mrb[0].mxu0
        %v686 = vadd.f32 %v613, %v685
        %v687 = vpop.f32.mrb[0].mxu0
        %688 = vdwg.mxu0
        %v689 = vsub.f32 0.0, %v686
        %v690 = vmul.f32 %v689, 1.442695
        %v691 = vpow.pop %v690
        %v692 = vadd.f32 %v691, 1.0
        %v693 = vrcp.pop %v692
        %v694 = vmul.f32 1.0, %v693
        %696 = vset.pattern.permute.xlu0 0
        %697 = vperm.xlu0 %696, %v521
        %v698 = vpop.permute.xlu0 %697
        %701 = vrot.lane.b32.xlu0 %v609, 112
        %v702 = vpop.permute.xlu0 %701
        %v705 = vsel %vm615, %v520, 0
        %707 = vmatprep.subr.mxu0 0.0
        %708 = vmatpush1.msra.mxu0 %v702
        %709 = vmatprep.subr.mxu0 0.0
        %710 = vmatpush1.msra.mxu0 0.0
        %711 = vmatprep.subr.mxu0 0.0
        %712 = vmatpush1.msra.mxu0 0.0
        %713 = vmatprep.subr.mxu0 0.0
        %714 = vmatpush1.msra.mxu0 0.0
        %715 = vmatprep.subr.mxu0 0.0
        %716 = vmatpush1.msra.mxu0 0.0
        %717 = vmatprep.subr.mxu0 0.0
        %718 = vmatpush1.msra.mxu0 0.0
        %719 = vmatprep.subr.mxu0 0.0
        %720 = vmatpush1.msra.mxu0 0.0
        %721 = vmatprep.subr.mxu0 0.0
        %722 = vmatpush1.msra.mxu0 0.0
        %723 = vmatprep.subr.mxu0 0.0
        %724 = vmatpush1.msra.mxu0 0.0
        %725 = vmatprep.subr.mxu0 0.0
        %726 = vmatpush1.msra.mxu0 0.0
        %727 = vmatprep.subr.mxu0 0.0
        %728 = vmatpush1.msra.mxu0 0.0
        %729 = vmatprep.subr.mxu0 0.0
        %730 = vmatpush1.msra.mxu0 0.0
        %731 = vmatprep.subr.mxu0 0.0
        %732 = vmatpush1.msra.mxu0 0.0
        %733 = vmatprep.subr.mxu0 0.0
        %734 = vmatpush1.msra.mxu0 0.0
        %735 = vmatprep.subr.mxu0 0.0
        %736 = vmatpush1.msra.mxu0 0.0
        %737 = vmatprep.subr.mxu0 0.0
        %738 = vmatpush1.msra.mxu0 0.0
        %739 = vmatprep.subr.mxu0 0.0
        %740 = vmatpush1.msra.mxu0 0.0
        %741 = vmatprep.subr.mxu0 0.0
        %742 = vmatpush1.msra.mxu0 0.0
        %743 = vmatprep.subr.mxu0 0.0
        %744 = vmatpush1.msra.mxu0 0.0
        %745 = vmatprep.subr.mxu0 0.0
        %746 = vmatpush1.msra.mxu0 0.0
        %747 = vmatprep.subr.mxu0 0.0
        %748 = vmatpush1.msra.mxu0 0.0
        %749 = vmatprep.subr.mxu0 0.0
        %750 = vmatpush1.msra.mxu0 0.0
        %751 = vmatprep.subr.mxu0 0.0
        %752 = vmatpush1.msra.mxu0 0.0
        %753 = vmatprep.subr.mxu0 0.0
        %754 = vmatpush1.msra.mxu0 0.0
        %755 = vmatprep.subr.mxu0 0.0
        %756 = vmatpush1.msra.mxu0 0.0
        %757 = vmatprep.subr.mxu0 0.0
        %758 = vmatpush1.msra.mxu0 0.0
        %759 = vmatprep.subr.mxu0 0.0
        %760 = vmatpush1.msra.mxu0 0.0
        %761 = vmatprep.subr.mxu0 0.0
        %762 = vmatpush1.msra.mxu0 0.0
        %763 = vmatprep.subr.mxu0 0.0
        %764 = vmatpush1.msra.mxu0 0.0
        %765 = vmatprep.subr.mxu0 0.0
        %766 = vmatpush1.msra.mxu0 0.0
        %767 = vmatprep.subr.mxu0 0.0
        %768 = vmatpush1.msra.mxu0 0.0
        %769 = vmatprep.subr.mxu0 0.0
        %770 = vmatpush1.msra.mxu0 0.0
        %771 = vmatprep.mubr.f32.mxu0 0.0
        %772 = vmatmul.mubr.f32.gmra.mrb[0].mxu0 %v705
        %v773 = vpop.f32.mrb[0].mxu0
        %v774 = vadd.f32 %v698, %v773
        %v775 = vpop.f32.mrb[0].mxu0
        %776 = vdwg.mxu0
        %v777 = vsub.f32 0.0, %v774
        %v778 = vmul.f32 %v777, 1.442695
        %v779 = vpow.pop %v778
        %v780 = vadd.f32 %v779, 1.0
        %v781 = vrcp.pop %v780
        %v782 = vmul.f32 1.0, %v781
        %vm783 = vcmask 125952
        %784 = vst.msk [vmem:[%s325] sm:$0xf] %vm783, %v694
        %786 = vrot.lane.b32.xlu0 %v782, 16
        %v787 = vpop.permute.xlu0 %786
        %vm789 = vcmask 257152
        %790 = vst.msk [vmem:[%s325] sm:$0xf] %vm789, %v787
        %s791 = sand.u32 %s225, 1
        %s792 = scalar_lea.sflag [#allocation4], %s791
        %s793 = sand.u32 %s225, 1
        %s794 = smul.addr %s793, 4
        %s795 = scalar_lea.vmem [#allocation3], %s794
        // Predicated region
        $region57: #{tpu_custom_call.1} parent=55 // pred_check
          %p796 = pneg %p235
        $region58: #{tpu_custom_call.1} parent=55 // pred_check_branch
          %798 = sbr.rel (%p796) target = $region60
        $region59: #{tpu_custom_call.1} parent=55 // pred_region
          %s800 = ssub.s32 64, 64
          %801 = vsyncadd %s792, %s800
          %s802 = smul.addr %s23, 64
          %s803 = scalar_lea.hbm %s9, %s802
          %s805 = sshll.u32 %s795, 4
          %s806 = int_to_ptr.vmem [resolvable:$true] %s805
          %808 = dma.vmem_to_hbm [thread:$0]  %s806, 64, %s803, %s792
        $region60: #{tpu_custom_call.1} parent=55 // pred_fallthru
          _
      $region56: #{tpu_custom_call.1} parent=5 // pred_fallthru
        _
      %p809 = scmp.le.s32.totalorder 2, %s18
      // Predicated region
      $region61: #{tpu_custom_call.1} parent=5 // pred_check
        %p810 = pneg %p809
      $region62: #{tpu_custom_call.1} parent=5 // pred_check_branch
        %812 = sbr.rel (%p810) target = $region64
      $region63: #{tpu_custom_call.1} parent=5 // pred_region
        %s813 = ssub.s32 %s18, 2
        // Predicated region
        $region65: #{tpu_custom_call.1} parent=63 // pred_check
          %p814 = pneg %p241
        $region66: #{tpu_custom_call.1} parent=63 // pred_check_branch
          %816 = sbr.rel (%p814) target = $region68
        $region67: #{tpu_custom_call.1} parent=63 // pred_region
          %s817 = sand.u32 %s226, 1
          %s818 = scalar_lea.sflag [#allocation4], %s817
          %s819 = sand.u32 %s226, 1
          %s820 = smul.addr %s819, 4
          %s821 = scalar_lea.vmem [#allocation3], %s820
          %822 = dma.done %s818, 64
        $region68: #{tpu_custom_call.1} parent=63 // pred_fallthru
          _
      $region64: #{tpu_custom_call.1} parent=5 // pred_fallthru
        _
    $region6: #{tpu_custom_call.1} parent=1 // loop_footer
      %s22 = sadd.s32 1, %s18
    $region7: #{tpu_custom_call.1} parent=1 // loop_footer_branch
      %17 = sbr.rel target = $region3
    $region8: #{tpu_custom_call.1} parent=1 // loop_exit
      _
    %823 = vsyncpa [#allocation4], 1
    %s824 = scalar_lea.sflag [#allocation4], 1
    %825 = vsyncpa %s824, 1

</llo_original>
